<compile_context>
chip_gen: v5e
topology: v5e:2x2
jax: 0.10.0
libtpu: 0.0.40
codegen_flags: <defaults>
</compile_context>

<pallas_src>
import functools

import jax
import jax.numpy as jnp
from jax import lax
from jax.experimental import pallas as pl
from jax.experimental.pallas import tpu as pltpu


# ----------------------------------------------------------------------------
# Fused kernel: one (batch, row-strip) step of conv3x3 -> ReLU -> conv3x3 ->
# concat([x, res], channel).
# ----------------------------------------------------------------------------
def _concat_crc_kernel(x_ref, top_ref, bot_ref, w1_ref, b1_ref, w2_ref, b2_ref,
                       o_ref, pad1_ref, pad2_ref, *, TH, H, W, C):
    # x_ref   : (1, TH, W, C)  f32   strip of the input image
    # top_ref : (1, 2,  W, C)  f32   the two image rows just above the strip
    # bot_ref : (1, 2,  W, C)  f32   the two image rows just below the strip
    # w*_ref  : (9, C, C)      bf16  tap-major weights (kh*3+kw, cin, cout)
    # b*_ref  : (1, C)         f32
    # o_ref   : (1, TH, W, 2C) f32
    # pad1_ref: (TH+4, W+2, C) bf16  zero-border scratch (conv1 input)
    # pad2_ref: (TH+2, W+2, C) bf16  zero-border scratch (conv2 input)
    t = pl.program_id(1)
    last = pl.num_programs(1) - 1

    # ---- stage strip + 2-row halo into the conv1 scratch (bf16 once) -------
    x = x_ref[0]                                            # (TH, W, C) f32
    top = top_ref[0].astype(jnp.bfloat16)                   # (2, W, C)
    bot = bot_ref[0].astype(jnp.bfloat16)
    # Halo rows outside the image must be zero (SAME zero padding).  The halo
    # BlockSpecs are clamped into the image, so mask here instead.
    top = jnp.where(t > 0, top, jnp.zeros_like(top))
    bot = jnp.where(t < last, bot, jnp.zeros_like(bot))

    # Zero only the two border columns every step (rows are fully rewritten).
    zcol1 = jnp.zeros((TH + 4, 1, C), jnp.bfloat16)
    pad1_ref[:, 0:1, :] = zcol1
    pad1_ref[:, W + 1:W + 2, :] = zcol1
    pad1_ref[0:2, 1:W + 1, :] = top
    pad1_ref[2:TH + 2, 1:W + 1, :] = x.astype(jnp.bfloat16)
    pad1_ref[TH + 2:TH + 4, 1:W + 1, :] = bot

    # ---- conv1 + ReLU over TH+2 rows (strip rows +/- 1 for conv2's halo) ---
    # 9 accumulating K=C matmuls (bf16 operands, f32 accumulation); no im2col
    # patch tensor, no lane concats.
    acc1 = jnp.zeros(((TH + 2) * W, C), jnp.float32)
    for dy in range(3):
        for dx in range(3):
            patch = pad1_ref[dy:dy + TH + 2, dx:dx + W, :].reshape(
                (TH + 2) * W, C)
            acc1 = acc1 + jnp.dot(patch, w1_ref[3 * dy + dx],
                                  preferred_element_type=jnp.float32)
    h = jnp.maximum(acc1 + b1_ref[...], 0.0)                # ((TH+2)*W, C)
    h = h.reshape(TH + 2, W, C)

    # conv2's zero padding is defined on the full image: rows of h that fall
    # outside [0, H) must be zero (not relu(b1)).
    row = lax.broadcasted_iota(jnp.int32, (TH + 2, 1, 1), 0)
    img_row = t * TH - 1 + row
    h = jnp.where((img_row >= 0) & (img_row < H), h, 0.0)

    # ---- stage h into the conv2 scratch -------------------------------------
    zcol2 = jnp.zeros((TH + 2, 1, C), jnp.bfloat16)
    pad2_ref[:, 0:1, :] = zcol2
    pad2_ref[:, W + 1:W + 2, :] = zcol2
    pad2_ref[:, 1:W + 1, :] = h.astype(jnp.bfloat16)

    # ---- conv2 over the TH strip rows ---------------------------------------
    acc2 = jnp.zeros((TH * W, C), jnp.float32)
    for dy in range(3):
        for dx in range(3):
            patch = pad2_ref[dy:dy + TH, dx:dx + W, :].reshape(TH * W, C)
            acc2 = acc2 + jnp.dot(patch, w2_ref[3 * dy + dx],
                                  preferred_element_type=jnp.float32)
    res = (acc2 + b2_ref[...]).reshape(TH, W, C)

    # ---- torch.cat((x, sub(x)), dim=1): exact f32 passthrough + conv path ---
    out = jnp.concatenate([x, res.astype(x.dtype)], axis=-1)  # (TH, W, 2C)
    o_ref[0] = out.astype(o_ref.dtype)


# ----------------------------------------------------------------------------
# Wrapper (NCHW in / NCHW out, like the PyTorch module)
# ----------------------------------------------------------------------------
def concat_block_forward(params, x_nchw, *, tile_h=8):
    N, C, H, W = x_nchw.shape
    if H % tile_h != 0 or tile_h % 2 != 0:
        raise ValueError("H must be divisible by tile_h and tile_h must be even")
    TH = tile_h
    HB = TH // 2                      # halo BlockSpecs use 2-row blocks
    n_strips = H // TH

    # TODO(synk): when ConcatBlock is chained inside a network, keep
    # activations NHWC end-to-end and transpose only at the network boundary.
    x = jnp.transpose(x_nchw, (0, 2, 3, 1))                 # NCHW -> NHWC

    # Weights in bf16 (MXU operands), tap-major (kh*3+kw, cin, cout) layout
    # matching the (dy, dx) loop order in the kernel; biases stay f32.
    w1 = params["w1"].reshape(9, C, C).astype(jnp.bfloat16)
    w2 = params["w2"].reshape(9, C, C).astype(jnp.bfloat16)
    b1 = params["b1"].astype(jnp.float32)
    b2 = params["b2"].astype(jnp.float32)

    kern = functools.partial(_concat_crc_kernel, TH=TH, H=H, W=W, C=C)

    def strip_map(n, t):
        return (n, t, 0, 0)

    def top_map(n, t):
        # rows [t*TH - 2, t*TH); 2-row block index, clamped into the image
        return (n, jnp.maximum(t * HB - 1, 0), 0, 0)

    def bot_map(n, t):
        # rows [(t+1)*TH, (t+1)*TH + 2); clamped into the image
        return (n, jnp.minimum((t + 1) * HB, H // 2 - 1), 0, 0)

    const2 = lambda n, t: (0, 0)
    const3 = lambda n, t: (0, 0, 0)

    out = pl.pallas_call(
        kern,
        out_shape=jax.ShapeDtypeStruct((N, H, W, 2 * C), x.dtype),
        grid=(N, n_strips),
        in_specs=[
            pl.BlockSpec((1, TH, W, C), strip_map),       # x strip
            pl.BlockSpec((1, 2, W, C), top_map),          # 2-row halo above
            pl.BlockSpec((1, 2, W, C), bot_map),          # 2-row halo below
            pl.BlockSpec((9, C, C), const3),              # w1 (bf16)
            pl.BlockSpec((1, C), const2),                 # b1
            pl.BlockSpec((9, C, C), const3),              # w2 (bf16)
            pl.BlockSpec((1, C), const2),                 # b2
        ],
        out_specs=pl.BlockSpec((1, TH, W, 2 * C), strip_map),
        scratch_shapes=[
            pltpu.VMEM((TH + 4, W + 2, C), jnp.bfloat16),    # conv1 halo buf
            pltpu.VMEM((TH + 2, W + 2, C), jnp.bfloat16),    # conv2 halo buf
        ],
        compiler_params=pltpu.CompilerParams(
            dimension_semantics=("parallel", "parallel")),
    )(x, x, x, w1, b1, w2, b2)

    return jnp.transpose(out, (0, 3, 1, 2))                 # NHWC -> NCHW


# ----------------------------------------------------------------------------
# Pure-JAX references (for correctness checks)
# ----------------------------------------------------------------------------
def _reference_forward(params, x_nchw, *, bf16_operands=False):
    x = jnp.transpose(x_nchw, (0, 2, 3, 1))
    dn = ("NHWC", "HWIO", "NHWC")
    w1, w2 = params["w1"], params["w2"]
    if bf16_operands:
        xin = x.astype(jnp.bfloat16)
        w1 = w1.astype(jnp.bfloat16)
        w2 = w2.astype(jnp.bfloat16)
    else:
        xin = x
    h = lax.conv_general_dilated(xin, w1, (1, 1), "SAME", dimension_numbers=dn,
                                 preferred_element_type=jnp.float32)
    h = jnp.maximum(h + params["b1"].reshape(1, 1, 1, -1), 0.0)
    hin = h.astype(jnp.bfloat16) if bf16_operands else h
    h = lax.conv_general_dilated(hin, w2, (1, 1), "SAME", dimension_numbers=dn,
                                 preferred_element_type=jnp.float32)
    h = h + params["b2"].reshape(1, 1, 1, -1)
    out = jnp.concatenate([x, h], axis=-1)
    return jnp.transpose(out, (0, 3, 1, 2))


# ----------------------------------------------------------------------------
if __name__ == "__main__":
    # Small but lane-friendly shapes: C=64 so the concatenated output has
    # 2C = 128 channels (dense lane dim on the store path); H=W=16 with TH=8
    # gives a (2, 2) grid so the BlockSpec pipeline has steps to overlap.
    N, C, H, W = 2, 64, 16, 16

    key = jax.random.PRNGKey(0)
    kw1, kb1, kw2, kb2, kx = jax.random.split(key, 5)
    scale = 0.05
    params = dict(
        w1=scale * jax.random.normal(kw1, (3, 3, C, C), jnp.float32),  # HWIO
        b1=scale * jax.random.normal(kb1, (1, C), jnp.float32),
        w2=scale * jax.random.normal(kw2, (3, 3, C, C), jnp.float32),
        b2=scale * jax.random.normal(kb2, (1, C), jnp.float32),
    )
    x = jax.random.normal(kx, (N, C, H, W), jnp.float32)

    fwd = jax.jit(functools.partial(concat_block_forward, tile_h=8))
    y = fwd(params, x)
    jax.block_until_ready(y)

    assert y.shape == (N, 2 * C, H, W) and y.dtype == jnp.float32
    # First C output channels must be the untouched input (exact passthrough).
    assert bool(jnp.all(y[:, :C] == x)), "concat passthrough mismatch"

    # Tight check vs. an XLA reference that uses the same bf16 matmul operands.
    y_bf = _reference_forward(params, x, bf16_operands=True)
    err_bf = float(jnp.max(jnp.abs(y - y_bf)))
    assert err_bf < 2e-2, f"bf16-matched max abs error {err_bf}"

    # Loose sanity check vs. the pure-f32 reference (bf16 operand noise only).
    y_f32 = _reference_forward(params, x, bf16_operands=False)
    err_f32 = float(jnp.max(jnp.abs(y - y_f32)))
    assert err_f32 < 1.5e-1, f"f32 reference max abs error {err_f32}"

    print("KERNEL_OK")
</pallas_src>

<mosaic_0001>
module attributes {stable_mosaic.version = 11 : i64} {
  func.func @_concat_crc_kernel(%arg0: i32, %arg1: i32, %arg2: memref<1x8x16x64xf32, #tpu.memory_space<vmem>>, %arg3: memref<1x2x16x64xf32, #tpu.memory_space<vmem>>, %arg4: memref<1x2x16x64xf32, #tpu.memory_space<vmem>>, %arg5: memref<9x64x64xbf16, #tpu.memory_space<vmem>>, %arg6: memref<1x64xf32, #tpu.memory_space<vmem>>, %arg7: memref<9x64x64xbf16, #tpu.memory_space<vmem>>, %arg8: memref<1x64xf32, #tpu.memory_space<vmem>>, %arg9: memref<1x8x16x128xf32, #tpu.memory_space<vmem>>, %arg10: memref<12x18x64xbf16, #tpu.memory_space<vmem>>, %arg11: memref<10x18x64xbf16, #tpu.memory_space<vmem>>) attributes {dimension_semantics = [#tpu.dimension_semantics<parallel>, #tpu.dimension_semantics<parallel>], iteration_bounds = array<i64: 2, 2>, scalar_prefetch = 0 : i64, scratch_operands = 2 : i64, tpu.core_type = #tpu.core_type<tc>, window_params = [{transform_indices = @transform_0, window_bounds = array<i64: 1, 8, 16, 64>}, {transform_indices = @transform_1, window_bounds = array<i64: 1, 2, 16, 64>}, {transform_indices = @transform_2, window_bounds = array<i64: 1, 2, 16, 64>}, {pipeline_mode = #tpu.pipeline_mode<synchronous>, transform_indices = @transform_3, window_bounds = array<i64: 9, 64, 64>}, {pipeline_mode = #tpu.pipeline_mode<synchronous>, transform_indices = @transform_4, window_bounds = array<i64: 1, 64>}, {pipeline_mode = #tpu.pipeline_mode<synchronous>, transform_indices = @transform_5, window_bounds = array<i64: 9, 64, 64>}, {pipeline_mode = #tpu.pipeline_mode<synchronous>, transform_indices = @transform_6, window_bounds = array<i64: 1, 64>}, {transform_indices = @transform_7, window_bounds = array<i64: 1, 8, 16, 128>}]} {
    %c0 = arith.constant 0 : index
    %c0_0 = arith.constant 0 : index
    %c0_1 = arith.constant 0 : index
    %c0_2 = arith.constant 0 : index
    %0 = vector.load %arg2[%c0, %c0_0, %c0_1, %c0_2] : memref<1x8x16x64xf32, #tpu.memory_space<vmem>>, vector<1x8x16x64xf32>
    %1 = vector.shape_cast %0 : vector<1x8x16x64xf32> to vector<8x16x64xf32>
    %c0_3 = arith.constant 0 : index
    %c0_4 = arith.constant 0 : index
    %c0_5 = arith.constant 0 : index
    %c0_6 = arith.constant 0 : index
    %2 = vector.load %arg3[%c0_3, %c0_4, %c0_5, %c0_6] : memref<1x2x16x64xf32, #tpu.memory_space<vmem>>, vector<1x2x16x64xf32>
    %3 = vector.shape_cast %2 : vector<1x2x16x64xf32> to vector<2x16x64xf32>
    %4 = arith.truncf %3 : vector<2x16x64xf32> to vector<2x16x64xbf16>
    %c0_7 = arith.constant 0 : index
    %c0_8 = arith.constant 0 : index
    %c0_9 = arith.constant 0 : index
    %c0_10 = arith.constant 0 : index
    %5 = vector.load %arg4[%c0_7, %c0_8, %c0_9, %c0_10] : memref<1x2x16x64xf32, #tpu.memory_space<vmem>>, vector<1x2x16x64xf32>
    %6 = vector.shape_cast %5 : vector<1x2x16x64xf32> to vector<2x16x64xf32>
    %7 = arith.truncf %6 : vector<2x16x64xf32> to vector<2x16x64xbf16>
    %c0_i32 = arith.constant 0 : i32
    %8 = arith.cmpi sgt, %arg1, %c0_i32 : i32
    %cst = arith.constant 0.000000e+00 : bf16
    %9 = vector.broadcast %cst : bf16 to vector<2x16x64xbf16>
    %10 = arith.select %8, %4, %9 : vector<2x16x64xbf16>
    %c1_i32 = arith.constant 1 : i32
    %11 = arith.cmpi slt, %arg1, %c1_i32 : i32
    %cst_11 = arith.constant 0.000000e+00 : bf16
    %12 = vector.broadcast %cst_11 : bf16 to vector<2x16x64xbf16>
    %13 = arith.select %11, %7, %12 : vector<2x16x64xbf16>
    %cst_12 = arith.constant 0.000000e+00 : bf16
    %14 = vector.broadcast %cst_12 : bf16 to vector<12x1x64xbf16>
    %c0_13 = arith.constant 0 : index
    %c0_14 = arith.constant 0 : index
    %c0_15 = arith.constant 0 : index
    %15 = vector.load %arg10[%c0_13, %c0_14, %c0_15] : memref<12x18x64xbf16, #tpu.memory_space<vmem>>, vector<12x1x64xbf16>
    tpu.vector_store %arg10[%c0_13, %c0_14, %c0_15], %14 {strides = array<i32>} : memref<12x18x64xbf16, #tpu.memory_space<vmem>>, vector<12x1x64xbf16>,
    %c0_16 = arith.constant 0 : index
    %c17 = arith.constant 17 : index
    %c0_17 = arith.constant 0 : index
    %16 = vector.load %arg10[%c0_16, %c17, %c0_17] : memref<12x18x64xbf16, #tpu.memory_space<vmem>>, vector<12x1x64xbf16>
    tpu.vector_store %arg10[%c0_16, %c17, %c0_17], %14 {strides = array<i32>} : memref<12x18x64xbf16, #tpu.memory_space<vmem>>, vector<12x1x64xbf16>,
    %c0_18 = arith.constant 0 : index
    %c1 = arith.constant 1 : index
    %c0_19 = arith.constant 0 : index
    %17 = vector.load %arg10[%c0_18, %c1, %c0_19] : memref<12x18x64xbf16, #tpu.memory_space<vmem>>, vector<2x16x64xbf16>
    tpu.vector_store %arg10[%c0_18, %c1, %c0_19], %10 {strides = array<i32>} : memref<12x18x64xbf16, #tpu.memory_space<vmem>>, vector<2x16x64xbf16>,
    %18 = arith.truncf %1 : vector<8x16x64xf32> to vector<8x16x64xbf16>
    %c2 = arith.constant 2 : index
    %c1_20 = arith.constant 1 : index
    %c0_21 = arith.constant 0 : index
    %19 = vector.load %arg10[%c2, %c1_20, %c0_21] : memref<12x18x64xbf16, #tpu.memory_space<vmem>>, vector<8x16x64xbf16>
    tpu.vector_store %arg10[%c2, %c1_20, %c0_21], %18 {strides = array<i32>} : memref<12x18x64xbf16, #tpu.memory_space<vmem>>, vector<8x16x64xbf16>,
    %c10 = arith.constant 10 : index
    %c1_22 = arith.constant 1 : index
    %c0_23 = arith.constant 0 : index
    %20 = vector.load %arg10[%c10, %c1_22, %c0_23] : memref<12x18x64xbf16, #tpu.memory_space<vmem>>, vector<2x16x64xbf16>
    tpu.vector_store %arg10[%c10, %c1_22, %c0_23], %13 {strides = array<i32>} : memref<12x18x64xbf16, #tpu.memory_space<vmem>>, vector<2x16x64xbf16>,
    %cst_24 = arith.constant 0.000000e+00 : f32
    %21 = vector.broadcast %cst_24 : f32 to vector<160x64xf32>
    %c0_25 = arith.constant 0 : index
    %c0_26 = arith.constant 0 : index
    %c0_27 = arith.constant 0 : index
    %22 = vector.load %arg10[%c0_25, %c0_26, %c0_27] : memref<12x18x64xbf16, #tpu.memory_space<vmem>>, vector<10x16x64xbf16>
    %23 = vector.shape_cast %22 : vector<10x16x64xbf16> to vector<160x64xbf16>
    %c0_28 = arith.constant 0 : index
    %c0_29 = arith.constant 0 : index
    %c0_30 = arith.constant 0 : index
    %24 = vector.load %arg5[%c0_28, %c0_29, %c0_30] : memref<9x64x64xbf16, #tpu.memory_space<vmem>>, vector<1x64x64xbf16>
    %25 = vector.shape_cast %24 : vector<1x64x64xbf16> to vector<64x64xbf16>
    %cst_31 = arith.constant dense<0.000000e+00> : vector<160x64xf32>
    %26 = tpu.matmul %23, %25, %cst_31 {dimension_numbers = #tpu.dot_dimension_numbers<[1], [0], [0], [1], [0, 0, 1, 1], [], []>} : vector<160x64xbf16>, vector<64x64xbf16>, vector<160x64xf32> -> vector<160x64xf32>
    %27 = arith.addf %21, %26 : vector<160x64xf32>
    %c0_32 = arith.constant 0 : index
    %c1_33 = arith.constant 1 : index
    %c0_34 = arith.constant 0 : index
    %28 = vector.load %arg10[%c0_32, %c1_33, %c0_34] : memref<12x18x64xbf16, #tpu.memory_space<vmem>>, vector<10x16x64xbf16>
    %29 = vector.shape_cast %28 : vector<10x16x64xbf16> to vector<160x64xbf16>
    %c1_35 = arith.constant 1 : index
    %c0_36 = arith.constant 0 : index
    %c0_37 = arith.constant 0 : index
    %30 = vector.load %arg5[%c1_35, %c0_36, %c0_37] : memref<9x64x64xbf16, #tpu.memory_space<vmem>>, vector<1x64x64xbf16>
    %31 = vector.shape_cast %30 : vector<1x64x64xbf16> to vector<64x64xbf16>
    %cst_38 = arith.constant dense<0.000000e+00> : vector<160x64xf32>
    %32 = tpu.matmul %29, %31, %cst_38 {dimension_numbers = #tpu.dot_dimension_numbers<[1], [0], [0], [1], [0, 0, 1, 1], [], []>} : vector<160x64xbf16>, vector<64x64xbf16>, vector<160x64xf32> -> vector<160x64xf32>
    %33 = arith.addf %27, %32 : vector<160x64xf32>
    %c0_39 = arith.constant 0 : index
    %c2_40 = arith.constant 2 : index
    %c0_41 = arith.constant 0 : index
    %34 = vector.load %arg10[%c0_39, %c2_40, %c0_41] : memref<12x18x64xbf16, #tpu.memory_space<vmem>>, vector<10x16x64xbf16>
    %35 = vector.shape_cast %34 : vector<10x16x64xbf16> to vector<160x64xbf16>
    %c2_42 = arith.constant 2 : index
    %c0_43 = arith.constant 0 : index
    %c0_44 = arith.constant 0 : index
    %36 = vector.load %arg5[%c2_42, %c0_43, %c0_44] : memref<9x64x64xbf16, #tpu.memory_space<vmem>>, vector<1x64x64xbf16>
    %37 = vector.shape_cast %36 : vector<1x64x64xbf16> to vector<64x64xbf16>
    %cst_45 = arith.constant dense<0.000000e+00> : vector<160x64xf32>
    %38 = tpu.matmul %35, %37, %cst_45 {dimension_numbers = #tpu.dot_dimension_numbers<[1], [0], [0], [1], [0, 0, 1, 1], [], []>} : vector<160x64xbf16>, vector<64x64xbf16>, vector<160x64xf32> -> vector<160x64xf32>
    %39 = arith.addf %33, %38 : vector<160x64xf32>
    %c1_46 = arith.constant 1 : index
    %c0_47 = arith.constant 0 : index
    %c0_48 = arith.constant 0 : index
    %40 = vector.load %arg10[%c1_46, %c0_47, %c0_48] : memref<12x18x64xbf16, #tpu.memory_space<vmem>>, vector<10x16x64xbf16>
    %41 = vector.shape_cast %40 : vector<10x16x64xbf16> to vector<160x64xbf16>
    %c3 = arith.constant 3 : index
    %c0_49 = arith.constant 0 : index
    %c0_50 = arith.constant 0 : index
    %42 = vector.load %arg5[%c3, %c0_49, %c0_50] : memref<9x64x64xbf16, #tpu.memory_space<vmem>>, vector<1x64x64xbf16>
    %43 = vector.shape_cast %42 : vector<1x64x64xbf16> to vector<64x64xbf16>
    %cst_51 = arith.constant dense<0.000000e+00> : vector<160x64xf32>
    %44 = tpu.matmul %41, %43, %cst_51 {dimension_numbers = #tpu.dot_dimension_numbers<[1], [0], [0], [1], [0, 0, 1, 1], [], []>} : vector<160x64xbf16>, vector<64x64xbf16>, vector<160x64xf32> -> vector<160x64xf32>
    %45 = arith.addf %39, %44 : vector<160x64xf32>
    %c1_52 = arith.constant 1 : index
    %c1_53 = arith.constant 1 : index
    %c0_54 = arith.constant 0 : index
    %46 = vector.load %arg10[%c1_52, %c1_53, %c0_54] : memref<12x18x64xbf16, #tpu.memory_space<vmem>>, vector<10x16x64xbf16>
    %47 = vector.shape_cast %46 : vector<10x16x64xbf16> to vector<160x64xbf16>
    %c4 = arith.constant 4 : index
    %c0_55 = arith.constant 0 : index
    %c0_56 = arith.constant 0 : index
    %48 = vector.load %arg5[%c4, %c0_55, %c0_56] : memref<9x64x64xbf16, #tpu.memory_space<vmem>>, vector<1x64x64xbf16>
    %49 = vector.shape_cast %48 : vector<1x64x64xbf16> to vector<64x64xbf16>
    %cst_57 = arith.constant dense<0.000000e+00> : vector<160x64xf32>
    %50 = tpu.matmul %47, %49, %cst_57 {dimension_numbers = #tpu.dot_dimension_numbers<[1], [0], [0], [1], [0, 0, 1, 1], [], []>} : vector<160x64xbf16>, vector<64x64xbf16>, vector<160x64xf32> -> vector<160x64xf32>
    %51 = arith.addf %45, %50 : vector<160x64xf32>
    %c1_58 = arith.constant 1 : index
    %c2_59 = arith.constant 2 : index
    %c0_60 = arith.constant 0 : index
    %52 = vector.load %arg10[%c1_58, %c2_59, %c0_60] : memref<12x18x64xbf16, #tpu.memory_space<vmem>>, vector<10x16x64xbf16>
    %53 = vector.shape_cast %52 : vector<10x16x64xbf16> to vector<160x64xbf16>
    %c5 = arith.constant 5 : index
    %c0_61 = arith.constant 0 : index
    %c0_62 = arith.constant 0 : index
    %54 = vector.load %arg5[%c5, %c0_61, %c0_62] : memref<9x64x64xbf16, #tpu.memory_space<vmem>>, vector<1x64x64xbf16>
    %55 = vector.shape_cast %54 : vector<1x64x64xbf16> to vector<64x64xbf16>
    %cst_63 = arith.constant dense<0.000000e+00> : vector<160x64xf32>
    %56 = tpu.matmul %53, %55, %cst_63 {dimension_numbers = #tpu.dot_dimension_numbers<[1], [0], [0], [1], [0, 0, 1, 1], [], []>} : vector<160x64xbf16>, vector<64x64xbf16>, vector<160x64xf32> -> vector<160x64xf32>
    %57 = arith.addf %51, %56 : vector<160x64xf32>
    %c2_64 = arith.constant 2 : index
    %c0_65 = arith.constant 0 : index
    %c0_66 = arith.constant 0 : index
    %58 = vector.load %arg10[%c2_64, %c0_65, %c0_66] : memref<12x18x64xbf16, #tpu.memory_space<vmem>>, vector<10x16x64xbf16>
    %59 = vector.shape_cast %58 : vector<10x16x64xbf16> to vector<160x64xbf16>
    %c6 = arith.constant 6 : index
    %c0_67 = arith.constant 0 : index
    %c0_68 = arith.constant 0 : index
    %60 = vector.load %arg5[%c6, %c0_67, %c0_68] : memref<9x64x64xbf16, #tpu.memory_space<vmem>>, vector<1x64x64xbf16>
    %61 = vector.shape_cast %60 : vector<1x64x64xbf16> to vector<64x64xbf16>
    %cst_69 = arith.constant dense<0.000000e+00> : vector<160x64xf32>
    %62 = tpu.matmul %59, %61, %cst_69 {dimension_numbers = #tpu.dot_dimension_numbers<[1], [0], [0], [1], [0, 0, 1, 1], [], []>} : vector<160x64xbf16>, vector<64x64xbf16>, vector<160x64xf32> -> vector<160x64xf32>
    %63 = arith.addf %57, %62 : vector<160x64xf32>
    %c2_70 = arith.constant 2 : index
    %c1_71 = arith.constant 1 : index
    %c0_72 = arith.constant 0 : index
    %64 = vector.load %arg10[%c2_70, %c1_71, %c0_72] : memref<12x18x64xbf16, #tpu.memory_space<vmem>>, vector<10x16x64xbf16>
    %65 = vector.shape_cast %64 : vector<10x16x64xbf16> to vector<160x64xbf16>
    %c7 = arith.constant 7 : index
    %c0_73 = arith.constant 0 : index
    %c0_74 = arith.constant 0 : index
    %66 = vector.load %arg5[%c7, %c0_73, %c0_74] : memref<9x64x64xbf16, #tpu.memory_space<vmem>>, vector<1x64x64xbf16>
    %67 = vector.shape_cast %66 : vector<1x64x64xbf16> to vector<64x64xbf16>
    %cst_75 = arith.constant dense<0.000000e+00> : vector<160x64xf32>
    %68 = tpu.matmul %65, %67, %cst_75 {dimension_numbers = #tpu.dot_dimension_numbers<[1], [0], [0], [1], [0, 0, 1, 1], [], []>} : vector<160x64xbf16>, vector<64x64xbf16>, vector<160x64xf32> -> vector<160x64xf32>
    %69 = arith.addf %63, %68 : vector<160x64xf32>
    %c2_76 = arith.constant 2 : index
    %c2_77 = arith.constant 2 : index
    %c0_78 = arith.constant 0 : index
    %70 = vector.load %arg10[%c2_76, %c2_77, %c0_78] : memref<12x18x64xbf16, #tpu.memory_space<vmem>>, vector<10x16x64xbf16>
    %71 = vector.shape_cast %70 : vector<10x16x64xbf16> to vector<160x64xbf16>
    %c8 = arith.constant 8 : index
    %c0_79 = arith.constant 0 : index
    %c0_80 = arith.constant 0 : index
    %72 = vector.load %arg5[%c8, %c0_79, %c0_80] : memref<9x64x64xbf16, #tpu.memory_space<vmem>>, vector<1x64x64xbf16>
    %73 = vector.shape_cast %72 : vector<1x64x64xbf16> to vector<64x64xbf16>
    %cst_81 = arith.constant dense<0.000000e+00> : vector<160x64xf32>
    %74 = tpu.matmul %71, %73, %cst_81 {dimension_numbers = #tpu.dot_dimension_numbers<[1], [0], [0], [1], [0, 0, 1, 1], [], []>} : vector<160x64xbf16>, vector<64x64xbf16>, vector<160x64xf32> -> vector<160x64xf32>
    %75 = arith.addf %69, %74 : vector<160x64xf32>
    %c0_82 = arith.constant 0 : index
    %c0_83 = arith.constant 0 : index
    %76 = vector.load %arg6[%c0_82, %c0_83] : memref<1x64xf32, #tpu.memory_space<vmem>>, vector<1x64xf32>
    %77 = vector.broadcast %76 : vector<1x64xf32> to vector<160x64xf32>
    %78 = arith.addf %75, %77 : vector<160x64xf32>
    %cst_84 = arith.constant 0.000000e+00 : f32
    %79 = vector.broadcast %cst_84 : f32 to vector<160x64xf32>
    %80 = arith.maximumf %78, %79 : vector<160x64xf32>
    %81 = vector.shape_cast %80 : vector<160x64xf32> to vector<10x16x64xf32>
    %82 = tpu.iota {dimensions = array<i32: 0>} : vector<10x1x1xi32>
    %c8_i32 = arith.constant 8 : i32
    %83 = arith.muli %arg1, %c8_i32 : i32
    %c1_i32_85 = arith.constant 1 : i32
    %84 = arith.subi %83, %c1_i32_85 : i32
    %85 = vector.broadcast %84 : i32 to vector<10x1x1xi32>
    %86 = arith.addi %85, %82 : vector<10x1x1xi32>
    %c0_i32_86 = arith.constant 0 : i32
    %87 = vector.broadcast %c0_i32_86 : i32 to vector<10x1x1xi32>
    %88 = arith.cmpi sge, %86, %87 : vector<10x1x1xi32>
    %c16_i32 = arith.constant 16 : i32
    %89 = vector.broadcast %c16_i32 : i32 to vector<10x1x1xi32>
    %90 = arith.cmpi slt, %86, %89 : vector<10x1x1xi32>
    %91 = arith.andi %88, %90 : vector<10x1x1xi1>
    %cst_87 = arith.constant 0.000000e+00 : f32
    %92 = vector.shape_cast %91 : vector<10x1x1xi1> to vector<10x1x1xi1>
    %93 = vector.broadcast %92 : vector<10x1x1xi1> to vector<10x16x64xi1>
    %94 = vector.broadcast %cst_87 : f32 to vector<10x16x64xf32>
    %95 = arith.select %93, %81, %94 : vector<10x16x64xi1>, vector<10x16x64xf32>
    %cst_88 = arith.constant 0.000000e+00 : bf16
    %96 = vector.broadcast %cst_88 : bf16 to vector<10x1x64xbf16>
    %c0_89 = arith.constant 0 : index
    %c0_90 = arith.constant 0 : index
    %c0_91 = arith.constant 0 : index
    %97 = vector.load %arg11[%c0_89, %c0_90, %c0_91] : memref<10x18x64xbf16, #tpu.memory_space<vmem>>, vector<10x1x64xbf16>
    tpu.vector_store %arg11[%c0_89, %c0_90, %c0_91], %96 {strides = array<i32>} : memref<10x18x64xbf16, #tpu.memory_space<vmem>>, vector<10x1x64xbf16>,
    %c0_92 = arith.constant 0 : index
    %c17_93 = arith.constant 17 : index
    %c0_94 = arith.constant 0 : index
    %98 = vector.load %arg11[%c0_92, %c17_93, %c0_94] : memref<10x18x64xbf16, #tpu.memory_space<vmem>>, vector<10x1x64xbf16>
    tpu.vector_store %arg11[%c0_92, %c17_93, %c0_94], %96 {strides = array<i32>} : memref<10x18x64xbf16, #tpu.memory_space<vmem>>, vector<10x1x64xbf16>,
    %99 = arith.truncf %95 : vector<10x16x64xf32> to vector<10x16x64xbf16>
    %c0_95 = arith.constant 0 : index
    %c1_96 = arith.constant 1 : index
    %c0_97 = arith.constant 0 : index
    %100 = vector.load %arg11[%c0_95, %c1_96, %c0_97] : memref<10x18x64xbf16, #tpu.memory_space<vmem>>, vector<10x16x64xbf16>
    tpu.vector_store %arg11[%c0_95, %c1_96, %c0_97], %99 {strides = array<i32>} : memref<10x18x64xbf16, #tpu.memory_space<vmem>>, vector<10x16x64xbf16>,
    %cst_98 = arith.constant 0.000000e+00 : f32
    %101 = vector.broadcast %cst_98 : f32 to vector<128x64xf32>
    %c0_99 = arith.constant 0 : index
    %c0_100 = arith.constant 0 : index
    %c0_101 = arith.constant 0 : index
    %102 = vector.load %arg11[%c0_99, %c0_100, %c0_101] : memref<10x18x64xbf16, #tpu.memory_space<vmem>>, vector<8x16x64xbf16>
    %103 = vector.shape_cast %102 : vector<8x16x64xbf16> to vector<128x64xbf16>
    %c0_102 = arith.constant 0 : index
    %c0_103 = arith.constant 0 : index
    %c0_104 = arith.constant 0 : index
    %104 = vector.load %arg7[%c0_102, %c0_103, %c0_104] : memref<9x64x64xbf16, #tpu.memory_space<vmem>>, vector<1x64x64xbf16>
    %105 = vector.shape_cast %104 : vector<1x64x64xbf16> to vector<64x64xbf16>
    %cst_105 = arith.constant dense<0.000000e+00> : vector<128x64xf32>
    %106 = tpu.matmul %103, %105, %cst_105 {dimension_numbers = #tpu.dot_dimension_numbers<[1], [0], [0], [1], [0, 0, 1, 1], [], []>} : vector<128x64xbf16>, vector<64x64xbf16>, vector<128x64xf32> -> vector<128x64xf32>
    %107 = arith.addf %101, %106 : vector<128x64xf32>
    %c0_106 = arith.constant 0 : index
    %c1_107 = arith.constant 1 : index
    %c0_108 = arith.constant 0 : index
    %108 = vector.load %arg11[%c0_106, %c1_107, %c0_108] : memref<10x18x64xbf16, #tpu.memory_space<vmem>>, vector<8x16x64xbf16>
    %109 = vector.shape_cast %108 : vector<8x16x64xbf16> to vector<128x64xbf16>
    %c1_109 = arith.constant 1 : index
    %c0_110 = arith.constant 0 : index
    %c0_111 = arith.constant 0 : index
    %110 = vector.load %arg7[%c1_109, %c0_110, %c0_111] : memref<9x64x64xbf16, #tpu.memory_space<vmem>>, vector<1x64x64xbf16>
    %111 = vector.shape_cast %110 : vector<1x64x64xbf16> to vector<64x64xbf16>
    %cst_112 = arith.constant dense<0.000000e+00> : vector<128x64xf32>
    %112 = tpu.matmul %109, %111, %cst_112 {dimension_numbers = #tpu.dot_dimension_numbers<[1], [0], [0], [1], [0, 0, 1, 1], [], []>} : vector<128x64xbf16>, vector<64x64xbf16>, vector<128x64xf32> -> vector<128x64xf32>
    %113 = arith.addf %107, %112 : vector<128x64xf32>
    %c0_113 = arith.constant 0 : index
    %c2_114 = arith.constant 2 : index
    %c0_115 = arith.constant 0 : index
    %114 = vector.load %arg11[%c0_113, %c2_114, %c0_115] : memref<10x18x64xbf16, #tpu.memory_space<vmem>>, vector<8x16x64xbf16>
    %115 = vector.shape_cast %114 : vector<8x16x64xbf16> to vector<128x64xbf16>
    %c2_116 = arith.constant 2 : index
    %c0_117 = arith.constant 0 : index
    %c0_118 = arith.constant 0 : index
    %116 = vector.load %arg7[%c2_116, %c0_117, %c0_118] : memref<9x64x64xbf16, #tpu.memory_space<vmem>>, vector<1x64x64xbf16>
    %117 = vector.shape_cast %116 : vector<1x64x64xbf16> to vector<64x64xbf16>
    %cst_119 = arith.constant dense<0.000000e+00> : vector<128x64xf32>
    %118 = tpu.matmul %115, %117, %cst_119 {dimension_numbers = #tpu.dot_dimension_numbers<[1], [0], [0], [1], [0, 0, 1, 1], [], []>} : vector<128x64xbf16>, vector<64x64xbf16>, vector<128x64xf32> -> vector<128x64xf32>
    %119 = arith.addf %113, %118 : vector<128x64xf32>
    %c1_120 = arith.constant 1 : index
    %c0_121 = arith.constant 0 : index
    %c0_122 = arith.constant 0 : index
    %120 = vector.load %arg11[%c1_120, %c0_121, %c0_122] : memref<10x18x64xbf16, #tpu.memory_space<vmem>>, vector<8x16x64xbf16>
    %121 = vector.shape_cast %120 : vector<8x16x64xbf16> to vector<128x64xbf16>
    %c3_123 = arith.constant 3 : index
    %c0_124 = arith.constant 0 : index
    %c0_125 = arith.constant 0 : index
    %122 = vector.load %arg7[%c3_123, %c0_124, %c0_125] : memref<9x64x64xbf16, #tpu.memory_space<vmem>>, vector<1x64x64xbf16>
    %123 = vector.shape_cast %122 : vector<1x64x64xbf16> to vector<64x64xbf16>
    %cst_126 = arith.constant dense<0.000000e+00> : vector<128x64xf32>
    %124 = tpu.matmul %121, %123, %cst_126 {dimension_numbers = #tpu.dot_dimension_numbers<[1], [0], [0], [1], [0, 0, 1, 1], [], []>} : vector<128x64xbf16>, vector<64x64xbf16>, vector<128x64xf32> -> vector<128x64xf32>
    %125 = arith.addf %119, %124 : vector<128x64xf32>
    %c1_127 = arith.constant 1 : index
    %c1_128 = arith.constant 1 : index
    %c0_129 = arith.constant 0 : index
    %126 = vector.load %arg11[%c1_127, %c1_128, %c0_129] : memref<10x18x64xbf16, #tpu.memory_space<vmem>>, vector<8x16x64xbf16>
    %127 = vector.shape_cast %126 : vector<8x16x64xbf16> to vector<128x64xbf16>
    %c4_130 = arith.constant 4 : index
    %c0_131 = arith.constant 0 : index
    %c0_132 = arith.constant 0 : index
    %128 = vector.load %arg7[%c4_130, %c0_131, %c0_132] : memref<9x64x64xbf16, #tpu.memory_space<vmem>>, vector<1x64x64xbf16>
    %129 = vector.shape_cast %128 : vector<1x64x64xbf16> to vector<64x64xbf16>
    %cst_133 = arith.constant dense<0.000000e+00> : vector<128x64xf32>
    %130 = tpu.matmul %127, %129, %cst_133 {dimension_numbers = #tpu.dot_dimension_numbers<[1], [0], [0], [1], [0, 0, 1, 1], [], []>} : vector<128x64xbf16>, vector<64x64xbf16>, vector<128x64xf32> -> vector<128x64xf32>
    %131 = arith.addf %125, %130 : vector<128x64xf32>
    %c1_134 = arith.constant 1 : index
    %c2_135 = arith.constant 2 : index
    %c0_136 = arith.constant 0 : index
    %132 = vector.load %arg11[%c1_134, %c2_135, %c0_136] : memref<10x18x64xbf16, #tpu.memory_space<vmem>>, vector<8x16x64xbf16>
    %133 = vector.shape_cast %132 : vector<8x16x64xbf16> to vector<128x64xbf16>
    %c5_137 = arith.constant 5 : index
    %c0_138 = arith.constant 0 : index
    %c0_139 = arith.constant 0 : index
    %134 = vector.load %arg7[%c5_137, %c0_138, %c0_139] : memref<9x64x64xbf16, #tpu.memory_space<vmem>>, vector<1x64x64xbf16>
    %135 = vector.shape_cast %134 : vector<1x64x64xbf16> to vector<64x64xbf16>
    %cst_140 = arith.constant dense<0.000000e+00> : vector<128x64xf32>
    %136 = tpu.matmul %133, %135, %cst_140 {dimension_numbers = #tpu.dot_dimension_numbers<[1], [0], [0], [1], [0, 0, 1, 1], [], []>} : vector<128x64xbf16>, vector<64x64xbf16>, vector<128x64xf32> -> vector<128x64xf32>
    %137 = arith.addf %131, %136 : vector<128x64xf32>
    %c2_141 = arith.constant 2 : index
    %c0_142 = arith.constant 0 : index
    %c0_143 = arith.constant 0 : index
    %138 = vector.load %arg11[%c2_141, %c0_142, %c0_143] : memref<10x18x64xbf16, #tpu.memory_space<vmem>>, vector<8x16x64xbf16>
    %139 = vector.shape_cast %138 : vector<8x16x64xbf16> to vector<128x64xbf16>
    %c6_144 = arith.constant 6 : index
    %c0_145 = arith.constant 0 : index
    %c0_146 = arith.constant 0 : index
    %140 = vector.load %arg7[%c6_144, %c0_145, %c0_146] : memref<9x64x64xbf16, #tpu.memory_space<vmem>>, vector<1x64x64xbf16>
    %141 = vector.shape_cast %140 : vector<1x64x64xbf16> to vector<64x64xbf16>
    %cst_147 = arith.constant dense<0.000000e+00> : vector<128x64xf32>
    %142 = tpu.matmul %139, %141, %cst_147 {dimension_numbers = #tpu.dot_dimension_numbers<[1], [0], [0], [1], [0, 0, 1, 1], [], []>} : vector<128x64xbf16>, vector<64x64xbf16>, vector<128x64xf32> -> vector<128x64xf32>
    %143 = arith.addf %137, %142 : vector<128x64xf32>
    %c2_148 = arith.constant 2 : index
    %c1_149 = arith.constant 1 : index
    %c0_150 = arith.constant 0 : index
    %144 = vector.load %arg11[%c2_148, %c1_149, %c0_150] : memref<10x18x64xbf16, #tpu.memory_space<vmem>>, vector<8x16x64xbf16>
    %145 = vector.shape_cast %144 : vector<8x16x64xbf16> to vector<128x64xbf16>
    %c7_151 = arith.constant 7 : index
    %c0_152 = arith.constant 0 : index
    %c0_153 = arith.constant 0 : index
    %146 = vector.load %arg7[%c7_151, %c0_152, %c0_153] : memref<9x64x64xbf16, #tpu.memory_space<vmem>>, vector<1x64x64xbf16>
    %147 = vector.shape_cast %146 : vector<1x64x64xbf16> to vector<64x64xbf16>
    %cst_154 = arith.constant dense<0.000000e+00> : vector<128x64xf32>
    %148 = tpu.matmul %145, %147, %cst_154 {dimension_numbers = #tpu.dot_dimension_numbers<[1], [0], [0], [1], [0, 0, 1, 1], [], []>} : vector<128x64xbf16>, vector<64x64xbf16>, vector<128x64xf32> -> vector<128x64xf32>
    %149 = arith.addf %143, %148 : vector<128x64xf32>
    %c2_155 = arith.constant 2 : index
    %c2_156 = arith.constant 2 : index
    %c0_157 = arith.constant 0 : index
    %150 = vector.load %arg11[%c2_155, %c2_156, %c0_157] : memref<10x18x64xbf16, #tpu.memory_space<vmem>>, vector<8x16x64xbf16>
    %151 = vector.shape_cast %150 : vector<8x16x64xbf16> to vector<128x64xbf16>
    %c8_158 = arith.constant 8 : index
    %c0_159 = arith.constant 0 : index
    %c0_160 = arith.constant 0 : index
    %152 = vector.load %arg7[%c8_158, %c0_159, %c0_160] : memref<9x64x64xbf16, #tpu.memory_space<vmem>>, vector<1x64x64xbf16>
    %153 = vector.shape_cast %152 : vector<1x64x64xbf16> to vector<64x64xbf16>
    %cst_161 = arith.constant dense<0.000000e+00> : vector<128x64xf32>
    %154 = tpu.matmul %151, %153, %cst_161 {dimension_numbers = #tpu.dot_dimension_numbers<[1], [0], [0], [1], [0, 0, 1, 1], [], []>} : vector<128x64xbf16>, vector<64x64xbf16>, vector<128x64xf32> -> vector<128x64xf32>
    %155 = arith.addf %149, %154 : vector<128x64xf32>
    %c0_162 = arith.constant 0 : index
    %c0_163 = arith.constant 0 : index
    %156 = vector.load %arg8[%c0_162, %c0_163] : memref<1x64xf32, #tpu.memory_space<vmem>>, vector<1x64xf32>
    %157 = vector.broadcast %156 : vector<1x64xf32> to vector<128x64xf32>
    %158 = arith.addf %155, %157 : vector<128x64xf32>
    %159 = vector.shape_cast %158 : vector<128x64xf32> to vector<8x16x64xf32>
    %160 = tpu.concatenate %1, %159 in 2 : vector<8x16x64xf32>, vector<8x16x64xf32> -> vector<8x16x128xf32>
    %c0_164 = arith.constant 0 : index
    %c0_165 = arith.constant 0 : index
    %c0_166 = arith.constant 0 : index
    %c0_167 = arith.constant 0 : index
    %161 = vector.load %arg9[%c0_164, %c0_165, %c0_166, %c0_167] : memref<1x8x16x128xf32, #tpu.memory_space<vmem>>, vector<1x8x16x128xf32>
    %162 = vector.shape_cast %161 : vector<1x8x16x128xf32> to vector<8x16x128xf32>
    %163 = vector.shape_cast %160 : vector<8x16x128xf32> to vector<1x8x16x128xf32>
    tpu.vector_store %arg9[%c0_164, %c0_165, %c0_166, %c0_167], %163 {strides = array<i32>} : memref<1x8x16x128xf32, #tpu.memory_space<vmem>>, vector<1x8x16x128xf32>,
    return
  }
  func.func @transform_0(%arg0: i32, %arg1: i32) -> (i32, i32, i32, i32) {
    %c0_i32 = arith.constant 0 : i32
    %c0_i32_0 = arith.constant 0 : i32
    %c0_i32_1 = arith.constant 0 : i32
    return %arg0, %arg1, %c0_i32, %c0_i32_0 : i32, i32, i32, i32
  }
  func.func @transform_1(%arg0: i32, %arg1: i32) -> (i32, i32, i32, i32) {
    %c4_i32 = arith.constant 4 : i32
    %0 = arith.muli %arg1, %c4_i32 : i32
    %c1_i32 = arith.constant 1 : i32
    %1 = arith.subi %0, %c1_i32 : i32
    %c0_i32 = arith.constant 0 : i32
    %2 = arith.maxsi %1, %c0_i32 : i32
    %c0_i32_0 = arith.constant 0 : i32
    %c0_i32_1 = arith.constant 0 : i32
    %c0_i32_2 = arith.constant 0 : i32
    return %arg0, %2, %c0_i32_0, %c0_i32_1 : i32, i32, i32, i32
  }
  func.func @transform_2(%arg0: i32, %arg1: i32) -> (i32, i32, i32, i32) {
    %c1_i32 = arith.constant 1 : i32
    %0 = arith.addi %arg1, %c1_i32 : i32
    %c4_i32 = arith.constant 4 : i32
    %1 = arith.muli %0, %c4_i32 : i32
    %c7_i32 = arith.constant 7 : i32
    %2 = arith.minsi %1, %c7_i32 : i32
    %c0_i32 = arith.constant 0 : i32
    %c0_i32_0 = arith.constant 0 : i32
    %c0_i32_1 = arith.constant 0 : i32
    return %arg0, %2, %c0_i32, %c0_i32_0 : i32, i32, i32, i32
  }
  func.func @transform_3(%arg0: i32, %arg1: i32) -> (i32, i32, i32) {
    %c0_i32 = arith.constant 0 : i32
    %c0_i32_0 = arith.constant 0 : i32
    %c0_i32_1 = arith.constant 0 : i32
    %c0_i32_2 = arith.constant 0 : i32
    return %c0_i32, %c0_i32_0, %c0_i32_1 : i32, i32, i32
  }
  func.func @transform_4(%arg0: i32, %arg1: i32) -> (i32, i32) {
    %c0_i32 = arith.constant 0 : i32
    %c0_i32_0 = arith.constant 0 : i32
    %c0_i32_1 = arith.constant 0 : i32
    return %c0_i32, %c0_i32_0 : i32, i32
  }
  func.func @transform_5(%arg0: i32, %arg1: i32) -> (i32, i32, i32) {
    %c0_i32 = arith.constant 0 : i32
    %c0_i32_0 = arith.constant 0 : i32
    %c0_i32_1 = arith.constant 0 : i32
    %c0_i32_2 = arith.constant 0 : i32
    return %c0_i32, %c0_i32_0, %c0_i32_1 : i32, i32, i32
  }
  func.func @transform_6(%arg0: i32, %arg1: i32) -> (i32, i32) {
    %c0_i32 = arith.constant 0 : i32
    %c0_i32_0 = arith.constant 0 : i32
    %c0_i32_1 = arith.constant 0 : i32
    return %c0_i32, %c0_i32_0 : i32, i32
  }
  func.func @transform_7(%arg0: i32, %arg1: i32) -> (i32, i32, i32, i32) {
    %c0_i32 = arith.constant 0 : i32
    %c0_i32_0 = arith.constant 0 : i32
    %c0_i32_1 = arith.constant 0 : i32
    return %arg0, %arg1, %c0_i32, %c0_i32_0 : i32, i32, i32, i32
  }
}

</mosaic_0001>

<llo_original>
// kernel: concat_block_forward.1
$region0: #{concat_block_forward.1}
  #allocation0 [shape = 'u32[]', space=smem, size = 0x4, offset = 0x4, fixed_abs, tag = 'smem constant byte address 0x4 - core index']
  #allocation1 [shape = 'u32[72,128]{1,0:T(1,128)}', space=vmem, size = 0x9000, scoped, tag = 'internal scratch']
  #allocation2 [shape = 'bf16[12,18,64]{2,1,0:T(8,128)(2,1)}', space=vmem, size = 0x12000, scoped, tag = 'scratch operand']
  #allocation3 [shape = 'bf16[10,18,64]{2,1,0:T(8,128)(2,1)}', space=vmem, size = 0xf000, scoped, tag = 'scratch operand']
  %s0 = inlined_call_operand.vmem [shape: f32[2,16,16,64], index: 0, kind: input, shape index: {}, may-alias: {0,1,2}]
  %s1 = inlined_call_operand.vmem [shape: f32[2,16,16,64], index: 1, kind: input, shape index: {}, may-alias: {0,1,2}]
  %s2 = inlined_call_operand.vmem [shape: f32[2,16,16,64], index: 2, kind: input, shape index: {}, may-alias: {0,1,2}]
  %s3 = inlined_call_operand.vmem [shape: bf16[9,64,64], index: 3, kind: input, shape index: {}]
  %s4 = inlined_call_operand.vmem [shape: f32[1,64], index: 4, kind: input, shape index: {}]
  %s5 = inlined_call_operand.vmem [shape: bf16[9,64,64], index: 5, kind: input, shape index: {}]
  %s6 = inlined_call_operand.vmem [shape: f32[1,64], index: 6, kind: input, shape index: {}]
  %s7 = inlined_call_operand.hbm [shape: f32[2,16,16,128], index: 7, kind: output, shape index: {}]
  %s8 = sld [smem:[#allocation0]]
  $region61: #{concat_block_forward.1} parent=0
    _
  %s10 = ssub.s32 1, %s8
  %s11 = scalar_select 0, %s10, %s8
  $region1: #{concat_block_forward.1} parent=0
    #allocation4 [shape = 'u8[131072]{0}', space=vmem, size = 0x20000, scoped, tag = 'output window, operand 0']
    #allocation5 [shape = 's32[2]{0}', space=sflag, size = 0x8, scoped, tag = 'scoped memory for concat_block_forward.1']
    %12 = vsyncpa [#allocation5], 0
    %s13 = scalar_lea.sflag [#allocation5], 1
    %14 = vsyncpa %s13, 0
    loop: start=0, step=1, limit=6
    $region2: #{concat_block_forward.1} parent=1 // loop_pre_header
      _
    $region3: #{concat_block_forward.1} parent=1 // loop_header
      %s16 = sphi 0, %s20
      %p17 = scmp.ge.s32.totalorder %s16, 6
      %s23 = sphi 0, %s35
      %s24 = sphi 0, %s31
      %s25 = sphi 0, %s23
      %s26 = sphi 0, %s24
      %s27 = sphi 0, %s25
      %s28 = sphi 0, %s26
      %s40 = sphi 0, %s42
      %s43 = sphi 0, %s40
      %s44 = sphi 0, %s43
      %s60 = sphi 0, %s44
      %s76 = sphi 0, %s78
      %s79 = sphi 0, %s76
      %s80 = sphi 0, %s79
      %s96 = sphi 0, %s80
      %s112 = sphi 0, %s114
      %s115 = sphi 0, %s112
      %s116 = sphi 0, %s115
      %s132 = sphi 0, %s116
      %s136 = sphi 0, %s136
      %s138 = sphi 0, %s136
      %s139 = sphi 0, %s138
      %s153 = sphi 0, %s139
      %s157 = sphi 0, %s157
      %s159 = sphi 0, %s157
      %s160 = sphi 0, %s159
      %s174 = sphi 0, %s160
      %s178 = sphi 0, %s178
      %s180 = sphi 0, %s178
      %s181 = sphi 0, %s180
      %s195 = sphi 0, %s181
      %s199 = sphi 0, %s199
      %s201 = sphi 0, %s199
      %s202 = sphi 0, %s201
      %s216 = sphi 0, %s202
      %s224 = sphi 0, %s226
      %s227 = sphi 0, %s224
      %s228 = sphi 0, %s227
      %s244 = sphi 0, %s228
    $region4: #{concat_block_forward.1} parent=1 // loop_header_branch
      %19 = sbr.rel (%p17) target = $region8
    $region5: #{concat_block_forward.1} parent=1 // loop_body
      %s21 = ssub.s32 %s16, 1
      %s22 = ssub.s32 %s16, 2
      %s29 = sadd.s32 1, %s24
      %p30 = scmp.ge.s32.totalorder %s29, 2
      %s31 = scalar_select %p30, 0, %s29
      %s32 = sadd.s32 1, %s23
      %s33 = scalar_select %p30, %s32, %s23
      %p34 = scmp.ge.s32.totalorder %s33, 2
      %s35 = scalar_select %p34, 0, %s33
      %s36 = ssub.s32 %s23, %s35
      %s37 = ssub.s32 %s24, %s31
      %s38 = sor.u32 %s36, %s37
      %p39 = scmp.eq.s32.totalorder %s38, 0
      %s41 = sadd.s32 %s40, 1
      %s42 = scalar_select %p39, %s40, %s41
      %p45 = pneg %p39
      %p46 = scmp.eq.s32.totalorder %s16, 3
      %p47 = por %p45, %p46
      %p48 = scmp.ne.s32.totalorder %s40, %s43
      %p49 = scmp.eq.s32.totalorder %s16, 0
      %p50 = por %p48, %p49
      %p51 = scmp.ne.s32.totalorder %s40, %s43
      %p52 = scmp.eq.s32.totalorder %s21, 3
      %p53 = por %p51, %p52
      %p54 = scmp.ne.s32.totalorder %s43, %s44
      %p55 = scmp.eq.s32.totalorder %s21, 0
      %p56 = por %p54, %p55
      %p57 = scmp.ne.s32.totalorder %s43, %s44
      %p58 = scmp.eq.s32.totalorder %s22, 3
      %p59 = por %p57, %p58
      %p61 = scmp.ne.s32.totalorder %s44, %s60
      %p62 = scmp.eq.s32.totalorder %s22, 0
      %p63 = por %p61, %p62
      %s64 = smul.u32 %s24, 4
      %s65 = ssub.s32 %s64, 1
      %p66 = scmp.gt.s32.totalorder %s65, 0
      %s67 = scalar_select %p66, %s65, 0
      %s68 = smul.u32 %s31, 4
      %s69 = ssub.s32 %s68, 1
      %p70 = scmp.gt.s32.totalorder %s69, 0
      %s71 = scalar_select %p70, %s69, 0
      %s72 = ssub.s32 %s23, %s35
      %s73 = ssub.s32 %s67, %s71
      %s74 = sor.u32 %s72, %s73
      %p75 = scmp.eq.s32.totalorder %s74, 0
      %s77 = sadd.s32 %s76, 1
      %s78 = scalar_select %p75, %s76, %s77
      %p81 = pneg %p75
      %p82 = scmp.eq.s32.totalorder %s16, 3
      %p83 = por %p81, %p82
      %p84 = scmp.ne.s32.totalorder %s76, %s79
      %p85 = scmp.eq.s32.totalorder %s16, 0
      %p86 = por %p84, %p85
      %p87 = scmp.ne.s32.totalorder %s76, %s79
      %p88 = scmp.eq.s32.totalorder %s21, 3
      %p89 = por %p87, %p88
      %p90 = scmp.ne.s32.totalorder %s79, %s80
      %p91 = scmp.eq.s32.totalorder %s21, 0
      %p92 = por %p90, %p91
      %p93 = scmp.ne.s32.totalorder %s79, %s80
      %p94 = scmp.eq.s32.totalorder %s22, 3
      %p95 = por %p93, %p94
      %p97 = scmp.ne.s32.totalorder %s80, %s96
      %p98 = scmp.eq.s32.totalorder %s22, 0
      %p99 = por %p97, %p98
      %s100 = sadd.s32 %s24, 1
      %s101 = smul.u32 %s100, 4
      %p102 = scmp.lt.s32.totalorder %s101, 7
      %s103 = scalar_select %p102, %s101, 7
      %s104 = sadd.s32 %s31, 1
      %s105 = smul.u32 %s104, 4
      %p106 = scmp.lt.s32.totalorder %s105, 7
      %s107 = scalar_select %p106, %s105, 7
      %s108 = ssub.s32 %s23, %s35
      %s109 = ssub.s32 %s103, %s107
      %s110 = sor.u32 %s108, %s109
      %p111 = scmp.eq.s32.totalorder %s110, 0
      %s113 = sadd.s32 %s112, 1
      %s114 = scalar_select %p111, %s112, %s113
      %p117 = pneg %p111
      %p118 = scmp.eq.s32.totalorder %s16, 3
      %p119 = por %p117, %p118
      %p120 = scmp.ne.s32.totalorder %s112, %s115
      %p121 = scmp.eq.s32.totalorder %s16, 0
      %p122 = por %p120, %p121
      %p123 = scmp.ne.s32.totalorder %s112, %s115
      %p124 = scmp.eq.s32.totalorder %s21, 3
      %p125 = por %p123, %p124
      %p126 = scmp.ne.s32.totalorder %s115, %s116
      %p127 = scmp.eq.s32.totalorder %s21, 0
      %p128 = por %p126, %p127
      %p129 = scmp.ne.s32.totalorder %s115, %s116
      %p130 = scmp.eq.s32.totalorder %s22, 3
      %p131 = por %p129, %p130
      %p133 = scmp.ne.s32.totalorder %s116, %s132
      %p134 = scmp.eq.s32.totalorder %s22, 0
      %p135 = por %p133, %p134
      %s137 = sadd.s32 %s136, 1
      %p140 = scmp.eq.s32.totalorder %s16, 3
      %p141 = scmp.ne.s32.totalorder %s136, %s138
      %p142 = scmp.eq.s32.totalorder %s16, 0
      %p143 = por %p141, %p142
      %p144 = scmp.ne.s32.totalorder %s136, %s138
      %p145 = scmp.eq.s32.totalorder %s21, 3
      %p146 = por %p144, %p145
      %p147 = scmp.ne.s32.totalorder %s138, %s139
      %p148 = scmp.eq.s32.totalorder %s21, 0
      %p149 = por %p147, %p148
      %p150 = scmp.ne.s32.totalorder %s138, %s139
      %p151 = scmp.eq.s32.totalorder %s22, 3
      %p152 = por %p150, %p151
      %p154 = scmp.ne.s32.totalorder %s139, %s153
      %p155 = scmp.eq.s32.totalorder %s22, 0
      %p156 = por %p154, %p155
      %s158 = sadd.s32 %s157, 1
      %p161 = scmp.eq.s32.totalorder %s16, 3
      %p162 = scmp.ne.s32.totalorder %s157, %s159
      %p163 = scmp.eq.s32.totalorder %s16, 0
      %p164 = por %p162, %p163
      %p165 = scmp.ne.s32.totalorder %s157, %s159
      %p166 = scmp.eq.s32.totalorder %s21, 3
      %p167 = por %p165, %p166
      %p168 = scmp.ne.s32.totalorder %s159, %s160
      %p169 = scmp.eq.s32.totalorder %s21, 0
      %p170 = por %p168, %p169
      %p171 = scmp.ne.s32.totalorder %s159, %s160
      %p172 = scmp.eq.s32.totalorder %s22, 3
      %p173 = por %p171, %p172
      %p175 = scmp.ne.s32.totalorder %s160, %s174
      %p176 = scmp.eq.s32.totalorder %s22, 0
      %p177 = por %p175, %p176
      %s179 = sadd.s32 %s178, 1
      %p182 = scmp.eq.s32.totalorder %s16, 3
      %p183 = scmp.ne.s32.totalorder %s178, %s180
      %p184 = scmp.eq.s32.totalorder %s16, 0
      %p185 = por %p183, %p184
      %p186 = scmp.ne.s32.totalorder %s178, %s180
      %p187 = scmp.eq.s32.totalorder %s21, 3
      %p188 = por %p186, %p187
      %p189 = scmp.ne.s32.totalorder %s180, %s181
      %p190 = scmp.eq.s32.totalorder %s21, 0
      %p191 = por %p189, %p190
      %p192 = scmp.ne.s32.totalorder %s180, %s181
      %p193 = scmp.eq.s32.totalorder %s22, 3
      %p194 = por %p192, %p193
      %p196 = scmp.ne.s32.totalorder %s181, %s195
      %p197 = scmp.eq.s32.totalorder %s22, 0
      %p198 = por %p196, %p197
      %s200 = sadd.s32 %s199, 1
      %p203 = scmp.eq.s32.totalorder %s16, 3
      %p204 = scmp.ne.s32.totalorder %s199, %s201
      %p205 = scmp.eq.s32.totalorder %s16, 0
      %p206 = por %p204, %p205
      %p207 = scmp.ne.s32.totalorder %s199, %s201
      %p208 = scmp.eq.s32.totalorder %s21, 3
      %p209 = por %p207, %p208
      %p210 = scmp.ne.s32.totalorder %s201, %s202
      %p211 = scmp.eq.s32.totalorder %s21, 0
      %p212 = por %p210, %p211
      %p213 = scmp.ne.s32.totalorder %s201, %s202
      %p214 = scmp.eq.s32.totalorder %s22, 3
      %p215 = por %p213, %p214
      %p217 = scmp.ne.s32.totalorder %s202, %s216
      %p218 = scmp.eq.s32.totalorder %s22, 0
      %p219 = por %p217, %p218
      %s220 = ssub.s32 %s23, %s35
      %s221 = ssub.s32 %s24, %s31
      %s222 = sor.u32 %s220, %s221
      %p223 = scmp.eq.s32.totalorder %s222, 0
      %s225 = sadd.s32 %s224, 1
      %s226 = scalar_select %p223, %s224, %s225
      %p229 = pneg %p223
      %p230 = scmp.eq.s32.totalorder %s16, 3
      %p231 = por %p229, %p230
      %p232 = scmp.ne.s32.totalorder %s224, %s227
      %p233 = scmp.eq.s32.totalorder %s16, 0
      %p234 = por %p232, %p233
      %p235 = scmp.ne.s32.totalorder %s224, %s227
      %p236 = scmp.eq.s32.totalorder %s21, 3
      %p237 = por %p235, %p236
      %p238 = scmp.ne.s32.totalorder %s227, %s228
      %p239 = scmp.eq.s32.totalorder %s21, 0
      %p240 = por %p238, %p239
      %p241 = scmp.ne.s32.totalorder %s227, %s228
      %p242 = scmp.eq.s32.totalorder %s22, 3
      %p243 = por %p241, %p242
      %p245 = scmp.ne.s32.totalorder %s228, %s244
      %p246 = scmp.eq.s32.totalorder %s22, 0
      %p247 = por %p245, %p246
      %p248 = scmp.le.s32.totalorder 1, %s16
      %p249 = scmp.lt.s32.totalorder %s16, 5
      %p250 = pnand %p248, %p249
      %p251 = pneg %p250
      // Predicated region
      $region9: #{concat_block_forward.1} parent=5 // pred_check
        _
      $region10: #{concat_block_forward.1} parent=5 // pred_check_branch
        %253 = sbr.rel (%p250) target = $region12
      $region11: #{concat_block_forward.1} parent=5 // pred_region
        %s254 = ssub.s32 %s16, 1
        // Predicated region
        $region13: #{concat_block_forward.1} parent=11 // pred_check
          %p255 = pneg %p149
        $region14: #{concat_block_forward.1} parent=11 // pred_check_branch
          %257 = sbr.rel (%p255) target = $region16
        $region15: #{concat_block_forward.1} parent=11 // pred_region
          _
        $region16: #{concat_block_forward.1} parent=11 // pred_fallthru
          _
        // Predicated region
        $region17: #{concat_block_forward.1} parent=11 // pred_check
          %p258 = pneg %p170
        $region18: #{concat_block_forward.1} parent=11 // pred_check_branch
          %260 = sbr.rel (%p258) target = $region20
        $region19: #{concat_block_forward.1} parent=11 // pred_region
          _
        $region20: #{concat_block_forward.1} parent=11 // pred_fallthru
          _
        // Predicated region
        $region21: #{concat_block_forward.1} parent=11 // pred_check
          %p261 = pneg %p191
        $region22: #{concat_block_forward.1} parent=11 // pred_check_branch
          %263 = sbr.rel (%p261) target = $region24
        $region23: #{concat_block_forward.1} parent=11 // pred_region
          _
        $region24: #{concat_block_forward.1} parent=11 // pred_fallthru
          _
        // Predicated region
        $region25: #{concat_block_forward.1} parent=11 // pred_check
          %p264 = pneg %p212
        $region26: #{concat_block_forward.1} parent=11 // pred_check_branch
          %266 = sbr.rel (%p264) target = $region28
        $region27: #{concat_block_forward.1} parent=11 // pred_region
          _
        $region28: #{concat_block_forward.1} parent=11 // pred_fallthru
          _
      $region12: #{concat_block_forward.1} parent=5 // pred_fallthru
        _
      %p267 = scmp.lt.s32.totalorder %s16, 4
      // Predicated region
      $region29: #{concat_block_forward.1} parent=5 // pred_check
        %p268 = pneg %p267
      $region30: #{concat_block_forward.1} parent=5 // pred_check_branch
        %270 = sbr.rel (%p268) target = $region32
      $region31: #{concat_block_forward.1} parent=5 // pred_region
        // Predicated region
        $region33: #{concat_block_forward.1} parent=31 // pred_check
          %p271 = pneg %p50
        $region34: #{concat_block_forward.1} parent=31 // pred_check_branch
          %273 = sbr.rel (%p271) target = $region36
        $region35: #{concat_block_forward.1} parent=31 // pred_region
          %s274 = smul.u32 8, %s24
          %p275 = scmp.lt.s32.totalorder %s23, 1
          %s276 = scalar_select %p275, %s23, 1
          %p277 = scmp.lt.s32.totalorder %s274, 15
          %s278 = scalar_select %p277, %s274, 15
          %s279 = smul.addr %s278, 2
          %s280 = smul.addr %s276, 32
          %s281 = sadd.s32 %s279, %s280
          %s282 = smul.addr %s281, 8
          %s283 = scalar_lea.vmem %s0, %s282
          %s284 = smul.u32 8, %s24
        $region36: #{concat_block_forward.1} parent=31 // pred_fallthru
          _
        // Predicated region
        $region37: #{concat_block_forward.1} parent=31 // pred_check
          %p285 = pneg %p86
        $region38: #{concat_block_forward.1} parent=31 // pred_check_branch
          %287 = sbr.rel (%p285) target = $region40
        $region39: #{concat_block_forward.1} parent=31 // pred_region
          %s288 = smul.u32 %s24, 4
          %s289 = ssub.s32 %s288, 1
          %p290 = scmp.gt.s32.totalorder %s289, 0
          %s291 = scalar_select %p290, %s289, 0
          %s292 = smul.u32 2, %s291
          %p293 = scmp.lt.s32.totalorder %s23, 1
          %s294 = scalar_select %p293, %s23, 1
          %p295 = scmp.lt.s32.totalorder %s292, 15
          %s296 = scalar_select %p295, %s292, 15
          %s297 = smul.addr %s296, 2
          %s298 = smul.addr %s294, 32
          %s299 = sadd.s32 %s297, %s298
          %s300 = smul.addr %s299, 8
          %s301 = scalar_lea.vmem %s1, %s300
          %s302 = smul.u32 %s24, 4
          %s303 = ssub.s32 %s302, 1
          %p304 = scmp.gt.s32.totalorder %s303, 0
          %s305 = scalar_select %p304, %s303, 0
          %s306 = smul.u32 2, %s305
        $region40: #{concat_block_forward.1} parent=31 // pred_fallthru
          _
        // Predicated region
        $region41: #{concat_block_forward.1} parent=31 // pred_check
          %p307 = pneg %p122
        $region42: #{concat_block_forward.1} parent=31 // pred_check_branch
          %309 = sbr.rel (%p307) target = $region44
        $region43: #{concat_block_forward.1} parent=31 // pred_region
          %s310 = sadd.s32 %s24, 1
          %s311 = smul.u32 %s310, 4
          %p312 = scmp.lt.s32.totalorder %s311, 7
          %s313 = scalar_select %p312, %s311, 7
          %s314 = smul.u32 2, %s313
          %p315 = scmp.lt.s32.totalorder %s23, 1
          %s316 = scalar_select %p315, %s23, 1
          %p317 = scmp.lt.s32.totalorder %s314, 15
          %s318 = scalar_select %p317, %s314, 15
          %s319 = smul.addr %s318, 2
          %s320 = smul.addr %s316, 32
          %s321 = sadd.s32 %s319, %s320
          %s322 = smul.addr %s321, 8
          %s323 = scalar_lea.vmem %s2, %s322
          %s324 = sadd.s32 %s24, 1
          %s325 = smul.u32 %s324, 4
          %p326 = scmp.lt.s32.totalorder %s325, 7
          %s327 = scalar_select %p326, %s325, 7
          %s328 = smul.u32 2, %s327
        $region44: #{concat_block_forward.1} parent=31 // pred_fallthru
          _
      $region32: #{concat_block_forward.1} parent=5 // pred_fallthru
        _
      %p329 = scmp.le.s32.totalorder 1, %s16
      %p330 = scmp.lt.s32.totalorder %s16, 5
      %p331 = pnand %p329, %p330
      %p332 = pneg %p331
      // Predicated region
      $region45: #{concat_block_forward.1} parent=5 // pred_check
        _
      $region46: #{concat_block_forward.1} parent=5 // pred_check_branch
        %334 = sbr.rel (%p331) target = $region48
      $region47: #{concat_block_forward.1} parent=5 // pred_region
        %s335 = ssub.s32 %s16, 1
        %s336 = smul.u32 8, %s26
        %p337 = scmp.lt.s32.totalorder %s25, 1
        %s338 = scalar_select %p337, %s25, 1
        %p339 = scmp.lt.s32.totalorder %s336, 15
        %s340 = scalar_select %p339, %s336, 15
        %s341 = smul.addr %s340, 2
        %s342 = smul.addr %s338, 32
        %s343 = sadd.s32 %s341, %s342
        %s344 = smul.addr %s343, 8
        %s345 = scalar_lea.vmem %s0, %s344
        %p346 = pneg %p56
        %p347 = pneg %p53
        %s348 = smul.u32 %s26, 4
        %s349 = ssub.s32 %s348, 1
        %p350 = scmp.gt.s32.totalorder %s349, 0
        %s351 = scalar_select %p350, %s349, 0
        %s352 = smul.u32 2, %s351
        %p353 = scmp.lt.s32.totalorder %s25, 1
        %s354 = scalar_select %p353, %s25, 1
        %p355 = scmp.lt.s32.totalorder %s352, 15
        %s356 = scalar_select %p355, %s352, 15
        %s357 = smul.addr %s356, 2
        %s358 = smul.addr %s354, 32
        %s359 = sadd.s32 %s357, %s358
        %s360 = smul.addr %s359, 8
        %s361 = scalar_lea.vmem %s1, %s360
        %p362 = pneg %p92
        %p363 = pneg %p89
        %s364 = sadd.s32 %s26, 1
        %s365 = smul.u32 %s364, 4
        %p366 = scmp.lt.s32.totalorder %s365, 7
        %s367 = scalar_select %p366, %s365, 7
        %s368 = smul.u32 2, %s367
        %p369 = scmp.lt.s32.totalorder %s25, 1
        %s370 = scalar_select %p369, %s25, 1
        %p371 = scmp.lt.s32.totalorder %s368, 15
        %s372 = scalar_select %p371, %s368, 15
        %s373 = smul.addr %s372, 2
        %s374 = smul.addr %s370, 32
        %s375 = sadd.s32 %s373, %s374
        %s376 = smul.addr %s375, 8
        %s377 = scalar_lea.vmem %s2, %s376
        %p378 = pneg %p128
        %p379 = pneg %p125
        %p380 = pneg %p149
        %p381 = pneg %p146
        %p382 = pneg %p170
        %p383 = pneg %p167
        %p384 = pneg %p191
        %p385 = pneg %p188
        %p386 = pneg %p212
        %p387 = pneg %p209
        %p388 = pneg %p240
        %p389 = pneg %p237
        %s390 = sand.u32 %s227, 1
        %s391 = scalar_lea.sflag [#allocation5], %s390
        %s392 = sand.u32 %s227, 1
        %s393 = smul.addr %s392, 128
        %s394 = scalar_lea.vmem [#allocation4], %s393
        %s395 = smul.u32 8, %s26
        %p396 = scmp.lt.s32.totalorder %s25, 1
        %s397 = scalar_select %p396, %s25, 1
        %p398 = scmp.lt.s32.totalorder %s395, 15
        %s399 = scalar_select %p398, %s395, 15
        %s400 = smul.addr %s399, 2
        %s401 = smul.addr %s397, 32
        %s402 = sadd.s32 %s400, %s401
        %s403 = smul.addr %s402, 8
        %s404 = scalar_lea.vmem %s0, %s403
        %s405 = smul.u32 8, %s26
        %s406 = smul.u32 %s26, 4
        %s407 = ssub.s32 %s406, 1
        %p408 = scmp.gt.s32.totalorder %s407, 0
        %s409 = scalar_select %p408, %s407, 0
        %s410 = smul.u32 2, %s409
        %p411 = scmp.lt.s32.totalorder %s25, 1
        %s412 = scalar_select %p411, %s25, 1
        %p413 = scmp.lt.s32.totalorder %s410, 15
        %s414 = scalar_select %p413, %s410, 15
        %s415 = smul.addr %s414, 2
        %s416 = smul.addr %s412, 32
        %s417 = sadd.s32 %s415, %s416
        %s418 = smul.addr %s417, 8
        %s419 = scalar_lea.vmem %s1, %s418
        %s420 = smul.u32 %s26, 4
        %s421 = ssub.s32 %s420, 1
        %p422 = scmp.gt.s32.totalorder %s421, 0
        %s423 = scalar_select %p422, %s421, 0
        %s424 = smul.u32 2, %s423
        %s425 = sadd.s32 %s26, 1
        %s426 = smul.u32 %s425, 4
        %p427 = scmp.lt.s32.totalorder %s426, 7
        %s428 = scalar_select %p427, %s426, 7
        %s429 = smul.u32 2, %s428
        %p430 = scmp.lt.s32.totalorder %s25, 1
        %s431 = scalar_select %p430, %s25, 1
        %p432 = scmp.lt.s32.totalorder %s429, 15
        %s433 = scalar_select %p432, %s429, 15
        %s434 = smul.addr %s433, 2
        %s435 = smul.addr %s431, 32
        %s436 = sadd.s32 %s434, %s435
        %s437 = smul.addr %s436, 8
        %s438 = scalar_lea.vmem %s2, %s437
        %s439 = sadd.s32 %s26, 1
        %s440 = smul.u32 %s439, 4
        %p441 = scmp.lt.s32.totalorder %s440, 7
        %s442 = scalar_select %p441, %s440, 7
        %s443 = smul.u32 2, %s442
        %s444 = smul.u32 8, %s26
        %v446 = vld [vmem:[%s404] sm:$0xff]
        %v447 = vld [vmem:[%s404 + $0x8] sm:$0xff]
        %v448 = vld [vmem:[%s404 + $0x10] sm:$0xff]
        %v449 = vld [vmem:[%s404 + $0x18] sm:$0xff]
        %v450 = vld [vmem:[%s404 + $0x20] sm:$0xff]
        %v451 = vld [vmem:[%s404 + $0x28] sm:$0xff]
        %v452 = vld [vmem:[%s404 + $0x30] sm:$0xff]
        %v453 = vld [vmem:[%s404 + $0x38] sm:$0xff]
        %v454 = vld [vmem:[%s404 + $0x40] sm:$0xff]
        %v455 = vld [vmem:[%s404 + $0x48] sm:$0xff]
        %v456 = vld [vmem:[%s404 + $0x50] sm:$0xff]
        %v457 = vld [vmem:[%s404 + $0x58] sm:$0xff]
        %v458 = vld [vmem:[%s404 + $0x60] sm:$0xff]
        %v459 = vld [vmem:[%s404 + $0x68] sm:$0xff]
        %v460 = vld [vmem:[%s404 + $0x70] sm:$0xff]
        %v461 = vld [vmem:[%s404 + $0x78] sm:$0xff]
        %v462 = vld [vmem:[%s419] sm:$0xff]
        %v463 = vld [vmem:[%s419 + $0x8] sm:$0xff]
        %v464 = vld [vmem:[%s419 + $0x10] sm:$0xff]
        %v465 = vld [vmem:[%s419 + $0x18] sm:$0xff]
        %v466 = vpack.c.bf16 %v462, %v462
        %v467 = vpack.c.bf16 %v463, %v463
        %v468 = vpack.c.bf16 %v464, %v464
        %v469 = vpack.c.bf16 %v465, %v465
        %v470 = vld [vmem:[%s438] sm:$0xff]
        %v471 = vld [vmem:[%s438 + $0x8] sm:$0xff]
        %v472 = vld [vmem:[%s438 + $0x10] sm:$0xff]
        %v473 = vld [vmem:[%s438 + $0x18] sm:$0xff]
        %v474 = vpack.c.bf16 %v470, %v470
        %v475 = vpack.c.bf16 %v471, %v471
        %v476 = vpack.c.bf16 %v472, %v472
        %v477 = vpack.c.bf16 %v473, %v473
        %p478 = scmp.gt.s32.totalorder %s26, 0
        %s479 = scalar_select %p478, 1, 0
        %v480 = vstv %s479
        %vm481 = vcmp.eq.s32.totalorder %v480, 1
        %v482 = vsel %vm481, %v466, 0
        %v483 = vsel %vm481, %v467, 0
        %v484 = vsel %vm481, %v468, 0
        %v485 = vsel %vm481, %v469, 0
        %p486 = scmp.lt.s32.totalorder %s26, 1
        %s487 = scalar_select %p486, 1, 0
        %v488 = vstv %s487
        %vm489 = vcmp.eq.s32.totalorder %v488, 1
        %v490 = vsel %vm489, %v474, 0
        %v491 = vsel %vm489, %v475, 0
        %v492 = vsel %vm489, %v476, 0
        %v493 = vsel %vm489, %v477, 0
        %vm494 = vcmask 516096
        %vm495 = vsmask.f32 256
        %vm496 = vmand %vm494, %vm495
        %v497 = vld [vmem:[#allocation2] sm:$0x1]
        %v498 = vsel %vm496, 0, %v497
        %499 = vst [vmem:[#allocation2] sm:$0x1] %v498
        %v500 = vld [vmem:[#allocation2 + $0xc] sm:$0x1]
        %v501 = vsel %vm496, 0, %v500
        %502 = vst [vmem:[#allocation2 + $0xc] sm:$0x1] %v501
        %v503 = vld [vmem:[#allocation2 + $0x18] sm:$0x1]
        %v504 = vsel %vm496, 0, %v503
        %505 = vst [vmem:[#allocation2 + $0x18] sm:$0x1] %v504
        %v506 = vld [vmem:[#allocation2 + $0x24] sm:$0x1]
        %v507 = vsel %vm496, 0, %v506
        %508 = vst [vmem:[#allocation2 + $0x24] sm:$0x1] %v507
        %v509 = vld [vmem:[#allocation2 + $0x30] sm:$0x1]
        %v510 = vsel %vm496, 0, %v509
        %511 = vst [vmem:[#allocation2 + $0x30] sm:$0x1] %v510
        %v512 = vld [vmem:[#allocation2 + $0x3c] sm:$0x1]
        %v513 = vsel %vm496, 0, %v512
        %514 = vst [vmem:[#allocation2 + $0x3c] sm:$0x1] %v513
        %v515 = vld [vmem:[#allocation2 + $0x48] sm:$0x1]
        %v516 = vsel %vm496, 0, %v515
        %517 = vst [vmem:[#allocation2 + $0x48] sm:$0x1] %v516
        %v518 = vld [vmem:[#allocation2 + $0x54] sm:$0x1]
        %v519 = vsel %vm496, 0, %v518
        %520 = vst [vmem:[#allocation2 + $0x54] sm:$0x1] %v519
        %v521 = vld [vmem:[#allocation2 + $0x60] sm:$0x1]
        %v522 = vsel %vm496, 0, %v521
        %523 = vst [vmem:[#allocation2 + $0x60] sm:$0x1] %v522
        %v524 = vld [vmem:[#allocation2 + $0x6c] sm:$0x1]
        %v525 = vsel %vm496, 0, %v524
        %526 = vst [vmem:[#allocation2 + $0x6c] sm:$0x1] %v525
        %v527 = vld [vmem:[#allocation2 + $0x78] sm:$0x1]
        %v528 = vsel %vm496, 0, %v527
        %529 = vst [vmem:[#allocation2 + $0x78] sm:$0x1] %v528
        %v530 = vld [vmem:[#allocation2 + $0x84] sm:$0x1]
        %v531 = vsel %vm496, 0, %v530
        %532 = vst [vmem:[#allocation2 + $0x84] sm:$0x1] %v531
        %vm533 = vsmask.f32 7938
        %vm534 = vmand %vm494, %vm533
        %v535 = vld [vmem:[#allocation2 + $0x8] sm:$0x1]
        %v536 = vsel %vm534, 0, %v535
        %537 = vst [vmem:[#allocation2 + $0x8] sm:$0x1] %v536
        %v538 = vld [vmem:[#allocation2 + $0x14] sm:$0x1]
        %v539 = vsel %vm534, 0, %v538
        %540 = vst [vmem:[#allocation2 + $0x14] sm:$0x1] %v539
        %v541 = vld [vmem:[#allocation2 + $0x20] sm:$0x1]
        %v542 = vsel %vm534, 0, %v541
        %543 = vst [vmem:[#allocation2 + $0x20] sm:$0x1] %v542
        %v544 = vld [vmem:[#allocation2 + $0x2c] sm:$0x1]
        %v545 = vsel %vm534, 0, %v544
        %546 = vst [vmem:[#allocation2 + $0x2c] sm:$0x1] %v545
        %v547 = vld [vmem:[#allocation2 + $0x38] sm:$0x1]
        %v548 = vsel %vm534, 0, %v547
        %549 = vst [vmem:[#allocation2 + $0x38] sm:$0x1] %v548
        %v550 = vld [vmem:[#allocation2 + $0x44] sm:$0x1]
        %v551 = vsel %vm534, 0, %v550
        %552 = vst [vmem:[#allocation2 + $0x44] sm:$0x1] %v551
        %v553 = vld [vmem:[#allocation2 + $0x50] sm:$0x1]
        %v554 = vsel %vm534, 0, %v553
        %555 = vst [vmem:[#allocation2 + $0x50] sm:$0x1] %v554
        %v556 = vld [vmem:[#allocation2 + $0x5c] sm:$0x1]
        %v557 = vsel %vm534, 0, %v556
        %558 = vst [vmem:[#allocation2 + $0x5c] sm:$0x1] %v557
        %v559 = vld [vmem:[#allocation2 + $0x68] sm:$0x1]
        %v560 = vsel %vm534, 0, %v559
        %561 = vst [vmem:[#allocation2 + $0x68] sm:$0x1] %v560
        %v562 = vld [vmem:[#allocation2 + $0x74] sm:$0x1]
        %v563 = vsel %vm534, 0, %v562
        %564 = vst [vmem:[#allocation2 + $0x74] sm:$0x1] %v563
        %v565 = vld [vmem:[#allocation2 + $0x80] sm:$0x1]
        %v566 = vsel %vm534, 0, %v565
        %567 = vst [vmem:[#allocation2 + $0x80] sm:$0x1] %v566
        %v568 = vld [vmem:[#allocation2 + $0x8c] sm:$0x1]
        %v569 = vsel %vm534, 0, %v568
        %570 = vst [vmem:[#allocation2 + $0x8c] sm:$0x1] %v569
        %vm571 = vsmask.f32 4368
        %vm572 = vmor %vm495, %vm571
        %v574 = vshrl.u32 %v482, 16
        %v576 = vrot.slane %v574, 7
        %v577 = vshll.u32 %v482, 16
        %v579 = vor.u32 %v576, %v577
        %v580 = vrot.slane %v576, 4
        %v582 = vshrl.u32 %v483, 16
        %v584 = vrot.slane %v582, 7
        %v585 = vshll.u32 %v483, 16
        %v587 = vor.u32 %v584, %v585
        %v588 = vsel %vm572, %v580, %v587
        %v589 = vrot.slane %v584, 4
        %v591 = vshrl.u32 %v484, 16
        %v593 = vrot.slane %v591, 7
        %v594 = vshll.u32 %v484, 16
        %v596 = vor.u32 %v593, %v594
        %v597 = vrot.slane %v593, 4
        %v599 = vshrl.u32 %v485, 16
        %v601 = vrot.slane %v599, 7
        %v602 = vshll.u32 %v485, 16
        %v604 = vor.u32 %v601, %v602
        %v605 = vsel %vm572, %v597, %v604
        %v606 = vrot.slane %v601, 4
        %vm613 = vcmask 519168
        %vm614 = vmand %vm613, %vm533
        %v615 = vld [vmem:[#allocation2] sm:$0xf]
        %v616 = vsel %vm614, %v579, %v615
        %617 = vst [vmem:[#allocation2] sm:$0xf] %v616
        %vm618 = vcmask 519168
        %619 = vst.msk [vmem:[#allocation2 + $0x4] sm:$0xf] %vm618, %v588
        %v620 = vld [vmem:[#allocation2 + $0x8] sm:$0x1]
        %v621 = vsel %vm496, %v589, %v620
        %622 = vst [vmem:[#allocation2 + $0x8] sm:$0x1] %v621
        %v623 = vld [vmem:[#allocation2 + $0xc] sm:$0xf]
        %v624 = vsel %vm614, %v596, %v623
        %625 = vst [vmem:[#allocation2 + $0xc] sm:$0xf] %v624
        %626 = vst.msk [vmem:[#allocation2 + $0x10] sm:$0xf] %vm618, %v605
        %v627 = vld [vmem:[#allocation2 + $0x14] sm:$0x1]
        %v628 = vsel %vm496, %v606, %v627
        %629 = vst [vmem:[#allocation2 + $0x14] sm:$0x1] %v628
        %v630 = vpack.c.bf16 %v446, %v446
        %v631 = vpack.c.bf16 %v447, %v447
        %v632 = vpack.c.bf16 %v448, %v448
        %v633 = vpack.c.bf16 %v449, %v449
        %v634 = vpack.c.bf16 %v450, %v450
        %v635 = vpack.c.bf16 %v451, %v451
        %v636 = vpack.c.bf16 %v452, %v452
        %v637 = vpack.c.bf16 %v453, %v453
        %v638 = vpack.c.bf16 %v454, %v454
        %v639 = vpack.c.bf16 %v455, %v455
        %v640 = vpack.c.bf16 %v456, %v456
        %v641 = vpack.c.bf16 %v457, %v457
        %v642 = vpack.c.bf16 %v458, %v458
        %v643 = vpack.c.bf16 %v459, %v459
        %v644 = vpack.c.bf16 %v460, %v460
        %v645 = vpack.c.bf16 %v461, %v461
        %v647 = vshrl.u32 %v630, 16
        %v649 = vrot.slane %v647, 7
        %v650 = vshll.u32 %v630, 16
        %v652 = vor.u32 %v649, %v650
        %v653 = vrot.slane %v649, 4
        %v655 = vshrl.u32 %v631, 16
        %v657 = vrot.slane %v655, 7
        %v658 = vshll.u32 %v631, 16
        %v660 = vor.u32 %v657, %v658
        %v661 = vsel %vm572, %v653, %v660
        %v662 = vrot.slane %v657, 4
        %v664 = vshrl.u32 %v632, 16
        %v666 = vrot.slane %v664, 7
        %v667 = vshll.u32 %v632, 16
        %v669 = vor.u32 %v666, %v667
        %v670 = vrot.slane %v666, 4
        %v672 = vshrl.u32 %v633, 16
        %v674 = vrot.slane %v672, 7
        %v675 = vshll.u32 %v633, 16
        %v677 = vor.u32 %v674, %v675
        %v678 = vsel %vm572, %v670, %v677
        %v679 = vrot.slane %v674, 4
        %v681 = vshrl.u32 %v634, 16
        %v683 = vrot.slane %v681, 7
        %v684 = vshll.u32 %v634, 16
        %v686 = vor.u32 %v683, %v684
        %v687 = vrot.slane %v683, 4
        %v689 = vshrl.u32 %v635, 16
        %v691 = vrot.slane %v689, 7
        %v692 = vshll.u32 %v635, 16
        %v694 = vor.u32 %v691, %v692
        %v695 = vsel %vm572, %v687, %v694
        %v696 = vrot.slane %v691, 4
        %v698 = vshrl.u32 %v636, 16
        %v700 = vrot.slane %v698, 7
        %v701 = vshll.u32 %v636, 16
        %v703 = vor.u32 %v700, %v701
        %v704 = vrot.slane %v700, 4
        %v706 = vshrl.u32 %v637, 16
        %v708 = vrot.slane %v706, 7
        %v709 = vshll.u32 %v637, 16
        %v711 = vor.u32 %v708, %v709
        %v712 = vsel %vm572, %v704, %v711
        %v713 = vrot.slane %v708, 4
        %v715 = vshrl.u32 %v638, 16
        %v717 = vrot.slane %v715, 7
        %v718 = vshll.u32 %v638, 16
        %v720 = vor.u32 %v717, %v718
        %v721 = vrot.slane %v717, 4
        %v723 = vshrl.u32 %v639, 16
        %v725 = vrot.slane %v723, 7
        %v726 = vshll.u32 %v639, 16
        %v728 = vor.u32 %v725, %v726
        %v729 = vsel %vm572, %v721, %v728
        %v730 = vrot.slane %v725, 4
        %v732 = vshrl.u32 %v640, 16
        %v734 = vrot.slane %v732, 7
        %v735 = vshll.u32 %v640, 16
        %v737 = vor.u32 %v734, %v735
        %v738 = vrot.slane %v734, 4
        %v740 = vshrl.u32 %v641, 16
        %v742 = vrot.slane %v740, 7
        %v743 = vshll.u32 %v641, 16
        %v745 = vor.u32 %v742, %v743
        %v746 = vsel %vm572, %v738, %v745
        %v747 = vrot.slane %v742, 4
        %v749 = vshrl.u32 %v642, 16
        %v751 = vrot.slane %v749, 7
        %v752 = vshll.u32 %v642, 16
        %v754 = vor.u32 %v751, %v752
        %v755 = vrot.slane %v751, 4
        %v757 = vshrl.u32 %v643, 16
        %v759 = vrot.slane %v757, 7
        %v760 = vshll.u32 %v643, 16
        %v762 = vor.u32 %v759, %v760
        %v763 = vsel %vm572, %v755, %v762
        %v764 = vrot.slane %v759, 4
        %v766 = vshrl.u32 %v644, 16
        %v768 = vrot.slane %v766, 7
        %v769 = vshll.u32 %v644, 16
        %v771 = vor.u32 %v768, %v769
        %v772 = vrot.slane %v768, 4
        %v774 = vshrl.u32 %v645, 16
        %v776 = vrot.slane %v774, 7
        %v777 = vshll.u32 %v645, 16
        %v779 = vor.u32 %v776, %v777
        %v780 = vsel %vm572, %v772, %v779
        %v781 = vrot.slane %v776, 4
        %s806 = scalar_lea.vmem [#allocation2], 24
        %v807 = vld [vmem:[%s806] sm:$0xf]
        %v808 = vsel %vm614, %v652, %v807
        %809 = vst [vmem:[%s806] sm:$0xf] %v808
        %810 = vst.msk [vmem:[%s806 + $0x4] sm:$0xf] %vm618, %v661
        %v811 = vld [vmem:[%s806 + $0x8] sm:$0x1]
        %v812 = vsel %vm496, %v662, %v811
        %813 = vst [vmem:[%s806 + $0x8] sm:$0x1] %v812
        %v814 = vld [vmem:[%s806 + $0xc] sm:$0xf]
        %v815 = vsel %vm614, %v669, %v814
        %816 = vst [vmem:[%s806 + $0xc] sm:$0xf] %v815
        %817 = vst.msk [vmem:[%s806 + $0x10] sm:$0xf] %vm618, %v678
        %v818 = vld [vmem:[%s806 + $0x14] sm:$0x1]
        %v819 = vsel %vm496, %v679, %v818
        %820 = vst [vmem:[%s806 + $0x14] sm:$0x1] %v819
        %v821 = vld [vmem:[%s806 + $0x18] sm:$0xf]
        %v822 = vsel %vm614, %v686, %v821
        %823 = vst [vmem:[%s806 + $0x18] sm:$0xf] %v822
        %824 = vst.msk [vmem:[%s806 + $0x1c] sm:$0xf] %vm618, %v695
        %v825 = vld [vmem:[%s806 + $0x20] sm:$0x1]
        %v826 = vsel %vm496, %v696, %v825
        %827 = vst [vmem:[%s806 + $0x20] sm:$0x1] %v826
        %v828 = vld [vmem:[%s806 + $0x24] sm:$0xf]
        %v829 = vsel %vm614, %v703, %v828
        %830 = vst [vmem:[%s806 + $0x24] sm:$0xf] %v829
        %831 = vst.msk [vmem:[%s806 + $0x28] sm:$0xf] %vm618, %v712
        %v832 = vld [vmem:[%s806 + $0x2c] sm:$0x1]
        %v833 = vsel %vm496, %v713, %v832
        %834 = vst [vmem:[%s806 + $0x2c] sm:$0x1] %v833
        %v835 = vld [vmem:[%s806 + $0x30] sm:$0xf]
        %v836 = vsel %vm614, %v720, %v835
        %837 = vst [vmem:[%s806 + $0x30] sm:$0xf] %v836
        %838 = vst.msk [vmem:[%s806 + $0x34] sm:$0xf] %vm618, %v729
        %v839 = vld [vmem:[%s806 + $0x38] sm:$0x1]
        %v840 = vsel %vm496, %v730, %v839
        %841 = vst [vmem:[%s806 + $0x38] sm:$0x1] %v840
        %v842 = vld [vmem:[%s806 + $0x3c] sm:$0xf]
        %v843 = vsel %vm614, %v737, %v842
        %844 = vst [vmem:[%s806 + $0x3c] sm:$0xf] %v843
        %845 = vst.msk [vmem:[%s806 + $0x40] sm:$0xf] %vm618, %v746
        %v846 = vld [vmem:[%s806 + $0x44] sm:$0x1]
        %v847 = vsel %vm496, %v747, %v846
        %848 = vst [vmem:[%s806 + $0x44] sm:$0x1] %v847
        %v849 = vld [vmem:[%s806 + $0x48] sm:$0xf]
        %v850 = vsel %vm614, %v754, %v849
        %851 = vst [vmem:[%s806 + $0x48] sm:$0xf] %v850
        %852 = vst.msk [vmem:[%s806 + $0x4c] sm:$0xf] %vm618, %v763
        %v853 = vld [vmem:[%s806 + $0x50] sm:$0x1]
        %v854 = vsel %vm496, %v764, %v853
        %855 = vst [vmem:[%s806 + $0x50] sm:$0x1] %v854
        %v856 = vld [vmem:[%s806 + $0x54] sm:$0xf]
        %v857 = vsel %vm614, %v771, %v856
        %858 = vst [vmem:[%s806 + $0x54] sm:$0xf] %v857
        %859 = vst.msk [vmem:[%s806 + $0x58] sm:$0xf] %vm618, %v780
        %v860 = vld [vmem:[%s806 + $0x5c] sm:$0x1]
        %v861 = vsel %vm496, %v781, %v860
        %862 = vst [vmem:[%s806 + $0x5c] sm:$0x1] %v861
        %v864 = vshrl.u32 %v490, 16
        %v866 = vrot.slane %v864, 7
        %v867 = vshll.u32 %v490, 16
        %v869 = vor.u32 %v866, %v867
        %v870 = vrot.slane %v866, 4
        %v872 = vshrl.u32 %v491, 16
        %v874 = vrot.slane %v872, 7
        %v875 = vshll.u32 %v491, 16
        %v877 = vor.u32 %v874, %v875
        %v878 = vsel %vm572, %v870, %v877
        %v879 = vrot.slane %v874, 4
        %v881 = vshrl.u32 %v492, 16
        %v883 = vrot.slane %v881, 7
        %v884 = vshll.u32 %v492, 16
        %v886 = vor.u32 %v883, %v884
        %v887 = vrot.slane %v883, 4
        %v889 = vshrl.u32 %v493, 16
        %v891 = vrot.slane %v889, 7
        %v892 = vshll.u32 %v493, 16
        %v894 = vor.u32 %v891, %v892
        %v895 = vsel %vm572, %v887, %v894
        %v896 = vrot.slane %v891, 4
        %s903 = scalar_lea.vmem [#allocation2], 120
        %v904 = vld [vmem:[%s903] sm:$0xf]
        %v905 = vsel %vm614, %v869, %v904
        %906 = vst [vmem:[%s903] sm:$0xf] %v905
        %907 = vst.msk [vmem:[%s903 + $0x4] sm:$0xf] %vm618, %v878
        %v908 = vld [vmem:[%s903 + $0x8] sm:$0x1]
        %v909 = vsel %vm496, %v879, %v908
        %910 = vst [vmem:[%s903 + $0x8] sm:$0x1] %v909
        %v911 = vld [vmem:[%s903 + $0xc] sm:$0xf]
        %v912 = vsel %vm614, %v886, %v911
        %913 = vst [vmem:[%s903 + $0xc] sm:$0xf] %v912
        %914 = vst.msk [vmem:[%s903 + $0x10] sm:$0xf] %vm618, %v895
        %v915 = vld [vmem:[%s903 + $0x14] sm:$0x1]
        %v916 = vsel %vm496, %v896, %v915
        %917 = vst [vmem:[%s903 + $0x14] sm:$0x1] %v916
        %v918 = vld [vmem:[#allocation2] sm:$0xf]
        %v919 = vld [vmem:[#allocation2 + $0x4] sm:$0xf]
        %v920 = vld [vmem:[#allocation2 + $0xc] sm:$0xf]
        %v921 = vld [vmem:[#allocation2 + $0x10] sm:$0xf]
        %v922 = vld [vmem:[#allocation2 + $0x18] sm:$0xf]
        %v923 = vld [vmem:[#allocation2 + $0x1c] sm:$0xf]
        %v924 = vld [vmem:[#allocation2 + $0x24] sm:$0xf]
        %v925 = vld [vmem:[#allocation2 + $0x28] sm:$0xf]
        %v926 = vld [vmem:[#allocation2 + $0x30] sm:$0xf]
        %v927 = vld [vmem:[#allocation2 + $0x34] sm:$0xf]
        %v928 = vld [vmem:[#allocation2 + $0x3c] sm:$0xf]
        %v929 = vld [vmem:[#allocation2 + $0x40] sm:$0xf]
        %v930 = vld [vmem:[#allocation2 + $0x48] sm:$0xf]
        %v931 = vld [vmem:[#allocation2 + $0x4c] sm:$0xf]
        %v932 = vld [vmem:[#allocation2 + $0x54] sm:$0xf]
        %v933 = vld [vmem:[#allocation2 + $0x58] sm:$0xf]
        %v934 = vld [vmem:[#allocation2 + $0x60] sm:$0xf]
        %v935 = vld [vmem:[#allocation2 + $0x64] sm:$0xf]
        %v936 = vld [vmem:[#allocation2 + $0x6c] sm:$0xf]
        %v937 = vld [vmem:[#allocation2 + $0x70] sm:$0xf]
        %v938 = vld [vmem:[%s3] sm:$0xf]
        %v939 = vld [vmem:[%s3 + $0x4] sm:$0xf]
        %v940 = vld [vmem:[%s3 + $0x8] sm:$0xf]
        %v941 = vld [vmem:[%s3 + $0xc] sm:$0xf]
        %v942 = vld [vmem:[%s3 + $0x10] sm:$0xf]
        %v943 = vld [vmem:[%s3 + $0x14] sm:$0xf]
        %v944 = vld [vmem:[%s3 + $0x18] sm:$0xf]
        %v945 = vld [vmem:[%s3 + $0x1c] sm:$0xf]
        %v946 = vld [vmem:[#allocation2 + $0x8] sm:$0x1]
        %v947 = vld [vmem:[#allocation2 + $0x14] sm:$0x1]
        %v948 = vld [vmem:[#allocation2 + $0x20] sm:$0x1]
        %v949 = vld [vmem:[#allocation2 + $0x2c] sm:$0x1]
        %v950 = vld [vmem:[#allocation2 + $0x38] sm:$0x1]
        %v951 = vld [vmem:[#allocation2 + $0x44] sm:$0x1]
        %v952 = vld [vmem:[#allocation2 + $0x50] sm:$0x1]
        %v953 = vld [vmem:[#allocation2 + $0x5c] sm:$0x1]
        %v954 = vld [vmem:[#allocation2 + $0x68] sm:$0x1]
        %v955 = vld [vmem:[#allocation2 + $0x74] sm:$0x1]
        %vm956 = vsmask.f32 3328
        %vm957 = vsmask.f32 7440
        %vm958 = vmor %vm956, %vm957
        %v960 = vshrl.u32 %v918, 16
        %v962 = vrot.slane %v960, 4
        %v963 = vshll.u32 %v918, 16
        %v965 = vrot.slane %v963, 5
        %v966 = vor.u32 %v962, %v965
        %v967 = vrot.slane %v966, 4
        %v969 = vshll.u32 %v919, 16
        %v971 = vrot.slane %v969, 5
        %v972 = vsel %vm958, %v967, %v971
        %v973 = vshrl.u32 %v919, 16
        %v975 = vrot.slane %v973, 4
        %v976 = vor.u32 %v975, %v971
        %v977 = vrot.slane %v976, 4
        %v979 = vshll.u32 %v946, 16
        %v981 = vrot.slane %v979, 5
        %v982 = vsel %vm958, %v977, %v981
        %v984 = vshrl.u32 %v920, 16
        %v986 = vrot.slane %v984, 4
        %v987 = vshll.u32 %v920, 16
        %v989 = vrot.slane %v987, 5
        %v990 = vor.u32 %v986, %v989
        %v991 = vrot.slane %v990, 4
        %v993 = vshll.u32 %v921, 16
        %v995 = vrot.slane %v993, 5
        %v996 = vsel %vm958, %v991, %v995
        %v997 = vshrl.u32 %v921, 16
        %v999 = vrot.slane %v997, 4
        %v1000 = vor.u32 %v999, %v995
        %v1001 = vrot.slane %v1000, 4
        %v1003 = vshll.u32 %v947, 16
        %v1005 = vrot.slane %v1003, 5
        %v1006 = vsel %vm958, %v1001, %v1005
        %v1008 = vshrl.u32 %v922, 16
        %v1010 = vrot.slane %v1008, 4
        %v1011 = vshll.u32 %v922, 16
        %v1013 = vrot.slane %v1011, 5
        %v1014 = vor.u32 %v1010, %v1013
        %v1015 = vrot.slane %v1014, 4
        %v1017 = vshll.u32 %v923, 16
        %v1019 = vrot.slane %v1017, 5
        %v1020 = vsel %vm958, %v1015, %v1019
        %v1021 = vshrl.u32 %v923, 16
        %v1023 = vrot.slane %v1021, 4
        %v1024 = vor.u32 %v1023, %v1019
        %v1025 = vrot.slane %v1024, 4
        %v1027 = vshll.u32 %v948, 16
        %v1029 = vrot.slane %v1027, 5
        %v1030 = vsel %vm958, %v1025, %v1029
        %v1032 = vshrl.u32 %v924, 16
        %v1034 = vrot.slane %v1032, 4
        %v1035 = vshll.u32 %v924, 16
        %v1037 = vrot.slane %v1035, 5
        %v1038 = vor.u32 %v1034, %v1037
        %v1039 = vrot.slane %v1038, 4
        %v1041 = vshll.u32 %v925, 16
        %v1043 = vrot.slane %v1041, 5
        %v1044 = vsel %vm958, %v1039, %v1043
        %v1045 = vshrl.u32 %v925, 16
        %v1047 = vrot.slane %v1045, 4
        %v1048 = vor.u32 %v1047, %v1043
        %v1049 = vrot.slane %v1048, 4
        %v1051 = vshll.u32 %v949, 16
        %v1053 = vrot.slane %v1051, 5
        %v1054 = vsel %vm958, %v1049, %v1053
        %v1056 = vshrl.u32 %v926, 16
        %v1058 = vrot.slane %v1056, 4
        %v1059 = vshll.u32 %v926, 16
        %v1061 = vrot.slane %v1059, 5
        %v1062 = vor.u32 %v1058, %v1061
        %v1063 = vrot.slane %v1062, 4
        %v1065 = vshll.u32 %v927, 16
        %v1067 = vrot.slane %v1065, 5
        %v1068 = vsel %vm958, %v1063, %v1067
        %v1069 = vshrl.u32 %v927, 16
        %v1071 = vrot.slane %v1069, 4
        %v1072 = vor.u32 %v1071, %v1067
        %v1073 = vrot.slane %v1072, 4
        %v1075 = vshll.u32 %v950, 16
        %v1077 = vrot.slane %v1075, 5
        %v1078 = vsel %vm958, %v1073, %v1077
        %v1080 = vshrl.u32 %v928, 16
        %v1082 = vrot.slane %v1080, 4
        %v1083 = vshll.u32 %v928, 16
        %v1085 = vrot.slane %v1083, 5
        %v1086 = vor.u32 %v1082, %v1085
        %v1087 = vrot.slane %v1086, 4
        %v1089 = vshll.u32 %v929, 16
        %v1091 = vrot.slane %v1089, 5
        %v1092 = vsel %vm958, %v1087, %v1091
        %v1093 = vshrl.u32 %v929, 16
        %v1095 = vrot.slane %v1093, 4
        %v1096 = vor.u32 %v1095, %v1091
        %v1097 = vrot.slane %v1096, 4
        %v1099 = vshll.u32 %v951, 16
        %v1101 = vrot.slane %v1099, 5
        %v1102 = vsel %vm958, %v1097, %v1101
        %v1104 = vshrl.u32 %v930, 16
        %v1106 = vrot.slane %v1104, 4
        %v1107 = vshll.u32 %v930, 16
        %v1109 = vrot.slane %v1107, 5
        %v1110 = vor.u32 %v1106, %v1109
        %v1111 = vrot.slane %v1110, 4
        %v1113 = vshll.u32 %v931, 16
        %v1115 = vrot.slane %v1113, 5
        %v1116 = vsel %vm958, %v1111, %v1115
        %v1117 = vshrl.u32 %v931, 16
        %v1119 = vrot.slane %v1117, 4
        %v1120 = vor.u32 %v1119, %v1115
        %v1121 = vrot.slane %v1120, 4
        %v1123 = vshll.u32 %v952, 16
        %v1125 = vrot.slane %v1123, 5
        %v1126 = vsel %vm958, %v1121, %v1125
        %v1128 = vshrl.u32 %v932, 16
        %v1130 = vrot.slane %v1128, 4
        %v1131 = vshll.u32 %v932, 16
        %v1133 = vrot.slane %v1131, 5
        %v1134 = vor.u32 %v1130, %v1133
        %v1135 = vrot.slane %v1134, 4
        %v1137 = vshll.u32 %v933, 16
        %v1139 = vrot.slane %v1137, 5
        %v1140 = vsel %vm958, %v1135, %v1139
        %v1141 = vshrl.u32 %v933, 16
        %v1143 = vrot.slane %v1141, 4
        %v1144 = vor.u32 %v1143, %v1139
        %v1145 = vrot.slane %v1144, 4
        %v1147 = vshll.u32 %v953, 16
        %v1149 = vrot.slane %v1147, 5
        %v1150 = vsel %vm958, %v1145, %v1149
        %v1152 = vshrl.u32 %v934, 16
        %v1154 = vrot.slane %v1152, 4
        %v1155 = vshll.u32 %v934, 16
        %v1157 = vrot.slane %v1155, 5
        %v1158 = vor.u32 %v1154, %v1157
        %v1159 = vrot.slane %v1158, 4
        %v1161 = vshll.u32 %v935, 16
        %v1163 = vrot.slane %v1161, 5
        %v1164 = vsel %vm958, %v1159, %v1163
        %v1165 = vshrl.u32 %v935, 16
        %v1167 = vrot.slane %v1165, 4
        %v1168 = vor.u32 %v1167, %v1163
        %v1169 = vrot.slane %v1168, 4
        %v1171 = vshll.u32 %v954, 16
        %v1173 = vrot.slane %v1171, 5
        %v1174 = vsel %vm958, %v1169, %v1173
        %v1176 = vshrl.u32 %v936, 16
        %v1178 = vrot.slane %v1176, 4
        %v1179 = vshll.u32 %v936, 16
        %v1181 = vrot.slane %v1179, 5
        %v1182 = vor.u32 %v1178, %v1181
        %v1183 = vrot.slane %v1182, 4
        %v1185 = vshll.u32 %v937, 16
        %v1187 = vrot.slane %v1185, 5
        %v1188 = vsel %vm958, %v1183, %v1187
        %v1189 = vshrl.u32 %v937, 16
        %v1191 = vrot.slane %v1189, 4
        %v1192 = vor.u32 %v1191, %v1187
        %v1193 = vrot.slane %v1192, 4
        %v1195 = vshll.u32 %v955, 16
        %v1197 = vrot.slane %v1195, 5
        %v1198 = vsel %vm958, %v1193, %v1197
        %s1199 = scalar_lea.vmem %s3, 32
        %v1200 = vld [vmem:[%s1199] sm:$0xf]
        %v1201 = vld [vmem:[%s1199 + $0x4] sm:$0xf]
        %v1202 = vld [vmem:[%s1199 + $0x8] sm:$0xf]
        %v1203 = vld [vmem:[%s1199 + $0xc] sm:$0xf]
        %v1204 = vld [vmem:[%s1199 + $0x10] sm:$0xf]
        %v1205 = vld [vmem:[%s1199 + $0x14] sm:$0xf]
        %v1206 = vld [vmem:[%s1199 + $0x18] sm:$0xf]
        %v1207 = vld [vmem:[%s1199 + $0x1c] sm:$0xf]
        %v1208 = vunpack.c.l.b16 %v972
        %v1209 = vunpack.c.l.b16 %v982
        %v1210 = vunpack.c.l.b16 %v996
        %v1211 = vunpack.c.l.b16 %v1006
        %v1212 = vunpack.c.l.b16 %v1020
        %v1213 = vunpack.c.l.b16 %v1030
        %v1214 = vunpack.c.l.b16 %v1044
        %v1215 = vunpack.c.l.b16 %v1054
        %v1216 = vunpack.c.l.b16 %v1068
        %v1217 = vunpack.c.l.b16 %v1078
        %v1218 = vunpack.c.l.b16 %v1092
        %v1219 = vunpack.c.l.b16 %v1102
        %v1220 = vunpack.c.l.b16 %v1116
        %v1221 = vunpack.c.l.b16 %v1126
        %v1222 = vunpack.c.l.b16 %v1140
        %v1223 = vunpack.c.l.b16 %v1150
        %v1224 = vunpack.c.l.b16 %v1164
        %v1225 = vunpack.c.l.b16 %v1174
        %v1226 = vunpack.c.l.b16 %v1188
        %v1227 = vunpack.c.l.b16 %v1198
        %v1228 = vpack.c.b16 %v1209, %v1208
        %v1229 = vpack.c.b16 %v1211, %v1210
        %v1230 = vpack.c.b16 %v1213, %v1212
        %v1231 = vpack.c.b16 %v1215, %v1214
        %v1232 = vpack.c.b16 %v1217, %v1216
        %v1233 = vpack.c.b16 %v1219, %v1218
        %v1234 = vpack.c.b16 %v1221, %v1220
        %v1235 = vpack.c.b16 %v1223, %v1222
        %v1236 = vpack.c.b16 %v1225, %v1224
        %v1237 = vpack.c.b16 %v1227, %v1226
        %v1246 = vunpack.c.l.b16 %v1200
        %v1247 = vunpack.c.l.b16 %v1201
        %v1248 = vunpack.c.l.b16 %v1202
        %v1249 = vunpack.c.l.b16 %v1203
        %v1250 = vunpack.c.l.b16 %v1204
        %v1251 = vunpack.c.l.b16 %v1205
        %v1252 = vunpack.c.l.b16 %v1206
        %v1253 = vunpack.c.l.b16 %v1207
        %v1254 = vpack.c.b16 %v1247, %v1246
        %v1255 = vpack.c.b16 %v1249, %v1248
        %v1256 = vpack.c.b16 %v1251, %v1250
        %v1257 = vpack.c.b16 %v1253, %v1252
        %vm1262 = vcmask 523264
        %v1264 = vsel %vm1262, %v1228, 0
        %v1267 = vsel %vm1262, %v1229, 0
        %v1270 = vsel %vm1262, %v1230, 0
        %v1273 = vsel %vm1262, %v1231, 0
        %v1276 = vsel %vm1262, %v1232, 0
        %v1279 = vsel %vm1262, %v1233, 0
        %v1282 = vsel %vm1262, %v1234, 0
        %v1285 = vsel %vm1262, %v1235, 0
        %v1288 = vsel %vm1262, %v1236, 0
        %v1291 = vsel %vm1262, %v1237, 0
        %1293 = vmatpush.bf16.msra.mxu0 0
        %1294 = vmatpush.bf16.msra.mxu0 0
        %1295 = vmatpush.bf16.msra.mxu0 0
        %1296 = vmatpush.bf16.msra.mxu0 0
        %1297 = vmatpush.bf16.msra.mxu0 %v1257
        %1298 = vmatpush.bf16.msra.mxu0 %v1256
        %1299 = vmatpush.bf16.msra.mxu0 %v1255
        %1300 = vmatpush.bf16.msra.mxu0 %v1254
        %1301 = vmatmul.bf16.gmra.mxu0 %v1264
        %v1302 = vpop.f32.mrf.mxu0
        %v1303 = vadd.f32 0.0, %v1302
        %v1304 = vpop.f32.mrf.mxu0
        %v1305 = vadd.f32 0.0, %v1304
        %1306 = vmatmul.bf16.gmra.mxu0 %v1267
        %v1307 = vpop.f32.mrf.mxu0
        %v1308 = vadd.f32 0.0, %v1307
        %v1309 = vpop.f32.mrf.mxu0
        %v1310 = vadd.f32 0.0, %v1309
        %1311 = vmatmul.bf16.gmra.mxu0 %v1270
        %v1312 = vpop.f32.mrf.mxu0
        %v1313 = vadd.f32 0.0, %v1312
        %v1314 = vpop.f32.mrf.mxu0
        %v1315 = vadd.f32 0.0, %v1314
        %1316 = vmatmul.bf16.gmra.mxu0 %v1273
        %v1317 = vpop.f32.mrf.mxu0
        %v1318 = vadd.f32 0.0, %v1317
        %v1319 = vpop.f32.mrf.mxu0
        %v1320 = vadd.f32 0.0, %v1319
        %1321 = vmatmul.bf16.gmra.mxu0 %v1276
        %v1322 = vpop.f32.mrf.mxu0
        %v1323 = vadd.f32 0.0, %v1322
        %v1324 = vpop.f32.mrf.mxu0
        %v1325 = vadd.f32 0.0, %v1324
        %1326 = vmatmul.bf16.gmra.mxu0 %v1279
        %v1327 = vpop.f32.mrf.mxu0
        %v1328 = vadd.f32 0.0, %v1327
        %v1329 = vpop.f32.mrf.mxu0
        %v1330 = vadd.f32 0.0, %v1329
        %1331 = vmatmul.bf16.gmra.mxu0 %v1282
        %v1332 = vpop.f32.mrf.mxu0
        %v1333 = vadd.f32 0.0, %v1332
        %v1334 = vpop.f32.mrf.mxu0
        %v1335 = vadd.f32 0.0, %v1334
        %1336 = vmatmul.bf16.gmra.mxu0 %v1285
        %v1337 = vpop.f32.mrf.mxu0
        %v1338 = vadd.f32 0.0, %v1337
        %v1339 = vpop.f32.mrf.mxu0
        %v1340 = vadd.f32 0.0, %v1339
        %1341 = vmatmul.bf16.gmra.mxu0 %v1288
        %v1342 = vpop.f32.mrf.mxu0
        %v1343 = vadd.f32 0.0, %v1342
        %v1344 = vpop.f32.mrf.mxu0
        %v1345 = vadd.f32 0.0, %v1344
        %1346 = vmatmul.bf16.gmra.mxu0 %v1291
        %v1347 = vpop.f32.mrf.mxu0
        %v1348 = vadd.f32 0.0, %v1347
        %v1349 = vpop.f32.mrf.mxu0
        %v1350 = vadd.f32 0.0, %v1349
        %1351 = vdwg.mxu0
        %v1372 = vunpack.c.l.b16 %v918
        %v1373 = vunpack.c.l.b16 %v919
        %v1374 = vunpack.c.l.b16 %v920
        %v1375 = vunpack.c.l.b16 %v921
        %v1376 = vunpack.c.l.b16 %v922
        %v1377 = vunpack.c.l.b16 %v923
        %v1378 = vunpack.c.l.b16 %v924
        %v1379 = vunpack.c.l.b16 %v925
        %v1380 = vunpack.c.l.b16 %v926
        %v1381 = vunpack.c.l.b16 %v927
        %v1382 = vunpack.c.l.b16 %v928
        %v1383 = vunpack.c.l.b16 %v929
        %v1384 = vunpack.c.l.b16 %v930
        %v1385 = vunpack.c.l.b16 %v931
        %v1386 = vunpack.c.l.b16 %v932
        %v1387 = vunpack.c.l.b16 %v933
        %v1388 = vunpack.c.l.b16 %v934
        %v1389 = vunpack.c.l.b16 %v935
        %v1390 = vunpack.c.l.b16 %v936
        %v1391 = vunpack.c.l.b16 %v937
        %v1392 = vpack.c.b16 %v1373, %v1372
        %v1393 = vpack.c.b16 %v1375, %v1374
        %v1394 = vpack.c.b16 %v1377, %v1376
        %v1395 = vpack.c.b16 %v1379, %v1378
        %v1396 = vpack.c.b16 %v1381, %v1380
        %v1397 = vpack.c.b16 %v1383, %v1382
        %v1398 = vpack.c.b16 %v1385, %v1384
        %v1399 = vpack.c.b16 %v1387, %v1386
        %v1400 = vpack.c.b16 %v1389, %v1388
        %v1401 = vpack.c.b16 %v1391, %v1390
        %v1410 = vunpack.c.l.b16 %v938
        %v1411 = vunpack.c.l.b16 %v939
        %v1412 = vunpack.c.l.b16 %v940
        %v1413 = vunpack.c.l.b16 %v941
        %v1414 = vunpack.c.l.b16 %v942
        %v1415 = vunpack.c.l.b16 %v943
        %v1416 = vunpack.c.l.b16 %v944
        %v1417 = vunpack.c.l.b16 %v945
        %v1418 = vpack.c.b16 %v1411, %v1410
        %v1419 = vpack.c.b16 %v1413, %v1412
        %v1420 = vpack.c.b16 %v1415, %v1414
        %v1421 = vpack.c.b16 %v1417, %v1416
        %v1427 = vsel %vm1262, %v1392, 0
        %v1430 = vsel %vm1262, %v1393, 0
        %v1433 = vsel %vm1262, %v1394, 0
        %v1436 = vsel %vm1262, %v1395, 0
        %v1439 = vsel %vm1262, %v1396, 0
        %v1442 = vsel %vm1262, %v1397, 0
        %v1445 = vsel %vm1262, %v1398, 0
        %v1448 = vsel %vm1262, %v1399, 0
        %v1451 = vsel %vm1262, %v1400, 0
        %v1454 = vsel %vm1262, %v1401, 0
        %1456 = vmatpush.bf16.msra.mxu0 0
        %1457 = vmatpush.bf16.msra.mxu0 0
        %1458 = vmatpush.bf16.msra.mxu0 0
        %1459 = vmatpush.bf16.msra.mxu0 0
        %1460 = vmatpush.bf16.msra.mxu0 %v1421
        %1461 = vmatpush.bf16.msra.mxu0 %v1420
        %1462 = vmatpush.bf16.msra.mxu0 %v1419
        %1463 = vmatpush.bf16.msra.mxu0 %v1418
        %1464 = vmatmul.bf16.gmra.mxu0 %v1427
        %v1465 = vpop.f32.mrf.mxu0
        %v1466 = vadd.f32 %v1303, %v1465
        %v1467 = vpop.f32.mrf.mxu0
        %v1468 = vadd.f32 %v1305, %v1467
        %1469 = vmatmul.bf16.gmra.mxu0 %v1430
        %v1470 = vpop.f32.mrf.mxu0
        %v1471 = vadd.f32 %v1308, %v1470
        %v1472 = vpop.f32.mrf.mxu0
        %v1473 = vadd.f32 %v1310, %v1472
        %1474 = vmatmul.bf16.gmra.mxu0 %v1433
        %v1475 = vpop.f32.mrf.mxu0
        %v1476 = vadd.f32 %v1313, %v1475
        %v1477 = vpop.f32.mrf.mxu0
        %v1478 = vadd.f32 %v1315, %v1477
        %1479 = vmatmul.bf16.gmra.mxu0 %v1436
        %v1480 = vpop.f32.mrf.mxu0
        %v1481 = vadd.f32 %v1318, %v1480
        %v1482 = vpop.f32.mrf.mxu0
        %v1483 = vadd.f32 %v1320, %v1482
        %1484 = vmatmul.bf16.gmra.mxu0 %v1439
        %v1485 = vpop.f32.mrf.mxu0
        %v1486 = vadd.f32 %v1323, %v1485
        %v1487 = vpop.f32.mrf.mxu0
        %v1488 = vadd.f32 %v1325, %v1487
        %1489 = vmatmul.bf16.gmra.mxu0 %v1442
        %v1490 = vpop.f32.mrf.mxu0
        %v1491 = vadd.f32 %v1328, %v1490
        %v1492 = vpop.f32.mrf.mxu0
        %v1493 = vadd.f32 %v1330, %v1492
        %1494 = vmatmul.bf16.gmra.mxu0 %v1445
        %v1495 = vpop.f32.mrf.mxu0
        %v1496 = vadd.f32 %v1333, %v1495
        %v1497 = vpop.f32.mrf.mxu0
        %v1498 = vadd.f32 %v1335, %v1497
        %1499 = vmatmul.bf16.gmra.mxu0 %v1448
        %v1500 = vpop.f32.mrf.mxu0
        %v1501 = vadd.f32 %v1338, %v1500
        %v1502 = vpop.f32.mrf.mxu0
        %v1503 = vadd.f32 %v1340, %v1502
        %1504 = vmatmul.bf16.gmra.mxu0 %v1451
        %v1505 = vpop.f32.mrf.mxu0
        %v1506 = vadd.f32 %v1343, %v1505
        %v1507 = vpop.f32.mrf.mxu0
        %v1508 = vadd.f32 %v1345, %v1507
        %1509 = vmatmul.bf16.gmra.mxu0 %v1454
        %v1510 = vpop.f32.mrf.mxu0
        %v1511 = vadd.f32 %v1348, %v1510
        %v1512 = vpop.f32.mrf.mxu0
        %v1513 = vadd.f32 %v1350, %v1512
        %1514 = vdwg.mxu0
        %v1515 = vld [vmem:[#allocation2] sm:$0xe]
        %v1516 = vld [vmem:[#allocation2 + $0xc] sm:$0xe]
        %v1517 = vld [vmem:[#allocation2 + $0x18] sm:$0xe]
        %v1518 = vld [vmem:[#allocation2 + $0x24] sm:$0xe]
        %v1519 = vld [vmem:[#allocation2 + $0x30] sm:$0xe]
        %v1520 = vld [vmem:[#allocation2 + $0x3c] sm:$0xe]
        %v1521 = vld [vmem:[#allocation2 + $0x48] sm:$0xe]
        %v1522 = vld [vmem:[#allocation2 + $0x54] sm:$0xe]
        %v1523 = vld [vmem:[#allocation2 + $0x60] sm:$0xe]
        %v1524 = vld [vmem:[#allocation2 + $0x6c] sm:$0xe]
        %vm1545 = vcmask 1042432
        %vm1546 = vcmask 1046532
        %vm1547 = vmor %vm1545, %vm1546
        %v1548 = vrot.slane %v1515, 5
        %v1549 = vrot.slane %v1548, 4
        %v1550 = vrot.slane %v919, 5
        %v1551 = vsel %vm1547, %v1549, %v1550
        %v1552 = vrot.slane %v1550, 4
        %v1553 = vrot.slane %v946, 5
        %v1554 = vsel %vm1547, %v1552, %v1553
        %v1555 = vrot.slane %v1516, 5
        %v1556 = vrot.slane %v1555, 4
        %v1557 = vrot.slane %v921, 5
        %v1558 = vsel %vm1547, %v1556, %v1557
        %v1559 = vrot.slane %v1557, 4
        %v1560 = vrot.slane %v947, 5
        %v1561 = vsel %vm1547, %v1559, %v1560
        %v1562 = vrot.slane %v1517, 5
        %v1563 = vrot.slane %v1562, 4
        %v1564 = vrot.slane %v923, 5
        %v1565 = vsel %vm1547, %v1563, %v1564
        %v1566 = vrot.slane %v1564, 4
        %v1567 = vrot.slane %v948, 5
        %v1568 = vsel %vm1547, %v1566, %v1567
        %v1569 = vrot.slane %v1518, 5
        %v1570 = vrot.slane %v1569, 4
        %v1571 = vrot.slane %v925, 5
        %v1572 = vsel %vm1547, %v1570, %v1571
        %v1573 = vrot.slane %v1571, 4
        %v1574 = vrot.slane %v949, 5
        %v1575 = vsel %vm1547, %v1573, %v1574
        %v1576 = vrot.slane %v1519, 5
        %v1577 = vrot.slane %v1576, 4
        %v1578 = vrot.slane %v927, 5
        %v1579 = vsel %vm1547, %v1577, %v1578
        %v1580 = vrot.slane %v1578, 4
        %v1581 = vrot.slane %v950, 5
        %v1582 = vsel %vm1547, %v1580, %v1581
        %v1583 = vrot.slane %v1520, 5
        %v1584 = vrot.slane %v1583, 4
        %v1585 = vrot.slane %v929, 5
        %v1586 = vsel %vm1547, %v1584, %v1585
        %v1587 = vrot.slane %v1585, 4
        %v1588 = vrot.slane %v951, 5
        %v1589 = vsel %vm1547, %v1587, %v1588
        %v1590 = vrot.slane %v1521, 5
        %v1591 = vrot.slane %v1590, 4
        %v1592 = vrot.slane %v931, 5
        %v1593 = vsel %vm1547, %v1591, %v1592
        %v1594 = vrot.slane %v1592, 4
        %v1595 = vrot.slane %v952, 5
        %v1596 = vsel %vm1547, %v1594, %v1595
        %v1597 = vrot.slane %v1522, 5
        %v1598 = vrot.slane %v1597, 4
        %v1599 = vrot.slane %v933, 5
        %v1600 = vsel %vm1547, %v1598, %v1599
        %v1601 = vrot.slane %v1599, 4
        %v1602 = vrot.slane %v953, 5
        %v1603 = vsel %vm1547, %v1601, %v1602
        %v1604 = vrot.slane %v1523, 5
        %v1605 = vrot.slane %v1604, 4
        %v1606 = vrot.slane %v935, 5
        %v1607 = vsel %vm1547, %v1605, %v1606
        %v1608 = vrot.slane %v1606, 4
        %v1609 = vrot.slane %v954, 5
        %v1610 = vsel %vm1547, %v1608, %v1609
        %v1611 = vrot.slane %v1524, 5
        %v1612 = vrot.slane %v1611, 4
        %v1613 = vrot.slane %v937, 5
        %v1614 = vsel %vm1547, %v1612, %v1613
        %v1615 = vrot.slane %v1613, 4
        %v1616 = vrot.slane %v955, 5
        %v1617 = vsel %vm1547, %v1615, %v1616
        %s1618 = scalar_lea.vmem %s3, 64
        %v1619 = vld [vmem:[%s1618] sm:$0xf]
        %v1620 = vld [vmem:[%s1618 + $0x4] sm:$0xf]
        %v1621 = vld [vmem:[%s1618 + $0x8] sm:$0xf]
        %v1622 = vld [vmem:[%s1618 + $0xc] sm:$0xf]
        %v1623 = vld [vmem:[%s1618 + $0x10] sm:$0xf]
        %v1624 = vld [vmem:[%s1618 + $0x14] sm:$0xf]
        %v1625 = vld [vmem:[%s1618 + $0x18] sm:$0xf]
        %v1626 = vld [vmem:[%s1618 + $0x1c] sm:$0xf]
        %v1627 = vunpack.c.l.b16 %v1551
        %v1628 = vunpack.c.l.b16 %v1554
        %v1629 = vunpack.c.l.b16 %v1558
        %v1630 = vunpack.c.l.b16 %v1561
        %v1631 = vunpack.c.l.b16 %v1565
        %v1632 = vunpack.c.l.b16 %v1568
        %v1633 = vunpack.c.l.b16 %v1572
        %v1634 = vunpack.c.l.b16 %v1575
        %v1635 = vunpack.c.l.b16 %v1579
        %v1636 = vunpack.c.l.b16 %v1582
        %v1637 = vunpack.c.l.b16 %v1586
        %v1638 = vunpack.c.l.b16 %v1589
        %v1639 = vunpack.c.l.b16 %v1593
        %v1640 = vunpack.c.l.b16 %v1596
        %v1641 = vunpack.c.l.b16 %v1600
        %v1642 = vunpack.c.l.b16 %v1603
        %v1643 = vunpack.c.l.b16 %v1607
        %v1644 = vunpack.c.l.b16 %v1610
        %v1645 = vunpack.c.l.b16 %v1614
        %v1646 = vunpack.c.l.b16 %v1617
        %v1647 = vpack.c.b16 %v1628, %v1627
        %v1648 = vpack.c.b16 %v1630, %v1629
        %v1649 = vpack.c.b16 %v1632, %v1631
        %v1650 = vpack.c.b16 %v1634, %v1633
        %v1651 = vpack.c.b16 %v1636, %v1635
        %v1652 = vpack.c.b16 %v1638, %v1637
        %v1653 = vpack.c.b16 %v1640, %v1639
        %v1654 = vpack.c.b16 %v1642, %v1641
        %v1655 = vpack.c.b16 %v1644, %v1643
        %v1656 = vpack.c.b16 %v1646, %v1645
        %v1665 = vunpack.c.l.b16 %v1619
        %v1666 = vunpack.c.l.b16 %v1620
        %v1667 = vunpack.c.l.b16 %v1621
        %v1668 = vunpack.c.l.b16 %v1622
        %v1669 = vunpack.c.l.b16 %v1623
        %v1670 = vunpack.c.l.b16 %v1624
        %v1671 = vunpack.c.l.b16 %v1625
        %v1672 = vunpack.c.l.b16 %v1626
        %v1673 = vpack.c.b16 %v1666, %v1665
        %v1674 = vpack.c.b16 %v1668, %v1667
        %v1675 = vpack.c.b16 %v1670, %v1669
        %v1676 = vpack.c.b16 %v1672, %v1671
        %v1682 = vsel %vm1262, %v1647, 0
        %v1685 = vsel %vm1262, %v1648, 0
        %v1688 = vsel %vm1262, %v1649, 0
        %v1691 = vsel %vm1262, %v1650, 0
        %v1694 = vsel %vm1262, %v1651, 0
        %v1697 = vsel %vm1262, %v1652, 0
        %v1700 = vsel %vm1262, %v1653, 0
        %v1703 = vsel %vm1262, %v1654, 0
        %v1706 = vsel %vm1262, %v1655, 0
        %v1709 = vsel %vm1262, %v1656, 0
        %1711 = vmatpush.bf16.msra.mxu0 0
        %1712 = vmatpush.bf16.msra.mxu0 0
        %1713 = vmatpush.bf16.msra.mxu0 0
        %1714 = vmatpush.bf16.msra.mxu0 0
        %1715 = vmatpush.bf16.msra.mxu0 %v1676
        %1716 = vmatpush.bf16.msra.mxu0 %v1675
        %1717 = vmatpush.bf16.msra.mxu0 %v1674
        %1718 = vmatpush.bf16.msra.mxu0 %v1673
        %1719 = vmatmul.bf16.gmra.mxu0 %v1682
        %v1720 = vpop.f32.mrf.mxu0
        %v1721 = vadd.f32 0.0, %v1720
        %v1722 = vpop.f32.mrf.mxu0
        %v1723 = vadd.f32 0.0, %v1722
        %1724 = vmatmul.bf16.gmra.mxu0 %v1685
        %v1725 = vpop.f32.mrf.mxu0
        %v1726 = vadd.f32 0.0, %v1725
        %v1727 = vpop.f32.mrf.mxu0
        %v1728 = vadd.f32 0.0, %v1727
        %1729 = vmatmul.bf16.gmra.mxu0 %v1688
        %v1730 = vpop.f32.mrf.mxu0
        %v1731 = vadd.f32 0.0, %v1730
        %v1732 = vpop.f32.mrf.mxu0
        %v1733 = vadd.f32 0.0, %v1732
        %1734 = vmatmul.bf16.gmra.mxu0 %v1691
        %v1735 = vpop.f32.mrf.mxu0
        %v1736 = vadd.f32 0.0, %v1735
        %v1737 = vpop.f32.mrf.mxu0
        %v1738 = vadd.f32 0.0, %v1737
        %1739 = vmatmul.bf16.gmra.mxu0 %v1694
        %v1740 = vpop.f32.mrf.mxu0
        %v1741 = vadd.f32 0.0, %v1740
        %v1742 = vpop.f32.mrf.mxu0
        %v1743 = vadd.f32 0.0, %v1742
        %1744 = vmatmul.bf16.gmra.mxu0 %v1697
        %v1745 = vpop.f32.mrf.mxu0
        %v1746 = vadd.f32 0.0, %v1745
        %v1747 = vpop.f32.mrf.mxu0
        %v1748 = vadd.f32 0.0, %v1747
        %1749 = vmatmul.bf16.gmra.mxu0 %v1700
        %v1750 = vpop.f32.mrf.mxu0
        %v1751 = vadd.f32 0.0, %v1750
        %v1752 = vpop.f32.mrf.mxu0
        %v1753 = vadd.f32 0.0, %v1752
        %1754 = vmatmul.bf16.gmra.mxu0 %v1703
        %v1755 = vpop.f32.mrf.mxu0
        %v1756 = vadd.f32 0.0, %v1755
        %v1757 = vpop.f32.mrf.mxu0
        %v1758 = vadd.f32 0.0, %v1757
        %1759 = vmatmul.bf16.gmra.mxu0 %v1706
        %v1760 = vpop.f32.mrf.mxu0
        %v1761 = vadd.f32 0.0, %v1760
        %v1762 = vpop.f32.mrf.mxu0
        %v1763 = vadd.f32 0.0, %v1762
        %1764 = vmatmul.bf16.gmra.mxu0 %v1709
        %v1765 = vpop.f32.mrf.mxu0
        %v1766 = vadd.f32 0.0, %v1765
        %v1767 = vpop.f32.mrf.mxu0
        %v1768 = vadd.f32 0.0, %v1767
        %1769 = vdwg.mxu0
        %v1770 = vadd.f32 %v1466, %v1721
        %v1771 = vadd.f32 %v1468, %v1723
        %v1772 = vadd.f32 %v1471, %v1726
        %v1773 = vadd.f32 %v1473, %v1728
        %v1774 = vadd.f32 %v1476, %v1731
        %v1775 = vadd.f32 %v1478, %v1733
        %v1776 = vadd.f32 %v1481, %v1736
        %v1777 = vadd.f32 %v1483, %v1738
        %v1778 = vadd.f32 %v1486, %v1741
        %v1779 = vadd.f32 %v1488, %v1743
        %v1780 = vadd.f32 %v1491, %v1746
        %v1781 = vadd.f32 %v1493, %v1748
        %v1782 = vadd.f32 %v1496, %v1751
        %v1783 = vadd.f32 %v1498, %v1753
        %v1784 = vadd.f32 %v1501, %v1756
        %v1785 = vadd.f32 %v1503, %v1758
        %v1786 = vadd.f32 %v1506, %v1761
        %v1787 = vadd.f32 %v1508, %v1763
        %v1788 = vadd.f32 %v1511, %v1766
        %v1789 = vadd.f32 %v1513, %v1768
        %s1790 = scalar_lea.vmem [#allocation2], 12
        %v1791 = vld [vmem:[%s1790] sm:$0xf]
        %v1792 = vld [vmem:[%s1790 + $0x4] sm:$0xf]
        %v1793 = vld [vmem:[%s1790 + $0xc] sm:$0xf]
        %v1794 = vld [vmem:[%s1790 + $0x10] sm:$0xf]
        %v1795 = vld [vmem:[%s1790 + $0x18] sm:$0xf]
        %v1796 = vld [vmem:[%s1790 + $0x1c] sm:$0xf]
        %v1797 = vld [vmem:[%s1790 + $0x24] sm:$0xf]
        %v1798 = vld [vmem:[%s1790 + $0x28] sm:$0xf]
        %v1799 = vld [vmem:[%s1790 + $0x30] sm:$0xf]
        %v1800 = vld [vmem:[%s1790 + $0x34] sm:$0xf]
        %v1801 = vld [vmem:[%s1790 + $0x3c] sm:$0xf]
        %v1802 = vld [vmem:[%s1790 + $0x40] sm:$0xf]
        %v1803 = vld [vmem:[%s1790 + $0x48] sm:$0xf]
        %v1804 = vld [vmem:[%s1790 + $0x4c] sm:$0xf]
        %v1805 = vld [vmem:[%s1790 + $0x54] sm:$0xf]
        %v1806 = vld [vmem:[%s1790 + $0x58] sm:$0xf]
        %v1807 = vld [vmem:[%s1790 + $0x60] sm:$0xf]
        %v1808 = vld [vmem:[%s1790 + $0x64] sm:$0xf]
        %v1809 = vld [vmem:[%s1790 + $0x6c] sm:$0xf]
        %v1810 = vld [vmem:[%s1790 + $0x70] sm:$0xf]
        %s1811 = scalar_lea.vmem %s3, 96
        %v1812 = vld [vmem:[%s1811] sm:$0xf]
        %v1813 = vld [vmem:[%s1811 + $0x4] sm:$0xf]
        %v1814 = vld [vmem:[%s1811 + $0x8] sm:$0xf]
        %v1815 = vld [vmem:[%s1811 + $0xc] sm:$0xf]
        %v1816 = vld [vmem:[%s1811 + $0x10] sm:$0xf]
        %v1817 = vld [vmem:[%s1811 + $0x14] sm:$0xf]
        %v1818 = vld [vmem:[%s1811 + $0x18] sm:$0xf]
        %v1819 = vld [vmem:[%s1811 + $0x1c] sm:$0xf]
        %v1840 = vunpack.c.l.b16 %v1791
        %v1841 = vunpack.c.l.b16 %v1792
        %v1842 = vunpack.c.l.b16 %v1793
        %v1843 = vunpack.c.l.b16 %v1794
        %v1844 = vunpack.c.l.b16 %v1795
        %v1845 = vunpack.c.l.b16 %v1796
        %v1846 = vunpack.c.l.b16 %v1797
        %v1847 = vunpack.c.l.b16 %v1798
        %v1848 = vunpack.c.l.b16 %v1799
        %v1849 = vunpack.c.l.b16 %v1800
        %v1850 = vunpack.c.l.b16 %v1801
        %v1851 = vunpack.c.l.b16 %v1802
        %v1852 = vunpack.c.l.b16 %v1803
        %v1853 = vunpack.c.l.b16 %v1804
        %v1854 = vunpack.c.l.b16 %v1805
        %v1855 = vunpack.c.l.b16 %v1806
        %v1856 = vunpack.c.l.b16 %v1807
        %v1857 = vunpack.c.l.b16 %v1808
        %v1858 = vunpack.c.l.b16 %v1809
        %v1859 = vunpack.c.l.b16 %v1810
        %v1860 = vpack.c.b16 %v1841, %v1840
        %v1861 = vpack.c.b16 %v1843, %v1842
        %v1862 = vpack.c.b16 %v1845, %v1844
        %v1863 = vpack.c.b16 %v1847, %v1846
        %v1864 = vpack.c.b16 %v1849, %v1848
        %v1865 = vpack.c.b16 %v1851, %v1850
        %v1866 = vpack.c.b16 %v1853, %v1852
        %v1867 = vpack.c.b16 %v1855, %v1854
        %v1868 = vpack.c.b16 %v1857, %v1856
        %v1869 = vpack.c.b16 %v1859, %v1858
        %v1878 = vunpack.c.l.b16 %v1812
        %v1879 = vunpack.c.l.b16 %v1813
        %v1880 = vunpack.c.l.b16 %v1814
        %v1881 = vunpack.c.l.b16 %v1815
        %v1882 = vunpack.c.l.b16 %v1816
        %v1883 = vunpack.c.l.b16 %v1817
        %v1884 = vunpack.c.l.b16 %v1818
        %v1885 = vunpack.c.l.b16 %v1819
        %v1886 = vpack.c.b16 %v1879, %v1878
        %v1887 = vpack.c.b16 %v1881, %v1880
        %v1888 = vpack.c.b16 %v1883, %v1882
        %v1889 = vpack.c.b16 %v1885, %v1884
        %v1895 = vsel %vm1262, %v1860, 0
        %v1898 = vsel %vm1262, %v1861, 0
        %v1901 = vsel %vm1262, %v1862, 0
        %v1904 = vsel %vm1262, %v1863, 0
        %v1907 = vsel %vm1262, %v1864, 0
        %v1910 = vsel %vm1262, %v1865, 0
        %v1913 = vsel %vm1262, %v1866, 0
        %v1916 = vsel %vm1262, %v1867, 0
        %v1919 = vsel %vm1262, %v1868, 0
        %v1922 = vsel %vm1262, %v1869, 0
        %1924 = vmatpush.bf16.msra.mxu0 0
        %1925 = vmatpush.bf16.msra.mxu0 0
        %1926 = vmatpush.bf16.msra.mxu0 0
        %1927 = vmatpush.bf16.msra.mxu0 0
        %1928 = vmatpush.bf16.msra.mxu0 %v1889
        %1929 = vmatpush.bf16.msra.mxu0 %v1888
        %1930 = vmatpush.bf16.msra.mxu0 %v1887
        %1931 = vmatpush.bf16.msra.mxu0 %v1886
        %1932 = vmatmul.bf16.gmra.mxu0 %v1895
        %v1933 = vpop.f32.mrf.mxu0
        %v1934 = vadd.f32 0.0, %v1933
        %v1935 = vpop.f32.mrf.mxu0
        %v1936 = vadd.f32 0.0, %v1935
        %1937 = vmatmul.bf16.gmra.mxu0 %v1898
        %v1938 = vpop.f32.mrf.mxu0
        %v1939 = vadd.f32 0.0, %v1938
        %v1940 = vpop.f32.mrf.mxu0
        %v1941 = vadd.f32 0.0, %v1940
        %1942 = vmatmul.bf16.gmra.mxu0 %v1901
        %v1943 = vpop.f32.mrf.mxu0
        %v1944 = vadd.f32 0.0, %v1943
        %v1945 = vpop.f32.mrf.mxu0
        %v1946 = vadd.f32 0.0, %v1945
        %1947 = vmatmul.bf16.gmra.mxu0 %v1904
        %v1948 = vpop.f32.mrf.mxu0
        %v1949 = vadd.f32 0.0, %v1948
        %v1950 = vpop.f32.mrf.mxu0
        %v1951 = vadd.f32 0.0, %v1950
        %1952 = vmatmul.bf16.gmra.mxu0 %v1907
        %v1953 = vpop.f32.mrf.mxu0
        %v1954 = vadd.f32 0.0, %v1953
        %v1955 = vpop.f32.mrf.mxu0
        %v1956 = vadd.f32 0.0, %v1955
        %1957 = vmatmul.bf16.gmra.mxu0 %v1910
        %v1958 = vpop.f32.mrf.mxu0
        %v1959 = vadd.f32 0.0, %v1958
        %v1960 = vpop.f32.mrf.mxu0
        %v1961 = vadd.f32 0.0, %v1960
        %1962 = vmatmul.bf16.gmra.mxu0 %v1913
        %v1963 = vpop.f32.mrf.mxu0
        %v1964 = vadd.f32 0.0, %v1963
        %v1965 = vpop.f32.mrf.mxu0
        %v1966 = vadd.f32 0.0, %v1965
        %1967 = vmatmul.bf16.gmra.mxu0 %v1916
        %v1968 = vpop.f32.mrf.mxu0
        %v1969 = vadd.f32 0.0, %v1968
        %v1970 = vpop.f32.mrf.mxu0
        %v1971 = vadd.f32 0.0, %v1970
        %1972 = vmatmul.bf16.gmra.mxu0 %v1919
        %v1973 = vpop.f32.mrf.mxu0
        %v1974 = vadd.f32 0.0, %v1973
        %v1975 = vpop.f32.mrf.mxu0
        %v1976 = vadd.f32 0.0, %v1975
        %1977 = vmatmul.bf16.gmra.mxu0 %v1922
        %v1978 = vpop.f32.mrf.mxu0
        %v1979 = vadd.f32 0.0, %v1978
        %v1980 = vpop.f32.mrf.mxu0
        %v1981 = vadd.f32 0.0, %v1980
        %1982 = vdwg.mxu0
        %v1983 = vadd.f32 %v1770, %v1934
        %v1984 = vadd.f32 %v1771, %v1936
        %v1985 = vadd.f32 %v1772, %v1939
        %v1986 = vadd.f32 %v1773, %v1941
        %v1987 = vadd.f32 %v1774, %v1944
        %v1988 = vadd.f32 %v1775, %v1946
        %v1989 = vadd.f32 %v1776, %v1949
        %v1990 = vadd.f32 %v1777, %v1951
        %v1991 = vadd.f32 %v1778, %v1954
        %v1992 = vadd.f32 %v1779, %v1956
        %v1993 = vadd.f32 %v1780, %v1959
        %v1994 = vadd.f32 %v1781, %v1961
        %v1995 = vadd.f32 %v1782, %v1964
        %v1996 = vadd.f32 %v1783, %v1966
        %v1997 = vadd.f32 %v1784, %v1969
        %v1998 = vadd.f32 %v1785, %v1971
        %v1999 = vadd.f32 %v1786, %v1974
        %v2000 = vadd.f32 %v1787, %v1976
        %v2001 = vadd.f32 %v1788, %v1979
        %v2002 = vadd.f32 %v1789, %v1981
        %v2003 = vld [vmem:[%s1790] sm:$0xf]
        %v2004 = vld [vmem:[%s1790 + $0x4] sm:$0xf]
        %v2005 = vld [vmem:[%s1790 + $0x8] sm:$0x1]
        %v2006 = vld [vmem:[%s1790 + $0xc] sm:$0xf]
        %v2007 = vld [vmem:[%s1790 + $0x10] sm:$0xf]
        %v2008 = vld [vmem:[%s1790 + $0x14] sm:$0x1]
        %v2009 = vld [vmem:[%s1790 + $0x18] sm:$0xf]
        %v2010 = vld [vmem:[%s1790 + $0x1c] sm:$0xf]
        %v2011 = vld [vmem:[%s1790 + $0x20] sm:$0x1]
        %v2012 = vld [vmem:[%s1790 + $0x24] sm:$0xf]
        %v2013 = vld [vmem:[%s1790 + $0x28] sm:$0xf]
        %v2014 = vld [vmem:[%s1790 + $0x2c] sm:$0x1]
        %v2015 = vld [vmem:[%s1790 + $0x30] sm:$0xf]
        %v2016 = vld [vmem:[%s1790 + $0x34] sm:$0xf]
        %v2017 = vld [vmem:[%s1790 + $0x38] sm:$0x1]
        %v2018 = vld [vmem:[%s1790 + $0x3c] sm:$0xf]
        %v2019 = vld [vmem:[%s1790 + $0x40] sm:$0xf]
        %v2020 = vld [vmem:[%s1790 + $0x44] sm:$0x1]
        %v2021 = vld [vmem:[%s1790 + $0x48] sm:$0xf]
        %v2022 = vld [vmem:[%s1790 + $0x4c] sm:$0xf]
        %v2023 = vld [vmem:[%s1790 + $0x50] sm:$0x1]
        %v2024 = vld [vmem:[%s1790 + $0x54] sm:$0xf]
        %v2025 = vld [vmem:[%s1790 + $0x58] sm:$0xf]
        %v2026 = vld [vmem:[%s1790 + $0x5c] sm:$0x1]
        %v2027 = vld [vmem:[%s1790 + $0x60] sm:$0xf]
        %v2028 = vld [vmem:[%s1790 + $0x64] sm:$0xf]
        %v2029 = vld [vmem:[%s1790 + $0x68] sm:$0x1]
        %v2030 = vld [vmem:[%s1790 + $0x6c] sm:$0xf]
        %v2031 = vld [vmem:[%s1790 + $0x70] sm:$0xf]
        %v2032 = vld [vmem:[%s1790 + $0x74] sm:$0x1]
        %v2034 = vshrl.u32 %v2003, 16
        %v2036 = vrot.slane %v2034, 4
        %v2037 = vshll.u32 %v2003, 16
        %v2039 = vrot.slane %v2037, 5
        %v2040 = vor.u32 %v2036, %v2039
        %v2041 = vrot.slane %v2040, 4
        %v2043 = vshll.u32 %v2004, 16
        %v2045 = vrot.slane %v2043, 5
        %v2046 = vsel %vm958, %v2041, %v2045
        %v2047 = vshrl.u32 %v2004, 16
        %v2049 = vrot.slane %v2047, 4
        %v2050 = vor.u32 %v2049, %v2045
        %v2051 = vrot.slane %v2050, 4
        %v2053 = vshll.u32 %v2005, 16
        %v2055 = vrot.slane %v2053, 5
        %v2056 = vsel %vm958, %v2051, %v2055
        %v2058 = vshrl.u32 %v2006, 16
        %v2060 = vrot.slane %v2058, 4
        %v2061 = vshll.u32 %v2006, 16
        %v2063 = vrot.slane %v2061, 5
        %v2064 = vor.u32 %v2060, %v2063
        %v2065 = vrot.slane %v2064, 4
        %v2067 = vshll.u32 %v2007, 16
        %v2069 = vrot.slane %v2067, 5
        %v2070 = vsel %vm958, %v2065, %v2069
        %v2071 = vshrl.u32 %v2007, 16
        %v2073 = vrot.slane %v2071, 4
        %v2074 = vor.u32 %v2073, %v2069
        %v2075 = vrot.slane %v2074, 4
        %v2077 = vshll.u32 %v2008, 16
        %v2079 = vrot.slane %v2077, 5
        %v2080 = vsel %vm958, %v2075, %v2079
        %v2082 = vshrl.u32 %v2009, 16
        %v2084 = vrot.slane %v2082, 4
        %v2085 = vshll.u32 %v2009, 16
        %v2087 = vrot.slane %v2085, 5
        %v2088 = vor.u32 %v2084, %v2087
        %v2089 = vrot.slane %v2088, 4
        %v2091 = vshll.u32 %v2010, 16
        %v2093 = vrot.slane %v2091, 5
        %v2094 = vsel %vm958, %v2089, %v2093
        %v2095 = vshrl.u32 %v2010, 16
        %v2097 = vrot.slane %v2095, 4
        %v2098 = vor.u32 %v2097, %v2093
        %v2099 = vrot.slane %v2098, 4
        %v2101 = vshll.u32 %v2011, 16
        %v2103 = vrot.slane %v2101, 5
        %v2104 = vsel %vm958, %v2099, %v2103
        %v2106 = vshrl.u32 %v2012, 16
        %v2108 = vrot.slane %v2106, 4
        %v2109 = vshll.u32 %v2012, 16
        %v2111 = vrot.slane %v2109, 5
        %v2112 = vor.u32 %v2108, %v2111
        %v2113 = vrot.slane %v2112, 4
        %v2115 = vshll.u32 %v2013, 16
        %v2117 = vrot.slane %v2115, 5
        %v2118 = vsel %vm958, %v2113, %v2117
        %v2119 = vshrl.u32 %v2013, 16
        %v2121 = vrot.slane %v2119, 4
        %v2122 = vor.u32 %v2121, %v2117
        %v2123 = vrot.slane %v2122, 4
        %v2125 = vshll.u32 %v2014, 16
        %v2127 = vrot.slane %v2125, 5
        %v2128 = vsel %vm958, %v2123, %v2127
        %v2130 = vshrl.u32 %v2015, 16
        %v2132 = vrot.slane %v2130, 4
        %v2133 = vshll.u32 %v2015, 16
        %v2135 = vrot.slane %v2133, 5
        %v2136 = vor.u32 %v2132, %v2135
        %v2137 = vrot.slane %v2136, 4
        %v2139 = vshll.u32 %v2016, 16
        %v2141 = vrot.slane %v2139, 5
        %v2142 = vsel %vm958, %v2137, %v2141
        %v2143 = vshrl.u32 %v2016, 16
        %v2145 = vrot.slane %v2143, 4
        %v2146 = vor.u32 %v2145, %v2141
        %v2147 = vrot.slane %v2146, 4
        %v2149 = vshll.u32 %v2017, 16
        %v2151 = vrot.slane %v2149, 5
        %v2152 = vsel %vm958, %v2147, %v2151
        %v2154 = vshrl.u32 %v2018, 16
        %v2156 = vrot.slane %v2154, 4
        %v2157 = vshll.u32 %v2018, 16
        %v2159 = vrot.slane %v2157, 5
        %v2160 = vor.u32 %v2156, %v2159
        %v2161 = vrot.slane %v2160, 4
        %v2163 = vshll.u32 %v2019, 16
        %v2165 = vrot.slane %v2163, 5
        %v2166 = vsel %vm958, %v2161, %v2165
        %v2167 = vshrl.u32 %v2019, 16
        %v2169 = vrot.slane %v2167, 4
        %v2170 = vor.u32 %v2169, %v2165
        %v2171 = vrot.slane %v2170, 4
        %v2173 = vshll.u32 %v2020, 16
        %v2175 = vrot.slane %v2173, 5
        %v2176 = vsel %vm958, %v2171, %v2175
        %v2178 = vshrl.u32 %v2021, 16
        %v2180 = vrot.slane %v2178, 4
        %v2181 = vshll.u32 %v2021, 16
        %v2183 = vrot.slane %v2181, 5
        %v2184 = vor.u32 %v2180, %v2183
        %v2185 = vrot.slane %v2184, 4
        %v2187 = vshll.u32 %v2022, 16
        %v2189 = vrot.slane %v2187, 5
        %v2190 = vsel %vm958, %v2185, %v2189
        %v2191 = vshrl.u32 %v2022, 16
        %v2193 = vrot.slane %v2191, 4
        %v2194 = vor.u32 %v2193, %v2189
        %v2195 = vrot.slane %v2194, 4
        %v2197 = vshll.u32 %v2023, 16
        %v2199 = vrot.slane %v2197, 5
        %v2200 = vsel %vm958, %v2195, %v2199
        %v2202 = vshrl.u32 %v2024, 16
        %v2204 = vrot.slane %v2202, 4
        %v2205 = vshll.u32 %v2024, 16
        %v2207 = vrot.slane %v2205, 5
        %v2208 = vor.u32 %v2204, %v2207
        %v2209 = vrot.slane %v2208, 4
        %v2211 = vshll.u32 %v2025, 16
        %v2213 = vrot.slane %v2211, 5
        %v2214 = vsel %vm958, %v2209, %v2213
        %v2215 = vshrl.u32 %v2025, 16
        %v2217 = vrot.slane %v2215, 4
        %v2218 = vor.u32 %v2217, %v2213
        %v2219 = vrot.slane %v2218, 4
        %v2221 = vshll.u32 %v2026, 16
        %v2223 = vrot.slane %v2221, 5
        %v2224 = vsel %vm958, %v2219, %v2223
        %v2226 = vshrl.u32 %v2027, 16
        %v2228 = vrot.slane %v2226, 4
        %v2229 = vshll.u32 %v2027, 16
        %v2231 = vrot.slane %v2229, 5
        %v2232 = vor.u32 %v2228, %v2231
        %v2233 = vrot.slane %v2232, 4
        %v2235 = vshll.u32 %v2028, 16
        %v2237 = vrot.slane %v2235, 5
        %v2238 = vsel %vm958, %v2233, %v2237
        %v2239 = vshrl.u32 %v2028, 16
        %v2241 = vrot.slane %v2239, 4
        %v2242 = vor.u32 %v2241, %v2237
        %v2243 = vrot.slane %v2242, 4
        %v2245 = vshll.u32 %v2029, 16
        %v2247 = vrot.slane %v2245, 5
        %v2248 = vsel %vm958, %v2243, %v2247
        %v2250 = vshrl.u32 %v2030, 16
        %v2252 = vrot.slane %v2250, 4
        %v2253 = vshll.u32 %v2030, 16
        %v2255 = vrot.slane %v2253, 5
        %v2256 = vor.u32 %v2252, %v2255
        %v2257 = vrot.slane %v2256, 4
        %v2259 = vshll.u32 %v2031, 16
        %v2261 = vrot.slane %v2259, 5
        %v2262 = vsel %vm958, %v2257, %v2261
        %v2263 = vshrl.u32 %v2031, 16
        %v2265 = vrot.slane %v2263, 4
        %v2266 = vor.u32 %v2265, %v2261
        %v2267 = vrot.slane %v2266, 4
        %v2269 = vshll.u32 %v2032, 16
        %v2271 = vrot.slane %v2269, 5
        %v2272 = vsel %vm958, %v2267, %v2271
        %s2273 = scalar_lea.vmem %s3, 128
        %v2274 = vld [vmem:[%s2273] sm:$0xf]
        %v2275 = vld [vmem:[%s2273 + $0x4] sm:$0xf]
        %v2276 = vld [vmem:[%s2273 + $0x8] sm:$0xf]
        %v2277 = vld [vmem:[%s2273 + $0xc] sm:$0xf]
        %v2278 = vld [vmem:[%s2273 + $0x10] sm:$0xf]
        %v2279 = vld [vmem:[%s2273 + $0x14] sm:$0xf]
        %v2280 = vld [vmem:[%s2273 + $0x18] sm:$0xf]
        %v2281 = vld [vmem:[%s2273 + $0x1c] sm:$0xf]
        %v2282 = vunpack.c.l.b16 %v2046
        %v2283 = vunpack.c.l.b16 %v2056
        %v2284 = vunpack.c.l.b16 %v2070
        %v2285 = vunpack.c.l.b16 %v2080
        %v2286 = vunpack.c.l.b16 %v2094
        %v2287 = vunpack.c.l.b16 %v2104
        %v2288 = vunpack.c.l.b16 %v2118
        %v2289 = vunpack.c.l.b16 %v2128
        %v2290 = vunpack.c.l.b16 %v2142
        %v2291 = vunpack.c.l.b16 %v2152
        %v2292 = vunpack.c.l.b16 %v2166
        %v2293 = vunpack.c.l.b16 %v2176
        %v2294 = vunpack.c.l.b16 %v2190
        %v2295 = vunpack.c.l.b16 %v2200
        %v2296 = vunpack.c.l.b16 %v2214
        %v2297 = vunpack.c.l.b16 %v2224
        %v2298 = vunpack.c.l.b16 %v2238
        %v2299 = vunpack.c.l.b16 %v2248
        %v2300 = vunpack.c.l.b16 %v2262
        %v2301 = vunpack.c.l.b16 %v2272
        %v2302 = vpack.c.b16 %v2283, %v2282
        %v2303 = vpack.c.b16 %v2285, %v2284
        %v2304 = vpack.c.b16 %v2287, %v2286
        %v2305 = vpack.c.b16 %v2289, %v2288
        %v2306 = vpack.c.b16 %v2291, %v2290
        %v2307 = vpack.c.b16 %v2293, %v2292
        %v2308 = vpack.c.b16 %v2295, %v2294
        %v2309 = vpack.c.b16 %v2297, %v2296
        %v2310 = vpack.c.b16 %v2299, %v2298
        %v2311 = vpack.c.b16 %v2301, %v2300
        %v2320 = vunpack.c.l.b16 %v2274
        %v2321 = vunpack.c.l.b16 %v2275
        %v2322 = vunpack.c.l.b16 %v2276
        %v2323 = vunpack.c.l.b16 %v2277
        %v2324 = vunpack.c.l.b16 %v2278
        %v2325 = vunpack.c.l.b16 %v2279
        %v2326 = vunpack.c.l.b16 %v2280
        %v2327 = vunpack.c.l.b16 %v2281
        %v2328 = vpack.c.b16 %v2321, %v2320
        %v2329 = vpack.c.b16 %v2323, %v2322
        %v2330 = vpack.c.b16 %v2325, %v2324
        %v2331 = vpack.c.b16 %v2327, %v2326
        %v2337 = vsel %vm1262, %v2302, 0
        %v2340 = vsel %vm1262, %v2303, 0
        %v2343 = vsel %vm1262, %v2304, 0
        %v2346 = vsel %vm1262, %v2305, 0
        %v2349 = vsel %vm1262, %v2306, 0
        %v2352 = vsel %vm1262, %v2307, 0
        %v2355 = vsel %vm1262, %v2308, 0
        %v2358 = vsel %vm1262, %v2309, 0
        %v2361 = vsel %vm1262, %v2310, 0
        %v2364 = vsel %vm1262, %v2311, 0
        %2366 = vmatpush.bf16.msra.mxu0 0
        %2367 = vmatpush.bf16.msra.mxu0 0
        %2368 = vmatpush.bf16.msra.mxu0 0
        %2369 = vmatpush.bf16.msra.mxu0 0
        %2370 = vmatpush.bf16.msra.mxu0 %v2331
        %2371 = vmatpush.bf16.msra.mxu0 %v2330
        %2372 = vmatpush.bf16.msra.mxu0 %v2329
        %2373 = vmatpush.bf16.msra.mxu0 %v2328
        %2374 = vmatmul.bf16.gmra.mxu0 %v2337
        %v2375 = vpop.f32.mrf.mxu0
        %v2376 = vadd.f32 0.0, %v2375
        %v2377 = vpop.f32.mrf.mxu0
        %v2378 = vadd.f32 0.0, %v2377
        %2379 = vmatmul.bf16.gmra.mxu0 %v2340
        %v2380 = vpop.f32.mrf.mxu0
        %v2381 = vadd.f32 0.0, %v2380
        %v2382 = vpop.f32.mrf.mxu0
        %v2383 = vadd.f32 0.0, %v2382
        %2384 = vmatmul.bf16.gmra.mxu0 %v2343
        %v2385 = vpop.f32.mrf.mxu0
        %v2386 = vadd.f32 0.0, %v2385
        %v2387 = vpop.f32.mrf.mxu0
        %v2388 = vadd.f32 0.0, %v2387
        %2389 = vmatmul.bf16.gmra.mxu0 %v2346
        %v2390 = vpop.f32.mrf.mxu0
        %v2391 = vadd.f32 0.0, %v2390
        %v2392 = vpop.f32.mrf.mxu0
        %v2393 = vadd.f32 0.0, %v2392
        %2394 = vmatmul.bf16.gmra.mxu0 %v2349
        %v2395 = vpop.f32.mrf.mxu0
        %v2396 = vadd.f32 0.0, %v2395
        %v2397 = vpop.f32.mrf.mxu0
        %v2398 = vadd.f32 0.0, %v2397
        %2399 = vmatmul.bf16.gmra.mxu0 %v2352
        %v2400 = vpop.f32.mrf.mxu0
        %v2401 = vadd.f32 0.0, %v2400
        %v2402 = vpop.f32.mrf.mxu0
        %v2403 = vadd.f32 0.0, %v2402
        %2404 = vmatmul.bf16.gmra.mxu0 %v2355
        %v2405 = vpop.f32.mrf.mxu0
        %v2406 = vadd.f32 0.0, %v2405
        %v2407 = vpop.f32.mrf.mxu0
        %v2408 = vadd.f32 0.0, %v2407
        %2409 = vmatmul.bf16.gmra.mxu0 %v2358
        %v2410 = vpop.f32.mrf.mxu0
        %v2411 = vadd.f32 0.0, %v2410
        %v2412 = vpop.f32.mrf.mxu0
        %v2413 = vadd.f32 0.0, %v2412
        %2414 = vmatmul.bf16.gmra.mxu0 %v2361
        %v2415 = vpop.f32.mrf.mxu0
        %v2416 = vadd.f32 0.0, %v2415
        %v2417 = vpop.f32.mrf.mxu0
        %v2418 = vadd.f32 0.0, %v2417
        %2419 = vmatmul.bf16.gmra.mxu0 %v2364
        %v2420 = vpop.f32.mrf.mxu0
        %v2421 = vadd.f32 0.0, %v2420
        %v2422 = vpop.f32.mrf.mxu0
        %v2423 = vadd.f32 0.0, %v2422
        %2424 = vdwg.mxu0
        %v2425 = vadd.f32 %v1983, %v2376
        %v2426 = vadd.f32 %v1984, %v2378
        %v2427 = vadd.f32 %v1985, %v2381
        %v2428 = vadd.f32 %v1986, %v2383
        %v2429 = vadd.f32 %v1987, %v2386
        %v2430 = vadd.f32 %v1988, %v2388
        %v2431 = vadd.f32 %v1989, %v2391
        %v2432 = vadd.f32 %v1990, %v2393
        %v2433 = vadd.f32 %v1991, %v2396
        %v2434 = vadd.f32 %v1992, %v2398
        %v2435 = vadd.f32 %v1993, %v2401
        %v2436 = vadd.f32 %v1994, %v2403
        %v2437 = vadd.f32 %v1995, %v2406
        %v2438 = vadd.f32 %v1996, %v2408
        %v2439 = vadd.f32 %v1997, %v2411
        %v2440 = vadd.f32 %v1998, %v2413
        %v2441 = vadd.f32 %v1999, %v2416
        %v2442 = vadd.f32 %v2000, %v2418
        %v2443 = vadd.f32 %v2001, %v2421
        %v2444 = vadd.f32 %v2002, %v2423
        %v2445 = vld [vmem:[%s1790] sm:$0xe]
        %v2446 = vld [vmem:[%s1790 + $0xc] sm:$0xe]
        %v2447 = vld [vmem:[%s1790 + $0x18] sm:$0xe]
        %v2448 = vld [vmem:[%s1790 + $0x24] sm:$0xe]
        %v2449 = vld [vmem:[%s1790 + $0x30] sm:$0xe]
        %v2450 = vld [vmem:[%s1790 + $0x3c] sm:$0xe]
        %v2451 = vld [vmem:[%s1790 + $0x48] sm:$0xe]
        %v2452 = vld [vmem:[%s1790 + $0x54] sm:$0xe]
        %v2453 = vld [vmem:[%s1790 + $0x60] sm:$0xe]
        %v2454 = vld [vmem:[%s1790 + $0x6c] sm:$0xe]
        %v2485 = vrot.slane %v2445, 5
        %v2486 = vrot.slane %v2485, 4
        %v2487 = vrot.slane %v2004, 5
        %v2488 = vsel %vm1547, %v2486, %v2487
        %v2489 = vrot.slane %v2487, 4
        %v2490 = vrot.slane %v2005, 5
        %v2491 = vsel %vm1547, %v2489, %v2490
        %v2492 = vrot.slane %v2446, 5
        %v2493 = vrot.slane %v2492, 4
        %v2494 = vrot.slane %v2007, 5
        %v2495 = vsel %vm1547, %v2493, %v2494
        %v2496 = vrot.slane %v2494, 4
        %v2497 = vrot.slane %v2008, 5
        %v2498 = vsel %vm1547, %v2496, %v2497
        %v2499 = vrot.slane %v2447, 5
        %v2500 = vrot.slane %v2499, 4
        %v2501 = vrot.slane %v2010, 5
        %v2502 = vsel %vm1547, %v2500, %v2501
        %v2503 = vrot.slane %v2501, 4
        %v2504 = vrot.slane %v2011, 5
        %v2505 = vsel %vm1547, %v2503, %v2504
        %v2506 = vrot.slane %v2448, 5
        %v2507 = vrot.slane %v2506, 4
        %v2508 = vrot.slane %v2013, 5
        %v2509 = vsel %vm1547, %v2507, %v2508
        %v2510 = vrot.slane %v2508, 4
        %v2511 = vrot.slane %v2014, 5
        %v2512 = vsel %vm1547, %v2510, %v2511
        %v2513 = vrot.slane %v2449, 5
        %v2514 = vrot.slane %v2513, 4
        %v2515 = vrot.slane %v2016, 5
        %v2516 = vsel %vm1547, %v2514, %v2515
        %v2517 = vrot.slane %v2515, 4
        %v2518 = vrot.slane %v2017, 5
        %v2519 = vsel %vm1547, %v2517, %v2518
        %v2520 = vrot.slane %v2450, 5
        %v2521 = vrot.slane %v2520, 4
        %v2522 = vrot.slane %v2019, 5
        %v2523 = vsel %vm1547, %v2521, %v2522
        %v2524 = vrot.slane %v2522, 4
        %v2525 = vrot.slane %v2020, 5
        %v2526 = vsel %vm1547, %v2524, %v2525
        %v2527 = vrot.slane %v2451, 5
        %v2528 = vrot.slane %v2527, 4
        %v2529 = vrot.slane %v2022, 5
        %v2530 = vsel %vm1547, %v2528, %v2529
        %v2531 = vrot.slane %v2529, 4
        %v2532 = vrot.slane %v2023, 5
        %v2533 = vsel %vm1547, %v2531, %v2532
        %v2534 = vrot.slane %v2452, 5
        %v2535 = vrot.slane %v2534, 4
        %v2536 = vrot.slane %v2025, 5
        %v2537 = vsel %vm1547, %v2535, %v2536
        %v2538 = vrot.slane %v2536, 4
        %v2539 = vrot.slane %v2026, 5
        %v2540 = vsel %vm1547, %v2538, %v2539
        %v2541 = vrot.slane %v2453, 5
        %v2542 = vrot.slane %v2541, 4
        %v2543 = vrot.slane %v2028, 5
        %v2544 = vsel %vm1547, %v2542, %v2543
        %v2545 = vrot.slane %v2543, 4
        %v2546 = vrot.slane %v2029, 5
        %v2547 = vsel %vm1547, %v2545, %v2546
        %v2548 = vrot.slane %v2454, 5
        %v2549 = vrot.slane %v2548, 4
        %v2550 = vrot.slane %v2031, 5
        %v2551 = vsel %vm1547, %v2549, %v2550
        %v2552 = vrot.slane %v2550, 4
        %v2553 = vrot.slane %v2032, 5
        %v2554 = vsel %vm1547, %v2552, %v2553
        %s2555 = scalar_lea.vmem %s3, 160
        %v2556 = vld [vmem:[%s2555] sm:$0xf]
        %v2557 = vld [vmem:[%s2555 + $0x4] sm:$0xf]
        %v2558 = vld [vmem:[%s2555 + $0x8] sm:$0xf]
        %v2559 = vld [vmem:[%s2555 + $0xc] sm:$0xf]
        %v2560 = vld [vmem:[%s2555 + $0x10] sm:$0xf]
        %v2561 = vld [vmem:[%s2555 + $0x14] sm:$0xf]
        %v2562 = vld [vmem:[%s2555 + $0x18] sm:$0xf]
        %v2563 = vld [vmem:[%s2555 + $0x1c] sm:$0xf]
        %v2564 = vunpack.c.l.b16 %v2488
        %v2565 = vunpack.c.l.b16 %v2491
        %v2566 = vunpack.c.l.b16 %v2495
        %v2567 = vunpack.c.l.b16 %v2498
        %v2568 = vunpack.c.l.b16 %v2502
        %v2569 = vunpack.c.l.b16 %v2505
        %v2570 = vunpack.c.l.b16 %v2509
        %v2571 = vunpack.c.l.b16 %v2512
        %v2572 = vunpack.c.l.b16 %v2516
        %v2573 = vunpack.c.l.b16 %v2519
        %v2574 = vunpack.c.l.b16 %v2523
        %v2575 = vunpack.c.l.b16 %v2526
        %v2576 = vunpack.c.l.b16 %v2530
        %v2577 = vunpack.c.l.b16 %v2533
        %v2578 = vunpack.c.l.b16 %v2537
        %v2579 = vunpack.c.l.b16 %v2540
        %v2580 = vunpack.c.l.b16 %v2544
        %v2581 = vunpack.c.l.b16 %v2547
        %v2582 = vunpack.c.l.b16 %v2551
        %v2583 = vunpack.c.l.b16 %v2554
        %v2584 = vpack.c.b16 %v2565, %v2564
        %v2585 = vpack.c.b16 %v2567, %v2566
        %v2586 = vpack.c.b16 %v2569, %v2568
        %v2587 = vpack.c.b16 %v2571, %v2570
        %v2588 = vpack.c.b16 %v2573, %v2572
        %v2589 = vpack.c.b16 %v2575, %v2574
        %v2590 = vpack.c.b16 %v2577, %v2576
        %v2591 = vpack.c.b16 %v2579, %v2578
        %v2592 = vpack.c.b16 %v2581, %v2580
        %v2593 = vpack.c.b16 %v2583, %v2582
        %v2602 = vunpack.c.l.b16 %v2556
        %v2603 = vunpack.c.l.b16 %v2557
        %v2604 = vunpack.c.l.b16 %v2558
        %v2605 = vunpack.c.l.b16 %v2559
        %v2606 = vunpack.c.l.b16 %v2560
        %v2607 = vunpack.c.l.b16 %v2561
        %v2608 = vunpack.c.l.b16 %v2562
        %v2609 = vunpack.c.l.b16 %v2563
        %v2610 = vpack.c.b16 %v2603, %v2602
        %v2611 = vpack.c.b16 %v2605, %v2604
        %v2612 = vpack.c.b16 %v2607, %v2606
        %v2613 = vpack.c.b16 %v2609, %v2608
        %v2619 = vsel %vm1262, %v2584, 0
        %v2622 = vsel %vm1262, %v2585, 0
        %v2625 = vsel %vm1262, %v2586, 0
        %v2628 = vsel %vm1262, %v2587, 0
        %v2631 = vsel %vm1262, %v2588, 0
        %v2634 = vsel %vm1262, %v2589, 0
        %v2637 = vsel %vm1262, %v2590, 0
        %v2640 = vsel %vm1262, %v2591, 0
        %v2643 = vsel %vm1262, %v2592, 0
        %v2646 = vsel %vm1262, %v2593, 0
        %2648 = vmatpush.bf16.msra.mxu0 0
        %2649 = vmatpush.bf16.msra.mxu0 0
        %2650 = vmatpush.bf16.msra.mxu0 0
        %2651 = vmatpush.bf16.msra.mxu0 0
        %2652 = vmatpush.bf16.msra.mxu0 %v2613
        %2653 = vmatpush.bf16.msra.mxu0 %v2612
        %2654 = vmatpush.bf16.msra.mxu0 %v2611
        %2655 = vmatpush.bf16.msra.mxu0 %v2610
        %2656 = vmatmul.bf16.gmra.mxu0 %v2619
        %v2657 = vpop.f32.mrf.mxu0
        %v2658 = vadd.f32 0.0, %v2657
        %v2659 = vpop.f32.mrf.mxu0
        %v2660 = vadd.f32 0.0, %v2659
        %2661 = vmatmul.bf16.gmra.mxu0 %v2622
        %v2662 = vpop.f32.mrf.mxu0
        %v2663 = vadd.f32 0.0, %v2662
        %v2664 = vpop.f32.mrf.mxu0
        %v2665 = vadd.f32 0.0, %v2664
        %2666 = vmatmul.bf16.gmra.mxu0 %v2625
        %v2667 = vpop.f32.mrf.mxu0
        %v2668 = vadd.f32 0.0, %v2667
        %v2669 = vpop.f32.mrf.mxu0
        %v2670 = vadd.f32 0.0, %v2669
        %2671 = vmatmul.bf16.gmra.mxu0 %v2628
        %v2672 = vpop.f32.mrf.mxu0
        %v2673 = vadd.f32 0.0, %v2672
        %v2674 = vpop.f32.mrf.mxu0
        %v2675 = vadd.f32 0.0, %v2674
        %2676 = vmatmul.bf16.gmra.mxu0 %v2631
        %v2677 = vpop.f32.mrf.mxu0
        %v2678 = vadd.f32 0.0, %v2677
        %v2679 = vpop.f32.mrf.mxu0
        %v2680 = vadd.f32 0.0, %v2679
        %2681 = vmatmul.bf16.gmra.mxu0 %v2634
        %v2682 = vpop.f32.mrf.mxu0
        %v2683 = vadd.f32 0.0, %v2682
        %v2684 = vpop.f32.mrf.mxu0
        %v2685 = vadd.f32 0.0, %v2684
        %2686 = vmatmul.bf16.gmra.mxu0 %v2637
        %v2687 = vpop.f32.mrf.mxu0
        %v2688 = vadd.f32 0.0, %v2687
        %v2689 = vpop.f32.mrf.mxu0
        %v2690 = vadd.f32 0.0, %v2689
        %2691 = vmatmul.bf16.gmra.mxu0 %v2640
        %v2692 = vpop.f32.mrf.mxu0
        %v2693 = vadd.f32 0.0, %v2692
        %v2694 = vpop.f32.mrf.mxu0
        %v2695 = vadd.f32 0.0, %v2694
        %2696 = vmatmul.bf16.gmra.mxu0 %v2643
        %v2697 = vpop.f32.mrf.mxu0
        %v2698 = vadd.f32 0.0, %v2697
        %v2699 = vpop.f32.mrf.mxu0
        %v2700 = vadd.f32 0.0, %v2699
        %2701 = vmatmul.bf16.gmra.mxu0 %v2646
        %v2702 = vpop.f32.mrf.mxu0
        %v2703 = vadd.f32 0.0, %v2702
        %v2704 = vpop.f32.mrf.mxu0
        %v2705 = vadd.f32 0.0, %v2704
        %2706 = vdwg.mxu0
        %v2707 = vadd.f32 %v2425, %v2658
        %v2708 = vadd.f32 %v2426, %v2660
        %v2709 = vadd.f32 %v2427, %v2663
        %v2710 = vadd.f32 %v2428, %v2665
        %v2711 = vadd.f32 %v2429, %v2668
        %v2712 = vadd.f32 %v2430, %v2670
        %v2713 = vadd.f32 %v2431, %v2673
        %v2714 = vadd.f32 %v2432, %v2675
        %v2715 = vadd.f32 %v2433, %v2678
        %v2716 = vadd.f32 %v2434, %v2680
        %v2717 = vadd.f32 %v2435, %v2683
        %v2718 = vadd.f32 %v2436, %v2685
        %v2719 = vadd.f32 %v2437, %v2688
        %v2720 = vadd.f32 %v2438, %v2690
        %v2721 = vadd.f32 %v2439, %v2693
        %v2722 = vadd.f32 %v2440, %v2695
        %v2723 = vadd.f32 %v2441, %v2698
        %v2724 = vadd.f32 %v2442, %v2700
        %v2725 = vadd.f32 %v2443, %v2703
        %v2726 = vadd.f32 %v2444, %v2705
        %v2727 = vld [vmem:[%s806] sm:$0xf]
        %v2728 = vld [vmem:[%s806 + $0x4] sm:$0xf]
        %v2729 = vld [vmem:[%s806 + $0xc] sm:$0xf]
        %v2730 = vld [vmem:[%s806 + $0x10] sm:$0xf]
        %v2731 = vld [vmem:[%s806 + $0x18] sm:$0xf]
        %v2732 = vld [vmem:[%s806 + $0x1c] sm:$0xf]
        %v2733 = vld [vmem:[%s806 + $0x24] sm:$0xf]
        %v2734 = vld [vmem:[%s806 + $0x28] sm:$0xf]
        %v2735 = vld [vmem:[%s806 + $0x30] sm:$0xf]
        %v2736 = vld [vmem:[%s806 + $0x34] sm:$0xf]
        %v2737 = vld [vmem:[%s806 + $0x3c] sm:$0xf]
        %v2738 = vld [vmem:[%s806 + $0x40] sm:$0xf]
        %v2739 = vld [vmem:[%s806 + $0x48] sm:$0xf]
        %v2740 = vld [vmem:[%s806 + $0x4c] sm:$0xf]
        %v2741 = vld [vmem:[%s806 + $0x54] sm:$0xf]
        %v2742 = vld [vmem:[%s806 + $0x58] sm:$0xf]
        %v2743 = vld [vmem:[%s806 + $0x60] sm:$0xf]
        %v2744 = vld [vmem:[%s806 + $0x64] sm:$0xf]
        %v2745 = vld [vmem:[%s806 + $0x6c] sm:$0xf]
        %v2746 = vld [vmem:[%s806 + $0x70] sm:$0xf]
        %s2747 = scalar_lea.vmem %s3, 192
        %v2748 = vld [vmem:[%s2747] sm:$0xf]
        %v2749 = vld [vmem:[%s2747 + $0x4] sm:$0xf]
        %v2750 = vld [vmem:[%s2747 + $0x8] sm:$0xf]
        %v2751 = vld [vmem:[%s2747 + $0xc] sm:$0xf]
        %v2752 = vld [vmem:[%s2747 + $0x10] sm:$0xf]
        %v2753 = vld [vmem:[%s2747 + $0x14] sm:$0xf]
        %v2754 = vld [vmem:[%s2747 + $0x18] sm:$0xf]
        %v2755 = vld [vmem:[%s2747 + $0x1c] sm:$0xf]
        %v2776 = vunpack.c.l.b16 %v2727
        %v2777 = vunpack.c.l.b16 %v2728
        %v2778 = vunpack.c.l.b16 %v2729
        %v2779 = vunpack.c.l.b16 %v2730
        %v2780 = vunpack.c.l.b16 %v2731
        %v2781 = vunpack.c.l.b16 %v2732
        %v2782 = vunpack.c.l.b16 %v2733
        %v2783 = vunpack.c.l.b16 %v2734
        %v2784 = vunpack.c.l.b16 %v2735
        %v2785 = vunpack.c.l.b16 %v2736
        %v2786 = vunpack.c.l.b16 %v2737
        %v2787 = vunpack.c.l.b16 %v2738
        %v2788 = vunpack.c.l.b16 %v2739
        %v2789 = vunpack.c.l.b16 %v2740
        %v2790 = vunpack.c.l.b16 %v2741
        %v2791 = vunpack.c.l.b16 %v2742
        %v2792 = vunpack.c.l.b16 %v2743
        %v2793 = vunpack.c.l.b16 %v2744
        %v2794 = vunpack.c.l.b16 %v2745
        %v2795 = vunpack.c.l.b16 %v2746
        %v2796 = vpack.c.b16 %v2777, %v2776
        %v2797 = vpack.c.b16 %v2779, %v2778
        %v2798 = vpack.c.b16 %v2781, %v2780
        %v2799 = vpack.c.b16 %v2783, %v2782
        %v2800 = vpack.c.b16 %v2785, %v2784
        %v2801 = vpack.c.b16 %v2787, %v2786
        %v2802 = vpack.c.b16 %v2789, %v2788
        %v2803 = vpack.c.b16 %v2791, %v2790
        %v2804 = vpack.c.b16 %v2793, %v2792
        %v2805 = vpack.c.b16 %v2795, %v2794
        %v2814 = vunpack.c.l.b16 %v2748
        %v2815 = vunpack.c.l.b16 %v2749
        %v2816 = vunpack.c.l.b16 %v2750
        %v2817 = vunpack.c.l.b16 %v2751
        %v2818 = vunpack.c.l.b16 %v2752
        %v2819 = vunpack.c.l.b16 %v2753
        %v2820 = vunpack.c.l.b16 %v2754
        %v2821 = vunpack.c.l.b16 %v2755
        %v2822 = vpack.c.b16 %v2815, %v2814
        %v2823 = vpack.c.b16 %v2817, %v2816
        %v2824 = vpack.c.b16 %v2819, %v2818
        %v2825 = vpack.c.b16 %v2821, %v2820
        %v2831 = vsel %vm1262, %v2796, 0
        %v2834 = vsel %vm1262, %v2797, 0
        %v2837 = vsel %vm1262, %v2798, 0
        %v2840 = vsel %vm1262, %v2799, 0
        %v2843 = vsel %vm1262, %v2800, 0
        %v2846 = vsel %vm1262, %v2801, 0
        %v2849 = vsel %vm1262, %v2802, 0
        %v2852 = vsel %vm1262, %v2803, 0
        %v2855 = vsel %vm1262, %v2804, 0
        %v2858 = vsel %vm1262, %v2805, 0
        %2860 = vmatpush.bf16.msra.mxu0 0
        %2861 = vmatpush.bf16.msra.mxu0 0
        %2862 = vmatpush.bf16.msra.mxu0 0
        %2863 = vmatpush.bf16.msra.mxu0 0
        %2864 = vmatpush.bf16.msra.mxu0 %v2825
        %2865 = vmatpush.bf16.msra.mxu0 %v2824
        %2866 = vmatpush.bf16.msra.mxu0 %v2823
        %2867 = vmatpush.bf16.msra.mxu0 %v2822
        %2868 = vmatmul.bf16.gmra.mxu0 %v2831
        %v2869 = vpop.f32.mrf.mxu0
        %v2870 = vadd.f32 0.0, %v2869
        %v2871 = vpop.f32.mrf.mxu0
        %v2872 = vadd.f32 0.0, %v2871
        %2873 = vmatmul.bf16.gmra.mxu0 %v2834
        %v2874 = vpop.f32.mrf.mxu0
        %v2875 = vadd.f32 0.0, %v2874
        %v2876 = vpop.f32.mrf.mxu0
        %v2877 = vadd.f32 0.0, %v2876
        %2878 = vmatmul.bf16.gmra.mxu0 %v2837
        %v2879 = vpop.f32.mrf.mxu0
        %v2880 = vadd.f32 0.0, %v2879
        %v2881 = vpop.f32.mrf.mxu0
        %v2882 = vadd.f32 0.0, %v2881
        %2883 = vmatmul.bf16.gmra.mxu0 %v2840
        %v2884 = vpop.f32.mrf.mxu0
        %v2885 = vadd.f32 0.0, %v2884
        %v2886 = vpop.f32.mrf.mxu0
        %v2887 = vadd.f32 0.0, %v2886
        %2888 = vmatmul.bf16.gmra.mxu0 %v2843
        %v2889 = vpop.f32.mrf.mxu0
        %v2890 = vadd.f32 0.0, %v2889
        %v2891 = vpop.f32.mrf.mxu0
        %v2892 = vadd.f32 0.0, %v2891
        %2893 = vmatmul.bf16.gmra.mxu0 %v2846
        %v2894 = vpop.f32.mrf.mxu0
        %v2895 = vadd.f32 0.0, %v2894
        %v2896 = vpop.f32.mrf.mxu0
        %v2897 = vadd.f32 0.0, %v2896
        %2898 = vmatmul.bf16.gmra.mxu0 %v2849
        %v2899 = vpop.f32.mrf.mxu0
        %v2900 = vadd.f32 0.0, %v2899
        %v2901 = vpop.f32.mrf.mxu0
        %v2902 = vadd.f32 0.0, %v2901
        %2903 = vmatmul.bf16.gmra.mxu0 %v2852
        %v2904 = vpop.f32.mrf.mxu0
        %v2905 = vadd.f32 0.0, %v2904
        %v2906 = vpop.f32.mrf.mxu0
        %v2907 = vadd.f32 0.0, %v2906
        %2908 = vmatmul.bf16.gmra.mxu0 %v2855
        %v2909 = vpop.f32.mrf.mxu0
        %v2910 = vadd.f32 0.0, %v2909
        %v2911 = vpop.f32.mrf.mxu0
        %v2912 = vadd.f32 0.0, %v2911
        %2913 = vmatmul.bf16.gmra.mxu0 %v2858
        %v2914 = vpop.f32.mrf.mxu0
        %v2915 = vadd.f32 0.0, %v2914
        %v2916 = vpop.f32.mrf.mxu0
        %v2917 = vadd.f32 0.0, %v2916
        %2918 = vdwg.mxu0
        %v2919 = vadd.f32 %v2707, %v2870
        %v2920 = vadd.f32 %v2708, %v2872
        %v2921 = vadd.f32 %v2709, %v2875
        %v2922 = vadd.f32 %v2710, %v2877
        %v2923 = vadd.f32 %v2711, %v2880
        %v2924 = vadd.f32 %v2712, %v2882
        %v2925 = vadd.f32 %v2713, %v2885
        %v2926 = vadd.f32 %v2714, %v2887
        %v2927 = vadd.f32 %v2715, %v2890
        %v2928 = vadd.f32 %v2716, %v2892
        %v2929 = vadd.f32 %v2717, %v2895
        %v2930 = vadd.f32 %v2718, %v2897
        %v2931 = vadd.f32 %v2719, %v2900
        %v2932 = vadd.f32 %v2720, %v2902
        %v2933 = vadd.f32 %v2721, %v2905
        %v2934 = vadd.f32 %v2722, %v2907
        %v2935 = vadd.f32 %v2723, %v2910
        %v2936 = vadd.f32 %v2724, %v2912
        %v2937 = vadd.f32 %v2725, %v2915
        %v2938 = vadd.f32 %v2726, %v2917
        %v2939 = vld [vmem:[%s806] sm:$0xf]
        %v2940 = vld [vmem:[%s806 + $0x4] sm:$0xf]
        %v2941 = vld [vmem:[%s806 + $0x8] sm:$0x1]
        %v2942 = vld [vmem:[%s806 + $0xc] sm:$0xf]
        %v2943 = vld [vmem:[%s806 + $0x10] sm:$0xf]
        %v2944 = vld [vmem:[%s806 + $0x14] sm:$0x1]
        %v2945 = vld [vmem:[%s806 + $0x18] sm:$0xf]
        %v2946 = vld [vmem:[%s806 + $0x1c] sm:$0xf]
        %v2947 = vld [vmem:[%s806 + $0x20] sm:$0x1]
        %v2948 = vld [vmem:[%s806 + $0x24] sm:$0xf]
        %v2949 = vld [vmem:[%s806 + $0x28] sm:$0xf]
        %v2950 = vld [vmem:[%s806 + $0x2c] sm:$0x1]
        %v2951 = vld [vmem:[%s806 + $0x30] sm:$0xf]
        %v2952 = vld [vmem:[%s806 + $0x34] sm:$0xf]
        %v2953 = vld [vmem:[%s806 + $0x38] sm:$0x1]
        %v2954 = vld [vmem:[%s806 + $0x3c] sm:$0xf]
        %v2955 = vld [vmem:[%s806 + $0x40] sm:$0xf]
        %v2956 = vld [vmem:[%s806 + $0x44] sm:$0x1]
        %v2957 = vld [vmem:[%s806 + $0x48] sm:$0xf]
        %v2958 = vld [vmem:[%s806 + $0x4c] sm:$0xf]
        %v2959 = vld [vmem:[%s806 + $0x50] sm:$0x1]
        %v2960 = vld [vmem:[%s806 + $0x54] sm:$0xf]
        %v2961 = vld [vmem:[%s806 + $0x58] sm:$0xf]
        %v2962 = vld [vmem:[%s806 + $0x5c] sm:$0x1]
        %v2963 = vld [vmem:[%s806 + $0x60] sm:$0xf]
        %v2964 = vld [vmem:[%s806 + $0x64] sm:$0xf]
        %v2965 = vld [vmem:[%s806 + $0x68] sm:$0x1]
        %v2966 = vld [vmem:[%s806 + $0x6c] sm:$0xf]
        %v2967 = vld [vmem:[%s806 + $0x70] sm:$0xf]
        %v2968 = vld [vmem:[%s806 + $0x74] sm:$0x1]
        %v2970 = vshrl.u32 %v2939, 16
        %v2972 = vrot.slane %v2970, 4
        %v2973 = vshll.u32 %v2939, 16
        %v2975 = vrot.slane %v2973, 5
        %v2976 = vor.u32 %v2972, %v2975
        %v2977 = vrot.slane %v2976, 4
        %v2979 = vshll.u32 %v2940, 16
        %v2981 = vrot.slane %v2979, 5
        %v2982 = vsel %vm958, %v2977, %v2981
        %v2983 = vshrl.u32 %v2940, 16
        %v2985 = vrot.slane %v2983, 4
        %v2986 = vor.u32 %v2985, %v2981
        %v2987 = vrot.slane %v2986, 4
        %v2989 = vshll.u32 %v2941, 16
        %v2991 = vrot.slane %v2989, 5
        %v2992 = vsel %vm958, %v2987, %v2991
        %v2994 = vshrl.u32 %v2942, 16
        %v2996 = vrot.slane %v2994, 4
        %v2997 = vshll.u32 %v2942, 16
        %v2999 = vrot.slane %v2997, 5
        %v3000 = vor.u32 %v2996, %v2999
        %v3001 = vrot.slane %v3000, 4
        %v3003 = vshll.u32 %v2943, 16
        %v3005 = vrot.slane %v3003, 5
        %v3006 = vsel %vm958, %v3001, %v3005
        %v3007 = vshrl.u32 %v2943, 16
        %v3009 = vrot.slane %v3007, 4
        %v3010 = vor.u32 %v3009, %v3005
        %v3011 = vrot.slane %v3010, 4
        %v3013 = vshll.u32 %v2944, 16
        %v3015 = vrot.slane %v3013, 5
        %v3016 = vsel %vm958, %v3011, %v3015
        %v3018 = vshrl.u32 %v2945, 16
        %v3020 = vrot.slane %v3018, 4
        %v3021 = vshll.u32 %v2945, 16
        %v3023 = vrot.slane %v3021, 5
        %v3024 = vor.u32 %v3020, %v3023
        %v3025 = vrot.slane %v3024, 4
        %v3027 = vshll.u32 %v2946, 16
        %v3029 = vrot.slane %v3027, 5
        %v3030 = vsel %vm958, %v3025, %v3029
        %v3031 = vshrl.u32 %v2946, 16
        %v3033 = vrot.slane %v3031, 4
        %v3034 = vor.u32 %v3033, %v3029
        %v3035 = vrot.slane %v3034, 4
        %v3037 = vshll.u32 %v2947, 16
        %v3039 = vrot.slane %v3037, 5
        %v3040 = vsel %vm958, %v3035, %v3039
        %v3042 = vshrl.u32 %v2948, 16
        %v3044 = vrot.slane %v3042, 4
        %v3045 = vshll.u32 %v2948, 16
        %v3047 = vrot.slane %v3045, 5
        %v3048 = vor.u32 %v3044, %v3047
        %v3049 = vrot.slane %v3048, 4
        %v3051 = vshll.u32 %v2949, 16
        %v3053 = vrot.slane %v3051, 5
        %v3054 = vsel %vm958, %v3049, %v3053
        %v3055 = vshrl.u32 %v2949, 16
        %v3057 = vrot.slane %v3055, 4
        %v3058 = vor.u32 %v3057, %v3053
        %v3059 = vrot.slane %v3058, 4
        %v3061 = vshll.u32 %v2950, 16
        %v3063 = vrot.slane %v3061, 5
        %v3064 = vsel %vm958, %v3059, %v3063
        %v3066 = vshrl.u32 %v2951, 16
        %v3068 = vrot.slane %v3066, 4
        %v3069 = vshll.u32 %v2951, 16
        %v3071 = vrot.slane %v3069, 5
        %v3072 = vor.u32 %v3068, %v3071
        %v3073 = vrot.slane %v3072, 4
        %v3075 = vshll.u32 %v2952, 16
        %v3077 = vrot.slane %v3075, 5
        %v3078 = vsel %vm958, %v3073, %v3077
        %v3079 = vshrl.u32 %v2952, 16
        %v3081 = vrot.slane %v3079, 4
        %v3082 = vor.u32 %v3081, %v3077
        %v3083 = vrot.slane %v3082, 4
        %v3085 = vshll.u32 %v2953, 16
        %v3087 = vrot.slane %v3085, 5
        %v3088 = vsel %vm958, %v3083, %v3087
        %v3090 = vshrl.u32 %v2954, 16
        %v3092 = vrot.slane %v3090, 4
        %v3093 = vshll.u32 %v2954, 16
        %v3095 = vrot.slane %v3093, 5
        %v3096 = vor.u32 %v3092, %v3095
        %v3097 = vrot.slane %v3096, 4
        %v3099 = vshll.u32 %v2955, 16
        %v3101 = vrot.slane %v3099, 5
        %v3102 = vsel %vm958, %v3097, %v3101
        %v3103 = vshrl.u32 %v2955, 16
        %v3105 = vrot.slane %v3103, 4
        %v3106 = vor.u32 %v3105, %v3101
        %v3107 = vrot.slane %v3106, 4
        %v3109 = vshll.u32 %v2956, 16
        %v3111 = vrot.slane %v3109, 5
        %v3112 = vsel %vm958, %v3107, %v3111
        %v3114 = vshrl.u32 %v2957, 16
        %v3116 = vrot.slane %v3114, 4
        %v3117 = vshll.u32 %v2957, 16
        %v3119 = vrot.slane %v3117, 5
        %v3120 = vor.u32 %v3116, %v3119
        %v3121 = vrot.slane %v3120, 4
        %v3123 = vshll.u32 %v2958, 16
        %v3125 = vrot.slane %v3123, 5
        %v3126 = vsel %vm958, %v3121, %v3125
        %v3127 = vshrl.u32 %v2958, 16
        %v3129 = vrot.slane %v3127, 4
        %v3130 = vor.u32 %v3129, %v3125
        %v3131 = vrot.slane %v3130, 4
        %v3133 = vshll.u32 %v2959, 16
        %v3135 = vrot.slane %v3133, 5
        %v3136 = vsel %vm958, %v3131, %v3135
        %v3138 = vshrl.u32 %v2960, 16
        %v3140 = vrot.slane %v3138, 4
        %v3141 = vshll.u32 %v2960, 16
        %v3143 = vrot.slane %v3141, 5
        %v3144 = vor.u32 %v3140, %v3143
        %v3145 = vrot.slane %v3144, 4
        %v3147 = vshll.u32 %v2961, 16
        %v3149 = vrot.slane %v3147, 5
        %v3150 = vsel %vm958, %v3145, %v3149
        %v3151 = vshrl.u32 %v2961, 16
        %v3153 = vrot.slane %v3151, 4
        %v3154 = vor.u32 %v3153, %v3149
        %v3155 = vrot.slane %v3154, 4
        %v3157 = vshll.u32 %v2962, 16
        %v3159 = vrot.slane %v3157, 5
        %v3160 = vsel %vm958, %v3155, %v3159
        %v3162 = vshrl.u32 %v2963, 16
        %v3164 = vrot.slane %v3162, 4
        %v3165 = vshll.u32 %v2963, 16
        %v3167 = vrot.slane %v3165, 5
        %v3168 = vor.u32 %v3164, %v3167
        %v3169 = vrot.slane %v3168, 4
        %v3171 = vshll.u32 %v2964, 16
        %v3173 = vrot.slane %v3171, 5
        %v3174 = vsel %vm958, %v3169, %v3173
        %v3175 = vshrl.u32 %v2964, 16
        %v3177 = vrot.slane %v3175, 4
        %v3178 = vor.u32 %v3177, %v3173
        %v3179 = vrot.slane %v3178, 4
        %v3181 = vshll.u32 %v2965, 16
        %v3183 = vrot.slane %v3181, 5
        %v3184 = vsel %vm958, %v3179, %v3183
        %v3186 = vshrl.u32 %v2966, 16
        %v3188 = vrot.slane %v3186, 4
        %v3189 = vshll.u32 %v2966, 16
        %v3191 = vrot.slane %v3189, 5
        %v3192 = vor.u32 %v3188, %v3191
        %v3193 = vrot.slane %v3192, 4
        %v3195 = vshll.u32 %v2967, 16
        %v3197 = vrot.slane %v3195, 5
        %v3198 = vsel %vm958, %v3193, %v3197
        %v3199 = vshrl.u32 %v2967, 16
        %v3201 = vrot.slane %v3199, 4
        %v3202 = vor.u32 %v3201, %v3197
        %v3203 = vrot.slane %v3202, 4
        %v3205 = vshll.u32 %v2968, 16
        %v3207 = vrot.slane %v3205, 5
        %v3208 = vsel %vm958, %v3203, %v3207
        %s3209 = scalar_lea.vmem %s3, 224
        %v3210 = vld [vmem:[%s3209] sm:$0xf]
        %v3211 = vld [vmem:[%s3209 + $0x4] sm:$0xf]
        %v3212 = vld [vmem:[%s3209 + $0x8] sm:$0xf]
        %v3213 = vld [vmem:[%s3209 + $0xc] sm:$0xf]
        %v3214 = vld [vmem:[%s3209 + $0x10] sm:$0xf]
        %v3215 = vld [vmem:[%s3209 + $0x14] sm:$0xf]
        %v3216 = vld [vmem:[%s3209 + $0x18] sm:$0xf]
        %v3217 = vld [vmem:[%s3209 + $0x1c] sm:$0xf]
        %v3218 = vunpack.c.l.b16 %v2982
        %v3219 = vunpack.c.l.b16 %v2992
        %v3220 = vunpack.c.l.b16 %v3006
        %v3221 = vunpack.c.l.b16 %v3016
        %v3222 = vunpack.c.l.b16 %v3030
        %v3223 = vunpack.c.l.b16 %v3040
        %v3224 = vunpack.c.l.b16 %v3054
        %v3225 = vunpack.c.l.b16 %v3064
        %v3226 = vunpack.c.l.b16 %v3078
        %v3227 = vunpack.c.l.b16 %v3088
        %v3228 = vunpack.c.l.b16 %v3102
        %v3229 = vunpack.c.l.b16 %v3112
        %v3230 = vunpack.c.l.b16 %v3126
        %v3231 = vunpack.c.l.b16 %v3136
        %v3232 = vunpack.c.l.b16 %v3150
        %v3233 = vunpack.c.l.b16 %v3160
        %v3234 = vunpack.c.l.b16 %v3174
        %v3235 = vunpack.c.l.b16 %v3184
        %v3236 = vunpack.c.l.b16 %v3198
        %v3237 = vunpack.c.l.b16 %v3208
        %v3238 = vpack.c.b16 %v3219, %v3218
        %v3239 = vpack.c.b16 %v3221, %v3220
        %v3240 = vpack.c.b16 %v3223, %v3222
        %v3241 = vpack.c.b16 %v3225, %v3224
        %v3242 = vpack.c.b16 %v3227, %v3226
        %v3243 = vpack.c.b16 %v3229, %v3228
        %v3244 = vpack.c.b16 %v3231, %v3230
        %v3245 = vpack.c.b16 %v3233, %v3232
        %v3246 = vpack.c.b16 %v3235, %v3234
        %v3247 = vpack.c.b16 %v3237, %v3236
        %v3256 = vunpack.c.l.b16 %v3210
        %v3257 = vunpack.c.l.b16 %v3211
        %v3258 = vunpack.c.l.b16 %v3212
        %v3259 = vunpack.c.l.b16 %v3213
        %v3260 = vunpack.c.l.b16 %v3214
        %v3261 = vunpack.c.l.b16 %v3215
        %v3262 = vunpack.c.l.b16 %v3216
        %v3263 = vunpack.c.l.b16 %v3217
        %v3264 = vpack.c.b16 %v3257, %v3256
        %v3265 = vpack.c.b16 %v3259, %v3258
        %v3266 = vpack.c.b16 %v3261, %v3260
        %v3267 = vpack.c.b16 %v3263, %v3262
        %v3273 = vsel %vm1262, %v3238, 0
        %v3276 = vsel %vm1262, %v3239, 0
        %v3279 = vsel %vm1262, %v3240, 0
        %v3282 = vsel %vm1262, %v3241, 0
        %v3285 = vsel %vm1262, %v3242, 0
        %v3288 = vsel %vm1262, %v3243, 0
        %v3291 = vsel %vm1262, %v3244, 0
        %v3294 = vsel %vm1262, %v3245, 0
        %v3297 = vsel %vm1262, %v3246, 0
        %v3300 = vsel %vm1262, %v3247, 0
        %3302 = vmatpush.bf16.msra.mxu0 0
        %3303 = vmatpush.bf16.msra.mxu0 0
        %3304 = vmatpush.bf16.msra.mxu0 0
        %3305 = vmatpush.bf16.msra.mxu0 0
        %3306 = vmatpush.bf16.msra.mxu0 %v3267
        %3307 = vmatpush.bf16.msra.mxu0 %v3266
        %3308 = vmatpush.bf16.msra.mxu0 %v3265
        %3309 = vmatpush.bf16.msra.mxu0 %v3264
        %3310 = vmatmul.bf16.gmra.mxu0 %v3273
        %v3311 = vpop.f32.mrf.mxu0
        %v3312 = vadd.f32 0.0, %v3311
        %v3313 = vpop.f32.mrf.mxu0
        %v3314 = vadd.f32 0.0, %v3313
        %3315 = vmatmul.bf16.gmra.mxu0 %v3276
        %v3316 = vpop.f32.mrf.mxu0
        %v3317 = vadd.f32 0.0, %v3316
        %v3318 = vpop.f32.mrf.mxu0
        %v3319 = vadd.f32 0.0, %v3318
        %3320 = vmatmul.bf16.gmra.mxu0 %v3279
        %v3321 = vpop.f32.mrf.mxu0
        %v3322 = vadd.f32 0.0, %v3321
        %v3323 = vpop.f32.mrf.mxu0
        %v3324 = vadd.f32 0.0, %v3323
        %3325 = vmatmul.bf16.gmra.mxu0 %v3282
        %v3326 = vpop.f32.mrf.mxu0
        %v3327 = vadd.f32 0.0, %v3326
        %v3328 = vpop.f32.mrf.mxu0
        %v3329 = vadd.f32 0.0, %v3328
        %3330 = vmatmul.bf16.gmra.mxu0 %v3285
        %v3331 = vpop.f32.mrf.mxu0
        %v3332 = vadd.f32 0.0, %v3331
        %v3333 = vpop.f32.mrf.mxu0
        %v3334 = vadd.f32 0.0, %v3333
        %3335 = vmatmul.bf16.gmra.mxu0 %v3288
        %v3336 = vpop.f32.mrf.mxu0
        %v3337 = vadd.f32 0.0, %v3336
        %v3338 = vpop.f32.mrf.mxu0
        %v3339 = vadd.f32 0.0, %v3338
        %3340 = vmatmul.bf16.gmra.mxu0 %v3291
        %v3341 = vpop.f32.mrf.mxu0
        %v3342 = vadd.f32 0.0, %v3341
        %v3343 = vpop.f32.mrf.mxu0
        %v3344 = vadd.f32 0.0, %v3343
        %3345 = vmatmul.bf16.gmra.mxu0 %v3294
        %v3346 = vpop.f32.mrf.mxu0
        %v3347 = vadd.f32 0.0, %v3346
        %v3348 = vpop.f32.mrf.mxu0
        %v3349 = vadd.f32 0.0, %v3348
        %3350 = vmatmul.bf16.gmra.mxu0 %v3297
        %v3351 = vpop.f32.mrf.mxu0
        %v3352 = vadd.f32 0.0, %v3351
        %v3353 = vpop.f32.mrf.mxu0
        %v3354 = vadd.f32 0.0, %v3353
        %3355 = vmatmul.bf16.gmra.mxu0 %v3300
        %v3356 = vpop.f32.mrf.mxu0
        %v3357 = vadd.f32 0.0, %v3356
        %v3358 = vpop.f32.mrf.mxu0
        %v3359 = vadd.f32 0.0, %v3358
        %3360 = vdwg.mxu0
        %v3361 = vadd.f32 %v2919, %v3312
        %v3362 = vadd.f32 %v2920, %v3314
        %v3363 = vadd.f32 %v2921, %v3317
        %v3364 = vadd.f32 %v2922, %v3319
        %v3365 = vadd.f32 %v2923, %v3322
        %v3366 = vadd.f32 %v2924, %v3324
        %v3367 = vadd.f32 %v2925, %v3327
        %v3368 = vadd.f32 %v2926, %v3329
        %v3369 = vadd.f32 %v2927, %v3332
        %v3370 = vadd.f32 %v2928, %v3334
        %v3371 = vadd.f32 %v2929, %v3337
        %v3372 = vadd.f32 %v2930, %v3339
        %v3373 = vadd.f32 %v2931, %v3342
        %v3374 = vadd.f32 %v2932, %v3344
        %v3375 = vadd.f32 %v2933, %v3347
        %v3376 = vadd.f32 %v2934, %v3349
        %v3377 = vadd.f32 %v2935, %v3352
        %v3378 = vadd.f32 %v2936, %v3354
        %v3379 = vadd.f32 %v2937, %v3357
        %v3380 = vadd.f32 %v2938, %v3359
        %v3381 = vld [vmem:[%s806] sm:$0xe]
        %v3382 = vld [vmem:[%s806 + $0xc] sm:$0xe]
        %v3383 = vld [vmem:[%s806 + $0x18] sm:$0xe]
        %v3384 = vld [vmem:[%s806 + $0x24] sm:$0xe]
        %v3385 = vld [vmem:[%s806 + $0x30] sm:$0xe]
        %v3386 = vld [vmem:[%s806 + $0x3c] sm:$0xe]
        %v3387 = vld [vmem:[%s806 + $0x48] sm:$0xe]
        %v3388 = vld [vmem:[%s806 + $0x54] sm:$0xe]
        %v3389 = vld [vmem:[%s806 + $0x60] sm:$0xe]
        %v3390 = vld [vmem:[%s806 + $0x6c] sm:$0xe]
        %v3421 = vrot.slane %v3381, 5
        %v3422 = vrot.slane %v3421, 4
        %v3423 = vrot.slane %v2940, 5
        %v3424 = vsel %vm1547, %v3422, %v3423
        %v3425 = vrot.slane %v3423, 4
        %v3426 = vrot.slane %v2941, 5
        %v3427 = vsel %vm1547, %v3425, %v3426
        %v3428 = vrot.slane %v3382, 5
        %v3429 = vrot.slane %v3428, 4
        %v3430 = vrot.slane %v2943, 5
        %v3431 = vsel %vm1547, %v3429, %v3430
        %v3432 = vrot.slane %v3430, 4
        %v3433 = vrot.slane %v2944, 5
        %v3434 = vsel %vm1547, %v3432, %v3433
        %v3435 = vrot.slane %v3383, 5
        %v3436 = vrot.slane %v3435, 4
        %v3437 = vrot.slane %v2946, 5
        %v3438 = vsel %vm1547, %v3436, %v3437
        %v3439 = vrot.slane %v3437, 4
        %v3440 = vrot.slane %v2947, 5
        %v3441 = vsel %vm1547, %v3439, %v3440
        %v3442 = vrot.slane %v3384, 5
        %v3443 = vrot.slane %v3442, 4
        %v3444 = vrot.slane %v2949, 5
        %v3445 = vsel %vm1547, %v3443, %v3444
        %v3446 = vrot.slane %v3444, 4
        %v3447 = vrot.slane %v2950, 5
        %v3448 = vsel %vm1547, %v3446, %v3447
        %v3449 = vrot.slane %v3385, 5
        %v3450 = vrot.slane %v3449, 4
        %v3451 = vrot.slane %v2952, 5
        %v3452 = vsel %vm1547, %v3450, %v3451
        %v3453 = vrot.slane %v3451, 4
        %v3454 = vrot.slane %v2953, 5
        %v3455 = vsel %vm1547, %v3453, %v3454
        %v3456 = vrot.slane %v3386, 5
        %v3457 = vrot.slane %v3456, 4
        %v3458 = vrot.slane %v2955, 5
        %v3459 = vsel %vm1547, %v3457, %v3458
        %v3460 = vrot.slane %v3458, 4
        %v3461 = vrot.slane %v2956, 5
        %v3462 = vsel %vm1547, %v3460, %v3461
        %v3463 = vrot.slane %v3387, 5
        %v3464 = vrot.slane %v3463, 4
        %v3465 = vrot.slane %v2958, 5
        %v3466 = vsel %vm1547, %v3464, %v3465
        %v3467 = vrot.slane %v3465, 4
        %v3468 = vrot.slane %v2959, 5
        %v3469 = vsel %vm1547, %v3467, %v3468
        %v3470 = vrot.slane %v3388, 5
        %v3471 = vrot.slane %v3470, 4
        %v3472 = vrot.slane %v2961, 5
        %v3473 = vsel %vm1547, %v3471, %v3472
        %v3474 = vrot.slane %v3472, 4
        %v3475 = vrot.slane %v2962, 5
        %v3476 = vsel %vm1547, %v3474, %v3475
        %v3477 = vrot.slane %v3389, 5
        %v3478 = vrot.slane %v3477, 4
        %v3479 = vrot.slane %v2964, 5
        %v3480 = vsel %vm1547, %v3478, %v3479
        %v3481 = vrot.slane %v3479, 4
        %v3482 = vrot.slane %v2965, 5
        %v3483 = vsel %vm1547, %v3481, %v3482
        %v3484 = vrot.slane %v3390, 5
        %v3485 = vrot.slane %v3484, 4
        %v3486 = vrot.slane %v2967, 5
        %v3487 = vsel %vm1547, %v3485, %v3486
        %v3488 = vrot.slane %v3486, 4
        %v3489 = vrot.slane %v2968, 5
        %v3490 = vsel %vm1547, %v3488, %v3489
        %s3491 = scalar_lea.vmem %s3, 256
        %v3492 = vld [vmem:[%s3491] sm:$0xf]
        %v3493 = vld [vmem:[%s3491 + $0x4] sm:$0xf]
        %v3494 = vld [vmem:[%s3491 + $0x8] sm:$0xf]
        %v3495 = vld [vmem:[%s3491 + $0xc] sm:$0xf]
        %v3496 = vld [vmem:[%s3491 + $0x10] sm:$0xf]
        %v3497 = vld [vmem:[%s3491 + $0x14] sm:$0xf]
        %v3498 = vld [vmem:[%s3491 + $0x18] sm:$0xf]
        %v3499 = vld [vmem:[%s3491 + $0x1c] sm:$0xf]
        %v3500 = vunpack.c.l.b16 %v3424
        %v3501 = vunpack.c.l.b16 %v3427
        %v3502 = vunpack.c.l.b16 %v3431
        %v3503 = vunpack.c.l.b16 %v3434
        %v3504 = vunpack.c.l.b16 %v3438
        %v3505 = vunpack.c.l.b16 %v3441
        %v3506 = vunpack.c.l.b16 %v3445
        %v3507 = vunpack.c.l.b16 %v3448
        %v3508 = vunpack.c.l.b16 %v3452
        %v3509 = vunpack.c.l.b16 %v3455
        %v3510 = vunpack.c.l.b16 %v3459
        %v3511 = vunpack.c.l.b16 %v3462
        %v3512 = vunpack.c.l.b16 %v3466
        %v3513 = vunpack.c.l.b16 %v3469
        %v3514 = vunpack.c.l.b16 %v3473
        %v3515 = vunpack.c.l.b16 %v3476
        %v3516 = vunpack.c.l.b16 %v3480
        %v3517 = vunpack.c.l.b16 %v3483
        %v3518 = vunpack.c.l.b16 %v3487
        %v3519 = vunpack.c.l.b16 %v3490
        %v3520 = vpack.c.b16 %v3501, %v3500
        %v3521 = vpack.c.b16 %v3503, %v3502
        %v3522 = vpack.c.b16 %v3505, %v3504
        %v3523 = vpack.c.b16 %v3507, %v3506
        %v3524 = vpack.c.b16 %v3509, %v3508
        %v3525 = vpack.c.b16 %v3511, %v3510
        %v3526 = vpack.c.b16 %v3513, %v3512
        %v3527 = vpack.c.b16 %v3515, %v3514
        %v3528 = vpack.c.b16 %v3517, %v3516
        %v3529 = vpack.c.b16 %v3519, %v3518
        %v3538 = vunpack.c.l.b16 %v3492
        %v3539 = vunpack.c.l.b16 %v3493
        %v3540 = vunpack.c.l.b16 %v3494
        %v3541 = vunpack.c.l.b16 %v3495
        %v3542 = vunpack.c.l.b16 %v3496
        %v3543 = vunpack.c.l.b16 %v3497
        %v3544 = vunpack.c.l.b16 %v3498
        %v3545 = vunpack.c.l.b16 %v3499
        %v3546 = vpack.c.b16 %v3539, %v3538
        %v3547 = vpack.c.b16 %v3541, %v3540
        %v3548 = vpack.c.b16 %v3543, %v3542
        %v3549 = vpack.c.b16 %v3545, %v3544
        %v3555 = vsel %vm1262, %v3520, 0
        %v3558 = vsel %vm1262, %v3521, 0
        %v3561 = vsel %vm1262, %v3522, 0
        %v3564 = vsel %vm1262, %v3523, 0
        %v3567 = vsel %vm1262, %v3524, 0
        %v3570 = vsel %vm1262, %v3525, 0
        %v3573 = vsel %vm1262, %v3526, 0
        %v3576 = vsel %vm1262, %v3527, 0
        %v3579 = vsel %vm1262, %v3528, 0
        %v3582 = vsel %vm1262, %v3529, 0
        %3584 = vmatpush.bf16.msra.mxu0 0
        %3585 = vmatpush.bf16.msra.mxu0 0
        %3586 = vmatpush.bf16.msra.mxu0 0
        %3587 = vmatpush.bf16.msra.mxu0 0
        %3588 = vmatpush.bf16.msra.mxu0 %v3549
        %3589 = vmatpush.bf16.msra.mxu0 %v3548
        %3590 = vmatpush.bf16.msra.mxu0 %v3547
        %3591 = vmatpush.bf16.msra.mxu0 %v3546
        %3592 = vmatmul.bf16.gmra.mxu0 %v3555
        %v3593 = vpop.f32.mrf.mxu0
        %v3594 = vadd.f32 0.0, %v3593
        %v3595 = vpop.f32.mrf.mxu0
        %v3596 = vadd.f32 0.0, %v3595
        %3597 = vmatmul.bf16.gmra.mxu0 %v3558
        %v3598 = vpop.f32.mrf.mxu0
        %v3599 = vadd.f32 0.0, %v3598
        %v3600 = vpop.f32.mrf.mxu0
        %v3601 = vadd.f32 0.0, %v3600
        %3602 = vmatmul.bf16.gmra.mxu0 %v3561
        %v3603 = vpop.f32.mrf.mxu0
        %v3604 = vadd.f32 0.0, %v3603
        %v3605 = vpop.f32.mrf.mxu0
        %v3606 = vadd.f32 0.0, %v3605
        %3607 = vmatmul.bf16.gmra.mxu0 %v3564
        %v3608 = vpop.f32.mrf.mxu0
        %v3609 = vadd.f32 0.0, %v3608
        %v3610 = vpop.f32.mrf.mxu0
        %v3611 = vadd.f32 0.0, %v3610
        %3612 = vmatmul.bf16.gmra.mxu0 %v3567
        %v3613 = vpop.f32.mrf.mxu0
        %v3614 = vadd.f32 0.0, %v3613
        %v3615 = vpop.f32.mrf.mxu0
        %v3616 = vadd.f32 0.0, %v3615
        %3617 = vmatmul.bf16.gmra.mxu0 %v3570
        %v3618 = vpop.f32.mrf.mxu0
        %v3619 = vadd.f32 0.0, %v3618
        %v3620 = vpop.f32.mrf.mxu0
        %v3621 = vadd.f32 0.0, %v3620
        %3622 = vmatmul.bf16.gmra.mxu0 %v3573
        %v3623 = vpop.f32.mrf.mxu0
        %v3624 = vadd.f32 0.0, %v3623
        %v3625 = vpop.f32.mrf.mxu0
        %v3626 = vadd.f32 0.0, %v3625
        %3627 = vmatmul.bf16.gmra.mxu0 %v3576
        %v3628 = vpop.f32.mrf.mxu0
        %v3629 = vadd.f32 0.0, %v3628
        %v3630 = vpop.f32.mrf.mxu0
        %v3631 = vadd.f32 0.0, %v3630
        %3632 = vmatmul.bf16.gmra.mxu0 %v3579
        %v3633 = vpop.f32.mrf.mxu0
        %v3634 = vadd.f32 0.0, %v3633
        %v3635 = vpop.f32.mrf.mxu0
        %v3636 = vadd.f32 0.0, %v3635
        %3637 = vmatmul.bf16.gmra.mxu0 %v3582
        %v3638 = vpop.f32.mrf.mxu0
        %v3639 = vadd.f32 0.0, %v3638
        %v3640 = vpop.f32.mrf.mxu0
        %v3641 = vadd.f32 0.0, %v3640
        %3642 = vdwg.mxu0
        %v3643 = vadd.f32 %v3361, %v3594
        %v3644 = vadd.f32 %v3362, %v3596
        %v3645 = vadd.f32 %v3363, %v3599
        %v3646 = vadd.f32 %v3364, %v3601
        %v3647 = vadd.f32 %v3365, %v3604
        %v3648 = vadd.f32 %v3366, %v3606
        %v3649 = vadd.f32 %v3367, %v3609
        %v3650 = vadd.f32 %v3368, %v3611
        %v3651 = vadd.f32 %v3369, %v3614
        %v3652 = vadd.f32 %v3370, %v3616
        %v3653 = vadd.f32 %v3371, %v3619
        %v3654 = vadd.f32 %v3372, %v3621
        %v3655 = vadd.f32 %v3373, %v3624
        %v3656 = vadd.f32 %v3374, %v3626
        %v3657 = vadd.f32 %v3375, %v3629
        %v3658 = vadd.f32 %v3376, %v3631
        %v3659 = vadd.f32 %v3377, %v3634
        %v3660 = vadd.f32 %v3378, %v3636
        %v3661 = vadd.f32 %v3379, %v3639
        %v3662 = vadd.f32 %v3380, %v3641
        %v3663 = vld [vmem:[%s4] sm:$0x1]
        %v3665 = vperm.slane %v3663, 0
        %v3667 = vadd.f32 %v3643, %v3665
        %v3668 = vadd.f32 %v3644, %v3665
        %v3669 = vadd.f32 %v3645, %v3665
        %v3670 = vadd.f32 %v3646, %v3665
        %v3671 = vadd.f32 %v3647, %v3665
        %v3672 = vadd.f32 %v3648, %v3665
        %v3673 = vadd.f32 %v3649, %v3665
        %v3674 = vadd.f32 %v3650, %v3665
        %v3675 = vadd.f32 %v3651, %v3665
        %v3676 = vadd.f32 %v3652, %v3665
        %v3677 = vadd.f32 %v3653, %v3665
        %v3678 = vadd.f32 %v3654, %v3665
        %v3679 = vadd.f32 %v3655, %v3665
        %v3680 = vadd.f32 %v3656, %v3665
        %v3681 = vadd.f32 %v3657, %v3665
        %v3682 = vadd.f32 %v3658, %v3665
        %v3683 = vadd.f32 %v3659, %v3665
        %v3684 = vadd.f32 %v3660, %v3665
        %v3685 = vadd.f32 %v3661, %v3665
        %v3686 = vadd.f32 %v3662, %v3665
        %v3687 = vmax.f32 %v3667, 0.0
        %v3688 = vmax.f32 %v3668, 0.0
        %v3689 = vmax.f32 %v3669, 0.0
        %v3690 = vmax.f32 %v3670, 0.0
        %v3691 = vmax.f32 %v3671, 0.0
        %v3692 = vmax.f32 %v3672, 0.0
        %v3693 = vmax.f32 %v3673, 0.0
        %v3694 = vmax.f32 %v3674, 0.0
        %v3695 = vmax.f32 %v3675, 0.0
        %v3696 = vmax.f32 %v3676, 0.0
        %v3697 = vmax.f32 %v3677, 0.0
        %v3698 = vmax.f32 %v3678, 0.0
        %v3699 = vmax.f32 %v3679, 0.0
        %v3700 = vmax.f32 %v3680, 0.0
        %v3701 = vmax.f32 %v3681, 0.0
        %v3702 = vmax.f32 %v3682, 0.0
        %v3703 = vmax.f32 %v3683, 0.0
        %v3704 = vmax.f32 %v3684, 0.0
        %v3705 = vmax.f32 %v3685, 0.0
        %v3706 = vmax.f32 %v3686, 0.0
        %s3707 = smul.u32 %s26, 8
        %s3708 = ssub.s32 %s3707, 1
        %v3709 = vstv %s3708
        %v3710 = vadd.s32 %v3709, 1
        %v3711 = vadd.s32 %v3709, 2
        %v3712 = vadd.s32 %v3709, 3
        %v3713 = vadd.s32 %v3709, 4
        %v3714 = vadd.s32 %v3709, 5
        %v3715 = vadd.s32 %v3709, 6
        %v3716 = vadd.s32 %v3709, 7
        %v3717 = vadd.s32 %v3709, 8
        %v3718 = vadd.s32 %v3709, 9
        %vm3719 = vcmp.ge.s32.totalorder %v3709, 0
        %vm3720 = vcmp.ge.s32.totalorder %v3710, 0
        %vm3721 = vcmp.ge.s32.totalorder %v3711, 0
        %vm3722 = vcmp.ge.s32.totalorder %v3712, 0
        %vm3723 = vcmp.ge.s32.totalorder %v3713, 0
        %vm3724 = vcmp.ge.s32.totalorder %v3714, 0
        %vm3725 = vcmp.ge.s32.totalorder %v3715, 0
        %vm3726 = vcmp.ge.s32.totalorder %v3716, 0
        %vm3727 = vcmp.ge.s32.totalorder %v3717, 0
        %vm3728 = vcmp.ge.s32.totalorder %v3718, 0
        %vm3729 = vcmp.lt.s32.totalorder %v3709, 16
        %vm3730 = vcmp.lt.s32.totalorder %v3710, 16
        %vm3731 = vcmp.lt.s32.totalorder %v3711, 16
        %vm3732 = vcmp.lt.s32.totalorder %v3712, 16
        %vm3733 = vcmp.lt.s32.totalorder %v3713, 16
        %vm3734 = vcmp.lt.s32.totalorder %v3714, 16
        %vm3735 = vcmp.lt.s32.totalorder %v3715, 16
        %vm3736 = vcmp.lt.s32.totalorder %v3716, 16
        %vm3737 = vcmp.lt.s32.totalorder %v3717, 16
        %vm3738 = vcmp.lt.s32.totalorder %v3718, 16
        %vm3739 = vmand %vm3719, %vm3729
        %vm3740 = vmand %vm3720, %vm3730
        %vm3741 = vmand %vm3721, %vm3731
        %vm3742 = vmand %vm3722, %vm3732
        %vm3743 = vmand %vm3723, %vm3733
        %vm3744 = vmand %vm3724, %vm3734
        %vm3745 = vmand %vm3725, %vm3735
        %vm3746 = vmand %vm3726, %vm3736
        %vm3747 = vmand %vm3727, %vm3737
        %vm3748 = vmand %vm3728, %vm3738
        %v3749 = vsel %vm3739, 1, 0
        %v3750 = vsel %vm3740, 1, 0
        %v3751 = vsel %vm3741, 1, 0
        %v3752 = vsel %vm3742, 1, 0
        %v3753 = vsel %vm3743, 1, 0
        %v3754 = vsel %vm3744, 1, 0
        %v3755 = vsel %vm3745, 1, 0
        %v3756 = vsel %vm3746, 1, 0
        %v3757 = vsel %vm3747, 1, 0
        %v3758 = vsel %vm3748, 1, 0
        %vm3759 = vcmp.eq.s32.totalorder %v3749, 1
        %vm3760 = vcmp.eq.s32.totalorder %v3750, 1
        %vm3761 = vcmp.eq.s32.totalorder %v3751, 1
        %vm3762 = vcmp.eq.s32.totalorder %v3752, 1
        %vm3763 = vcmp.eq.s32.totalorder %v3753, 1
        %vm3764 = vcmp.eq.s32.totalorder %v3754, 1
        %vm3765 = vcmp.eq.s32.totalorder %v3755, 1
        %vm3766 = vcmp.eq.s32.totalorder %v3756, 1
        %vm3767 = vcmp.eq.s32.totalorder %v3757, 1
        %vm3768 = vcmp.eq.s32.totalorder %v3758, 1
        %v3769 = vsel %vm3759, %v3687, 0.0
        %v3770 = vsel %vm3759, %v3688, 0.0
        %v3771 = vsel %vm3760, %v3689, 0.0
        %v3772 = vsel %vm3760, %v3690, 0.0
        %v3773 = vsel %vm3761, %v3691, 0.0
        %v3774 = vsel %vm3761, %v3692, 0.0
        %v3775 = vsel %vm3762, %v3693, 0.0
        %v3776 = vsel %vm3762, %v3694, 0.0
        %v3777 = vsel %vm3763, %v3695, 0.0
        %v3778 = vsel %vm3763, %v3696, 0.0
        %v3779 = vsel %vm3764, %v3697, 0.0
        %v3780 = vsel %vm3764, %v3698, 0.0
        %v3781 = vsel %vm3765, %v3699, 0.0
        %v3782 = vsel %vm3765, %v3700, 0.0
        %v3783 = vsel %vm3766, %v3701, 0.0
        %v3784 = vsel %vm3766, %v3702, 0.0
        %v3785 = vsel %vm3767, %v3703, 0.0
        %v3786 = vsel %vm3767, %v3704, 0.0
        %v3787 = vsel %vm3768, %v3705, 0.0
        %v3788 = vsel %vm3768, %v3706, 0.0
        %v3789 = vld [vmem:[#allocation3] sm:$0x1]
        %v3790 = vsel %vm496, 0, %v3789
        %3791 = vst [vmem:[#allocation3] sm:$0x1] %v3790
        %v3792 = vld [vmem:[#allocation3 + $0xc] sm:$0x1]
        %v3793 = vsel %vm496, 0, %v3792
        %3794 = vst [vmem:[#allocation3 + $0xc] sm:$0x1] %v3793
        %v3795 = vld [vmem:[#allocation3 + $0x18] sm:$0x1]
        %v3796 = vsel %vm496, 0, %v3795
        %3797 = vst [vmem:[#allocation3 + $0x18] sm:$0x1] %v3796
        %v3798 = vld [vmem:[#allocation3 + $0x24] sm:$0x1]
        %v3799 = vsel %vm496, 0, %v3798
        %3800 = vst [vmem:[#allocation3 + $0x24] sm:$0x1] %v3799
        %v3801 = vld [vmem:[#allocation3 + $0x30] sm:$0x1]
        %v3802 = vsel %vm496, 0, %v3801
        %3803 = vst [vmem:[#allocation3 + $0x30] sm:$0x1] %v3802
        %v3804 = vld [vmem:[#allocation3 + $0x3c] sm:$0x1]
        %v3805 = vsel %vm496, 0, %v3804
        %3806 = vst [vmem:[#allocation3 + $0x3c] sm:$0x1] %v3805
        %v3807 = vld [vmem:[#allocation3 + $0x48] sm:$0x1]
        %v3808 = vsel %vm496, 0, %v3807
        %3809 = vst [vmem:[#allocation3 + $0x48] sm:$0x1] %v3808
        %v3810 = vld [vmem:[#allocation3 + $0x54] sm:$0x1]
        %v3811 = vsel %vm496, 0, %v3810
        %3812 = vst [vmem:[#allocation3 + $0x54] sm:$0x1] %v3811
        %v3813 = vld [vmem:[#allocation3 + $0x60] sm:$0x1]
        %v3814 = vsel %vm496, 0, %v3813
        %3815 = vst [vmem:[#allocation3 + $0x60] sm:$0x1] %v3814
        %v3816 = vld [vmem:[#allocation3 + $0x6c] sm:$0x1]
        %v3817 = vsel %vm496, 0, %v3816
        %3818 = vst [vmem:[#allocation3 + $0x6c] sm:$0x1] %v3817
        %v3819 = vld [vmem:[#allocation3 + $0x8] sm:$0x1]
        %v3820 = vsel %vm534, 0, %v3819
        %3821 = vst [vmem:[#allocation3 + $0x8] sm:$0x1] %v3820
        %v3822 = vld [vmem:[#allocation3 + $0x14] sm:$0x1]
        %v3823 = vsel %vm534, 0, %v3822
        %3824 = vst [vmem:[#allocation3 + $0x14] sm:$0x1] %v3823
        %v3825 = vld [vmem:[#allocation3 + $0x20] sm:$0x1]
        %v3826 = vsel %vm534, 0, %v3825
        %3827 = vst [vmem:[#allocation3 + $0x20] sm:$0x1] %v3826
        %v3828 = vld [vmem:[#allocation3 + $0x2c] sm:$0x1]
        %v3829 = vsel %vm534, 0, %v3828
        %3830 = vst [vmem:[#allocation3 + $0x2c] sm:$0x1] %v3829
        %v3831 = vld [vmem:[#allocation3 + $0x38] sm:$0x1]
        %v3832 = vsel %vm534, 0, %v3831
        %3833 = vst [vmem:[#allocation3 + $0x38] sm:$0x1] %v3832
        %v3834 = vld [vmem:[#allocation3 + $0x44] sm:$0x1]
        %v3835 = vsel %vm534, 0, %v3834
        %3836 = vst [vmem:[#allocation3 + $0x44] sm:$0x1] %v3835
        %v3837 = vld [vmem:[#allocation3 + $0x50] sm:$0x1]
        %v3838 = vsel %vm534, 0, %v3837
        %3839 = vst [vmem:[#allocation3 + $0x50] sm:$0x1] %v3838
        %v3840 = vld [vmem:[#allocation3 + $0x5c] sm:$0x1]
        %v3841 = vsel %vm534, 0, %v3840
        %3842 = vst [vmem:[#allocation3 + $0x5c] sm:$0x1] %v3841
        %v3843 = vld [vmem:[#allocation3 + $0x68] sm:$0x1]
        %v3844 = vsel %vm534, 0, %v3843
        %3845 = vst [vmem:[#allocation3 + $0x68] sm:$0x1] %v3844
        %v3846 = vld [vmem:[#allocation3 + $0x74] sm:$0x1]
        %v3847 = vsel %vm534, 0, %v3846
        %3848 = vst [vmem:[#allocation3 + $0x74] sm:$0x1] %v3847
        %v3849 = vpack.c.bf16 %v3769, %v3769
        %v3850 = vpack.c.bf16 %v3770, %v3770
        %v3851 = vpack.c.bf16 %v3771, %v3771
        %v3852 = vpack.c.bf16 %v3772, %v3772
        %v3853 = vpack.c.bf16 %v3773, %v3773
        %v3854 = vpack.c.bf16 %v3774, %v3774
        %v3855 = vpack.c.bf16 %v3775, %v3775
        %v3856 = vpack.c.bf16 %v3776, %v3776
        %v3857 = vpack.c.bf16 %v3777, %v3777
        %v3858 = vpack.c.bf16 %v3778, %v3778
        %v3859 = vpack.c.bf16 %v3779, %v3779
        %v3860 = vpack.c.bf16 %v3780, %v3780
        %v3861 = vpack.c.bf16 %v3781, %v3781
        %v3862 = vpack.c.bf16 %v3782, %v3782
        %v3863 = vpack.c.bf16 %v3783, %v3783
        %v3864 = vpack.c.bf16 %v3784, %v3784
        %v3865 = vpack.c.bf16 %v3785, %v3785
        %v3866 = vpack.c.bf16 %v3786, %v3786
        %v3867 = vpack.c.bf16 %v3787, %v3787
        %v3868 = vpack.c.bf16 %v3788, %v3788
        %v3870 = vshrl.u32 %v3849, 16
        %v3872 = vrot.slane %v3870, 7
        %v3873 = vshll.u32 %v3849, 16
        %v3875 = vor.u32 %v3872, %v3873
        %v3876 = vrot.slane %v3872, 4
        %v3878 = vshrl.u32 %v3850, 16
        %v3880 = vrot.slane %v3878, 7
        %v3881 = vshll.u32 %v3850, 16
        %v3883 = vor.u32 %v3880, %v3881
        %v3884 = vsel %vm572, %v3876, %v3883
        %v3885 = vrot.slane %v3880, 4
        %v3887 = vshrl.u32 %v3851, 16
        %v3889 = vrot.slane %v3887, 7
        %v3890 = vshll.u32 %v3851, 16
        %v3892 = vor.u32 %v3889, %v3890
        %v3893 = vrot.slane %v3889, 4
        %v3895 = vshrl.u32 %v3852, 16
        %v3897 = vrot.slane %v3895, 7
        %v3898 = vshll.u32 %v3852, 16
        %v3900 = vor.u32 %v3897, %v3898
        %v3901 = vsel %vm572, %v3893, %v3900
        %v3902 = vrot.slane %v3897, 4
        %v3904 = vshrl.u32 %v3853, 16
        %v3906 = vrot.slane %v3904, 7
        %v3907 = vshll.u32 %v3853, 16
        %v3909 = vor.u32 %v3906, %v3907
        %v3910 = vrot.slane %v3906, 4
        %v3912 = vshrl.u32 %v3854, 16
        %v3914 = vrot.slane %v3912, 7
        %v3915 = vshll.u32 %v3854, 16
        %v3917 = vor.u32 %v3914, %v3915
        %v3918 = vsel %vm572, %v3910, %v3917
        %v3919 = vrot.slane %v3914, 4
        %v3921 = vshrl.u32 %v3855, 16
        %v3923 = vrot.slane %v3921, 7
        %v3924 = vshll.u32 %v3855, 16
        %v3926 = vor.u32 %v3923, %v3924
        %v3927 = vrot.slane %v3923, 4
        %v3929 = vshrl.u32 %v3856, 16
        %v3931 = vrot.slane %v3929, 7
        %v3932 = vshll.u32 %v3856, 16
        %v3934 = vor.u32 %v3931, %v3932
        %v3935 = vsel %vm572, %v3927, %v3934
        %v3936 = vrot.slane %v3931, 4
        %v3938 = vshrl.u32 %v3857, 16
        %v3940 = vrot.slane %v3938, 7
        %v3941 = vshll.u32 %v3857, 16
        %v3943 = vor.u32 %v3940, %v3941
        %v3944 = vrot.slane %v3940, 4
        %v3946 = vshrl.u32 %v3858, 16
        %v3948 = vrot.slane %v3946, 7
        %v3949 = vshll.u32 %v3858, 16
        %v3951 = vor.u32 %v3948, %v3949
        %v3952 = vsel %vm572, %v3944, %v3951
        %v3953 = vrot.slane %v3948, 4
        %v3955 = vshrl.u32 %v3859, 16
        %v3957 = vrot.slane %v3955, 7
        %v3958 = vshll.u32 %v3859, 16
        %v3960 = vor.u32 %v3957, %v3958
        %v3961 = vrot.slane %v3957, 4
        %v3963 = vshrl.u32 %v3860, 16
        %v3965 = vrot.slane %v3963, 7
        %v3966 = vshll.u32 %v3860, 16
        %v3968 = vor.u32 %v3965, %v3966
        %v3969 = vsel %vm572, %v3961, %v3968
        %v3970 = vrot.slane %v3965, 4
        %v3972 = vshrl.u32 %v3861, 16
        %v3974 = vrot.slane %v3972, 7
        %v3975 = vshll.u32 %v3861, 16
        %v3977 = vor.u32 %v3974, %v3975
        %v3978 = vrot.slane %v3974, 4
        %v3980 = vshrl.u32 %v3862, 16
        %v3982 = vrot.slane %v3980, 7
        %v3983 = vshll.u32 %v3862, 16
        %v3985 = vor.u32 %v3982, %v3983
        %v3986 = vsel %vm572, %v3978, %v3985
        %v3987 = vrot.slane %v3982, 4
        %v3989 = vshrl.u32 %v3863, 16
        %v3991 = vrot.slane %v3989, 7
        %v3992 = vshll.u32 %v3863, 16
        %v3994 = vor.u32 %v3991, %v3992
        %v3995 = vrot.slane %v3991, 4
        %v3997 = vshrl.u32 %v3864, 16
        %v3999 = vrot.slane %v3997, 7
        %v4000 = vshll.u32 %v3864, 16
        %v4002 = vor.u32 %v3999, %v4000
        %v4003 = vsel %vm572, %v3995, %v4002
        %v4004 = vrot.slane %v3999, 4
        %v4006 = vshrl.u32 %v3865, 16
        %v4008 = vrot.slane %v4006, 7
        %v4009 = vshll.u32 %v3865, 16
        %v4011 = vor.u32 %v4008, %v4009
        %v4012 = vrot.slane %v4008, 4
        %v4014 = vshrl.u32 %v3866, 16
        %v4016 = vrot.slane %v4014, 7
        %v4017 = vshll.u32 %v3866, 16
        %v4019 = vor.u32 %v4016, %v4017
        %v4020 = vsel %vm572, %v4012, %v4019
        %v4021 = vrot.slane %v4016, 4
        %v4023 = vshrl.u32 %v3867, 16
        %v4025 = vrot.slane %v4023, 7
        %v4026 = vshll.u32 %v3867, 16
        %v4028 = vor.u32 %v4025, %v4026
        %v4029 = vrot.slane %v4025, 4
        %v4031 = vshrl.u32 %v3868, 16
        %v4033 = vrot.slane %v4031, 7
        %v4034 = vshll.u32 %v3868, 16
        %v4036 = vor.u32 %v4033, %v4034
        %v4037 = vsel %vm572, %v4029, %v4036
        %v4038 = vrot.slane %v4033, 4
        %v4069 = vld [vmem:[#allocation3] sm:$0xf]
        %v4070 = vsel %vm614, %v3875, %v4069
        %4071 = vst [vmem:[#allocation3] sm:$0xf] %v4070
        %4072 = vst.msk [vmem:[#allocation3 + $0x4] sm:$0xf] %vm618, %v3884
        %v4073 = vld [vmem:[#allocation3 + $0x8] sm:$0x1]
        %v4074 = vsel %vm496, %v3885, %v4073
        %4075 = vst [vmem:[#allocation3 + $0x8] sm:$0x1] %v4074
        %v4076 = vld [vmem:[#allocation3 + $0xc] sm:$0xf]
        %v4077 = vsel %vm614, %v3892, %v4076
        %4078 = vst [vmem:[#allocation3 + $0xc] sm:$0xf] %v4077
        %4079 = vst.msk [vmem:[#allocation3 + $0x10] sm:$0xf] %vm618, %v3901
        %v4080 = vld [vmem:[#allocation3 + $0x14] sm:$0x1]
        %v4081 = vsel %vm496, %v3902, %v4080
        %4082 = vst [vmem:[#allocation3 + $0x14] sm:$0x1] %v4081
        %v4083 = vld [vmem:[#allocation3 + $0x18] sm:$0xf]
        %v4084 = vsel %vm614, %v3909, %v4083
        %4085 = vst [vmem:[#allocation3 + $0x18] sm:$0xf] %v4084
        %4086 = vst.msk [vmem:[#allocation3 + $0x1c] sm:$0xf] %vm618, %v3918
        %v4087 = vld [vmem:[#allocation3 + $0x20] sm:$0x1]
        %v4088 = vsel %vm496, %v3919, %v4087
        %4089 = vst [vmem:[#allocation3 + $0x20] sm:$0x1] %v4088
        %v4090 = vld [vmem:[#allocation3 + $0x24] sm:$0xf]
        %v4091 = vsel %vm614, %v3926, %v4090
        %4092 = vst [vmem:[#allocation3 + $0x24] sm:$0xf] %v4091
        %4093 = vst.msk [vmem:[#allocation3 + $0x28] sm:$0xf] %vm618, %v3935
        %v4094 = vld [vmem:[#allocation3 + $0x2c] sm:$0x1]
        %v4095 = vsel %vm496, %v3936, %v4094
        %4096 = vst [vmem:[#allocation3 + $0x2c] sm:$0x1] %v4095
        %v4097 = vld [vmem:[#allocation3 + $0x30] sm:$0xf]
        %v4098 = vsel %vm614, %v3943, %v4097
        %4099 = vst [vmem:[#allocation3 + $0x30] sm:$0xf] %v4098
        %4100 = vst.msk [vmem:[#allocation3 + $0x34] sm:$0xf] %vm618, %v3952
        %v4101 = vld [vmem:[#allocation3 + $0x38] sm:$0x1]
        %v4102 = vsel %vm496, %v3953, %v4101
        %4103 = vst [vmem:[#allocation3 + $0x38] sm:$0x1] %v4102
        %v4104 = vld [vmem:[#allocation3 + $0x3c] sm:$0xf]
        %v4105 = vsel %vm614, %v3960, %v4104
        %4106 = vst [vmem:[#allocation3 + $0x3c] sm:$0xf] %v4105
        %4107 = vst.msk [vmem:[#allocation3 + $0x40] sm:$0xf] %vm618, %v3969
        %v4108 = vld [vmem:[#allocation3 + $0x44] sm:$0x1]
        %v4109 = vsel %vm496, %v3970, %v4108
        %4110 = vst [vmem:[#allocation3 + $0x44] sm:$0x1] %v4109
        %v4111 = vld [vmem:[#allocation3 + $0x48] sm:$0xf]
        %v4112 = vsel %vm614, %v3977, %v4111
        %4113 = vst [vmem:[#allocation3 + $0x48] sm:$0xf] %v4112
        %4114 = vst.msk [vmem:[#allocation3 + $0x4c] sm:$0xf] %vm618, %v3986
        %v4115 = vld [vmem:[#allocation3 + $0x50] sm:$0x1]
        %v4116 = vsel %vm496, %v3987, %v4115
        %4117 = vst [vmem:[#allocation3 + $0x50] sm:$0x1] %v4116
        %v4118 = vld [vmem:[#allocation3 + $0x54] sm:$0xf]
        %v4119 = vsel %vm614, %v3994, %v4118
        %4120 = vst [vmem:[#allocation3 + $0x54] sm:$0xf] %v4119
        %4121 = vst.msk [vmem:[#allocation3 + $0x58] sm:$0xf] %vm618, %v4003
        %v4122 = vld [vmem:[#allocation3 + $0x5c] sm:$0x1]
        %v4123 = vsel %vm496, %v4004, %v4122
        %4124 = vst [vmem:[#allocation3 + $0x5c] sm:$0x1] %v4123
        %v4125 = vld [vmem:[#allocation3 + $0x60] sm:$0xf]
        %v4126 = vsel %vm614, %v4011, %v4125
        %4127 = vst [vmem:[#allocation3 + $0x60] sm:$0xf] %v4126
        %4128 = vst.msk [vmem:[#allocation3 + $0x64] sm:$0xf] %vm618, %v4020
        %v4129 = vld [vmem:[#allocation3 + $0x68] sm:$0x1]
        %v4130 = vsel %vm496, %v4021, %v4129
        %4131 = vst [vmem:[#allocation3 + $0x68] sm:$0x1] %v4130
        %v4132 = vld [vmem:[#allocation3 + $0x6c] sm:$0xf]
        %v4133 = vsel %vm614, %v4028, %v4132
        %4134 = vst [vmem:[#allocation3 + $0x6c] sm:$0xf] %v4133
        %4135 = vst.msk [vmem:[#allocation3 + $0x70] sm:$0xf] %vm618, %v4037
        %v4136 = vld [vmem:[#allocation3 + $0x74] sm:$0x1]
        %v4137 = vsel %vm496, %v4038, %v4136
        %4138 = vst [vmem:[#allocation3 + $0x74] sm:$0x1] %v4137
        %v4139 = vld [vmem:[#allocation3] sm:$0xf]
        %v4140 = vld [vmem:[#allocation3 + $0x4] sm:$0xf]
        %v4141 = vld [vmem:[#allocation3 + $0xc] sm:$0xf]
        %v4142 = vld [vmem:[#allocation3 + $0x10] sm:$0xf]
        %v4143 = vld [vmem:[#allocation3 + $0x18] sm:$0xf]
        %v4144 = vld [vmem:[#allocation3 + $0x1c] sm:$0xf]
        %v4145 = vld [vmem:[#allocation3 + $0x24] sm:$0xf]
        %v4146 = vld [vmem:[#allocation3 + $0x28] sm:$0xf]
        %v4147 = vld [vmem:[#allocation3 + $0x30] sm:$0xf]
        %v4148 = vld [vmem:[#allocation3 + $0x34] sm:$0xf]
        %v4149 = vld [vmem:[#allocation3 + $0x3c] sm:$0xf]
        %v4150 = vld [vmem:[#allocation3 + $0x40] sm:$0xf]
        %v4151 = vld [vmem:[#allocation3 + $0x48] sm:$0xf]
        %v4152 = vld [vmem:[#allocation3 + $0x4c] sm:$0xf]
        %v4153 = vld [vmem:[#allocation3 + $0x54] sm:$0xf]
        %v4154 = vld [vmem:[#allocation3 + $0x58] sm:$0xf]
        %v4155 = vld [vmem:[%s5] sm:$0xf]
        %v4156 = vld [vmem:[%s5 + $0x4] sm:$0xf]
        %v4157 = vld [vmem:[%s5 + $0x8] sm:$0xf]
        %v4158 = vld [vmem:[%s5 + $0xc] sm:$0xf]
        %v4159 = vld [vmem:[%s5 + $0x10] sm:$0xf]
        %v4160 = vld [vmem:[%s5 + $0x14] sm:$0xf]
        %v4161 = vld [vmem:[%s5 + $0x18] sm:$0xf]
        %v4162 = vld [vmem:[%s5 + $0x1c] sm:$0xf]
        %v4163 = vld [vmem:[#allocation3 + $0x8] sm:$0x1]
        %v4164 = vld [vmem:[#allocation3 + $0x14] sm:$0x1]
        %v4165 = vld [vmem:[#allocation3 + $0x20] sm:$0x1]
        %v4166 = vld [vmem:[#allocation3 + $0x2c] sm:$0x1]
        %v4167 = vld [vmem:[#allocation3 + $0x38] sm:$0x1]
        %v4168 = vld [vmem:[#allocation3 + $0x44] sm:$0x1]
        %v4169 = vld [vmem:[#allocation3 + $0x50] sm:$0x1]
        %v4170 = vld [vmem:[#allocation3 + $0x5c] sm:$0x1]
        %v4172 = vshrl.u32 %v4139, 16
        %v4174 = vrot.slane %v4172, 4
        %v4175 = vshll.u32 %v4139, 16
        %v4177 = vrot.slane %v4175, 5
        %v4178 = vor.u32 %v4174, %v4177
        %v4179 = vrot.slane %v4178, 4
        %v4181 = vshll.u32 %v4140, 16
        %v4183 = vrot.slane %v4181, 5
        %v4184 = vsel %vm958, %v4179, %v4183
        %v4185 = vshrl.u32 %v4140, 16
        %v4187 = vrot.slane %v4185, 4
        %v4188 = vor.u32 %v4187, %v4183
        %v4189 = vrot.slane %v4188, 4
        %v4191 = vshll.u32 %v4163, 16
        %v4193 = vrot.slane %v4191, 5
        %v4194 = vsel %vm958, %v4189, %v4193
        %v4196 = vshrl.u32 %v4141, 16
        %v4198 = vrot.slane %v4196, 4
        %v4199 = vshll.u32 %v4141, 16
        %v4201 = vrot.slane %v4199, 5
        %v4202 = vor.u32 %v4198, %v4201
        %v4203 = vrot.slane %v4202, 4
        %v4205 = vshll.u32 %v4142, 16
        %v4207 = vrot.slane %v4205, 5
        %v4208 = vsel %vm958, %v4203, %v4207
        %v4209 = vshrl.u32 %v4142, 16
        %v4211 = vrot.slane %v4209, 4
        %v4212 = vor.u32 %v4211, %v4207
        %v4213 = vrot.slane %v4212, 4
        %v4215 = vshll.u32 %v4164, 16
        %v4217 = vrot.slane %v4215, 5
        %v4218 = vsel %vm958, %v4213, %v4217
        %v4220 = vshrl.u32 %v4143, 16
        %v4222 = vrot.slane %v4220, 4
        %v4223 = vshll.u32 %v4143, 16
        %v4225 = vrot.slane %v4223, 5
        %v4226 = vor.u32 %v4222, %v4225
        %v4227 = vrot.slane %v4226, 4
        %v4229 = vshll.u32 %v4144, 16
        %v4231 = vrot.slane %v4229, 5
        %v4232 = vsel %vm958, %v4227, %v4231
        %v4233 = vshrl.u32 %v4144, 16
        %v4235 = vrot.slane %v4233, 4
        %v4236 = vor.u32 %v4235, %v4231
        %v4237 = vrot.slane %v4236, 4
        %v4239 = vshll.u32 %v4165, 16
        %v4241 = vrot.slane %v4239, 5
        %v4242 = vsel %vm958, %v4237, %v4241
        %v4244 = vshrl.u32 %v4145, 16
        %v4246 = vrot.slane %v4244, 4
        %v4247 = vshll.u32 %v4145, 16
        %v4249 = vrot.slane %v4247, 5
        %v4250 = vor.u32 %v4246, %v4249
        %v4251 = vrot.slane %v4250, 4
        %v4253 = vshll.u32 %v4146, 16
        %v4255 = vrot.slane %v4253, 5
        %v4256 = vsel %vm958, %v4251, %v4255
        %v4257 = vshrl.u32 %v4146, 16
        %v4259 = vrot.slane %v4257, 4
        %v4260 = vor.u32 %v4259, %v4255
        %v4261 = vrot.slane %v4260, 4
        %v4263 = vshll.u32 %v4166, 16
        %v4265 = vrot.slane %v4263, 5
        %v4266 = vsel %vm958, %v4261, %v4265
        %v4268 = vshrl.u32 %v4147, 16
        %v4270 = vrot.slane %v4268, 4
        %v4271 = vshll.u32 %v4147, 16
        %v4273 = vrot.slane %v4271, 5
        %v4274 = vor.u32 %v4270, %v4273
        %v4275 = vrot.slane %v4274, 4
        %v4277 = vshll.u32 %v4148, 16
        %v4279 = vrot.slane %v4277, 5
        %v4280 = vsel %vm958, %v4275, %v4279
        %v4281 = vshrl.u32 %v4148, 16
        %v4283 = vrot.slane %v4281, 4
        %v4284 = vor.u32 %v4283, %v4279
        %v4285 = vrot.slane %v4284, 4
        %v4287 = vshll.u32 %v4167, 16
        %v4289 = vrot.slane %v4287, 5
        %v4290 = vsel %vm958, %v4285, %v4289
        %v4292 = vshrl.u32 %v4149, 16
        %v4294 = vrot.slane %v4292, 4
        %v4295 = vshll.u32 %v4149, 16
        %v4297 = vrot.slane %v4295, 5
        %v4298 = vor.u32 %v4294, %v4297
        %v4299 = vrot.slane %v4298, 4
        %v4301 = vshll.u32 %v4150, 16
        %v4303 = vrot.slane %v4301, 5
        %v4304 = vsel %vm958, %v4299, %v4303
        %v4305 = vshrl.u32 %v4150, 16
        %v4307 = vrot.slane %v4305, 4
        %v4308 = vor.u32 %v4307, %v4303
        %v4309 = vrot.slane %v4308, 4
        %v4311 = vshll.u32 %v4168, 16
        %v4313 = vrot.slane %v4311, 5
        %v4314 = vsel %vm958, %v4309, %v4313
        %v4316 = vshrl.u32 %v4151, 16
        %v4318 = vrot.slane %v4316, 4
        %v4319 = vshll.u32 %v4151, 16
        %v4321 = vrot.slane %v4319, 5
        %v4322 = vor.u32 %v4318, %v4321
        %v4323 = vrot.slane %v4322, 4
        %v4325 = vshll.u32 %v4152, 16
        %v4327 = vrot.slane %v4325, 5
        %v4328 = vsel %vm958, %v4323, %v4327
        %v4329 = vshrl.u32 %v4152, 16
        %v4331 = vrot.slane %v4329, 4
        %v4332 = vor.u32 %v4331, %v4327
        %v4333 = vrot.slane %v4332, 4
        %v4335 = vshll.u32 %v4169, 16
        %v4337 = vrot.slane %v4335, 5
        %v4338 = vsel %vm958, %v4333, %v4337
        %v4340 = vshrl.u32 %v4153, 16
        %v4342 = vrot.slane %v4340, 4
        %v4343 = vshll.u32 %v4153, 16
        %v4345 = vrot.slane %v4343, 5
        %v4346 = vor.u32 %v4342, %v4345
        %v4347 = vrot.slane %v4346, 4
        %v4349 = vshll.u32 %v4154, 16
        %v4351 = vrot.slane %v4349, 5
        %v4352 = vsel %vm958, %v4347, %v4351
        %v4353 = vshrl.u32 %v4154, 16
        %v4355 = vrot.slane %v4353, 4
        %v4356 = vor.u32 %v4355, %v4351
        %v4357 = vrot.slane %v4356, 4
        %v4359 = vshll.u32 %v4170, 16
        %v4361 = vrot.slane %v4359, 5
        %v4362 = vsel %vm958, %v4357, %v4361
        %s4363 = scalar_lea.vmem %s5, 32
        %v4364 = vld [vmem:[%s4363] sm:$0xf]
        %v4365 = vld [vmem:[%s4363 + $0x4] sm:$0xf]
        %v4366 = vld [vmem:[%s4363 + $0x8] sm:$0xf]
        %v4367 = vld [vmem:[%s4363 + $0xc] sm:$0xf]
        %v4368 = vld [vmem:[%s4363 + $0x10] sm:$0xf]
        %v4369 = vld [vmem:[%s4363 + $0x14] sm:$0xf]
        %v4370 = vld [vmem:[%s4363 + $0x18] sm:$0xf]
        %v4371 = vld [vmem:[%s4363 + $0x1c] sm:$0xf]
        %v4372 = vunpack.c.l.b16 %v4184
        %v4373 = vunpack.c.l.b16 %v4194
        %v4374 = vunpack.c.l.b16 %v4208
        %v4375 = vunpack.c.l.b16 %v4218
        %v4376 = vunpack.c.l.b16 %v4232
        %v4377 = vunpack.c.l.b16 %v4242
        %v4378 = vunpack.c.l.b16 %v4256
        %v4379 = vunpack.c.l.b16 %v4266
        %v4380 = vunpack.c.l.b16 %v4280
        %v4381 = vunpack.c.l.b16 %v4290
        %v4382 = vunpack.c.l.b16 %v4304
        %v4383 = vunpack.c.l.b16 %v4314
        %v4384 = vunpack.c.l.b16 %v4328
        %v4385 = vunpack.c.l.b16 %v4338
        %v4386 = vunpack.c.l.b16 %v4352
        %v4387 = vunpack.c.l.b16 %v4362
        %v4388 = vpack.c.b16 %v4373, %v4372
        %v4389 = vpack.c.b16 %v4375, %v4374
        %v4390 = vpack.c.b16 %v4377, %v4376
        %v4391 = vpack.c.b16 %v4379, %v4378
        %v4392 = vpack.c.b16 %v4381, %v4380
        %v4393 = vpack.c.b16 %v4383, %v4382
        %v4394 = vpack.c.b16 %v4385, %v4384
        %v4395 = vpack.c.b16 %v4387, %v4386
        %v4404 = vunpack.c.l.b16 %v4364
        %v4405 = vunpack.c.l.b16 %v4365
        %v4406 = vunpack.c.l.b16 %v4366
        %v4407 = vunpack.c.l.b16 %v4367
        %v4408 = vunpack.c.l.b16 %v4368
        %v4409 = vunpack.c.l.b16 %v4369
        %v4410 = vunpack.c.l.b16 %v4370
        %v4411 = vunpack.c.l.b16 %v4371
        %v4412 = vpack.c.b16 %v4405, %v4404
        %v4413 = vpack.c.b16 %v4407, %v4406
        %v4414 = vpack.c.b16 %v4409, %v4408
        %v4415 = vpack.c.b16 %v4411, %v4410
        %v4421 = vsel %vm1262, %v4388, 0
        %v4424 = vsel %vm1262, %v4389, 0
        %v4427 = vsel %vm1262, %v4390, 0
        %v4430 = vsel %vm1262, %v4391, 0
        %v4433 = vsel %vm1262, %v4392, 0
        %v4436 = vsel %vm1262, %v4393, 0
        %v4439 = vsel %vm1262, %v4394, 0
        %v4442 = vsel %vm1262, %v4395, 0
        %4444 = vmatpush.bf16.msra.mxu0 0
        %4445 = vmatpush.bf16.msra.mxu0 0
        %4446 = vmatpush.bf16.msra.mxu0 0
        %4447 = vmatpush.bf16.msra.mxu0 0
        %4448 = vmatpush.bf16.msra.mxu0 %v4415
        %4449 = vmatpush.bf16.msra.mxu0 %v4414
        %4450 = vmatpush.bf16.msra.mxu0 %v4413
        %4451 = vmatpush.bf16.msra.mxu0 %v4412
        %4452 = vmatmul.bf16.gmra.mxu0 %v4421
        %v4453 = vpop.f32.mrf.mxu0
        %v4454 = vadd.f32 0.0, %v4453
        %v4455 = vpop.f32.mrf.mxu0
        %v4456 = vadd.f32 0.0, %v4455
        %4457 = vmatmul.bf16.gmra.mxu0 %v4424
        %v4458 = vpop.f32.mrf.mxu0
        %v4459 = vadd.f32 0.0, %v4458
        %v4460 = vpop.f32.mrf.mxu0
        %v4461 = vadd.f32 0.0, %v4460
        %4462 = vmatmul.bf16.gmra.mxu0 %v4427
        %v4463 = vpop.f32.mrf.mxu0
        %v4464 = vadd.f32 0.0, %v4463
        %v4465 = vpop.f32.mrf.mxu0
        %v4466 = vadd.f32 0.0, %v4465
        %4467 = vmatmul.bf16.gmra.mxu0 %v4430
        %v4468 = vpop.f32.mrf.mxu0
        %v4469 = vadd.f32 0.0, %v4468
        %v4470 = vpop.f32.mrf.mxu0
        %v4471 = vadd.f32 0.0, %v4470
        %4472 = vmatmul.bf16.gmra.mxu0 %v4433
        %v4473 = vpop.f32.mrf.mxu0
        %v4474 = vadd.f32 0.0, %v4473
        %v4475 = vpop.f32.mrf.mxu0
        %v4476 = vadd.f32 0.0, %v4475
        %4477 = vmatmul.bf16.gmra.mxu0 %v4436
        %v4478 = vpop.f32.mrf.mxu0
        %v4479 = vadd.f32 0.0, %v4478
        %v4480 = vpop.f32.mrf.mxu0
        %v4481 = vadd.f32 0.0, %v4480
        %4482 = vmatmul.bf16.gmra.mxu0 %v4439
        %v4483 = vpop.f32.mrf.mxu0
        %v4484 = vadd.f32 0.0, %v4483
        %v4485 = vpop.f32.mrf.mxu0
        %v4486 = vadd.f32 0.0, %v4485
        %4487 = vmatmul.bf16.gmra.mxu0 %v4442
        %v4488 = vpop.f32.mrf.mxu0
        %v4489 = vadd.f32 0.0, %v4488
        %v4490 = vpop.f32.mrf.mxu0
        %v4491 = vadd.f32 0.0, %v4490
        %4492 = vdwg.mxu0
        %v4509 = vunpack.c.l.b16 %v4139
        %v4510 = vunpack.c.l.b16 %v4140
        %v4511 = vunpack.c.l.b16 %v4141
        %v4512 = vunpack.c.l.b16 %v4142
        %v4513 = vunpack.c.l.b16 %v4143
        %v4514 = vunpack.c.l.b16 %v4144
        %v4515 = vunpack.c.l.b16 %v4145
        %v4516 = vunpack.c.l.b16 %v4146
        %v4517 = vunpack.c.l.b16 %v4147
        %v4518 = vunpack.c.l.b16 %v4148
        %v4519 = vunpack.c.l.b16 %v4149
        %v4520 = vunpack.c.l.b16 %v4150
        %v4521 = vunpack.c.l.b16 %v4151
        %v4522 = vunpack.c.l.b16 %v4152
        %v4523 = vunpack.c.l.b16 %v4153
        %v4524 = vunpack.c.l.b16 %v4154
        %v4525 = vpack.c.b16 %v4510, %v4509
        %v4526 = vpack.c.b16 %v4512, %v4511
        %v4527 = vpack.c.b16 %v4514, %v4513
        %v4528 = vpack.c.b16 %v4516, %v4515
        %v4529 = vpack.c.b16 %v4518, %v4517
        %v4530 = vpack.c.b16 %v4520, %v4519
        %v4531 = vpack.c.b16 %v4522, %v4521
        %v4532 = vpack.c.b16 %v4524, %v4523
        %v4541 = vunpack.c.l.b16 %v4155
        %v4542 = vunpack.c.l.b16 %v4156
        %v4543 = vunpack.c.l.b16 %v4157
        %v4544 = vunpack.c.l.b16 %v4158
        %v4545 = vunpack.c.l.b16 %v4159
        %v4546 = vunpack.c.l.b16 %v4160
        %v4547 = vunpack.c.l.b16 %v4161
        %v4548 = vunpack.c.l.b16 %v4162
        %v4549 = vpack.c.b16 %v4542, %v4541
        %v4550 = vpack.c.b16 %v4544, %v4543
        %v4551 = vpack.c.b16 %v4546, %v4545
        %v4552 = vpack.c.b16 %v4548, %v4547
        %v4558 = vsel %vm1262, %v4525, 0
        %v4561 = vsel %vm1262, %v4526, 0
        %v4564 = vsel %vm1262, %v4527, 0
        %v4567 = vsel %vm1262, %v4528, 0
        %v4570 = vsel %vm1262, %v4529, 0
        %v4573 = vsel %vm1262, %v4530, 0
        %v4576 = vsel %vm1262, %v4531, 0
        %v4579 = vsel %vm1262, %v4532, 0
        %4581 = vmatpush.bf16.msra.mxu0 0
        %4582 = vmatpush.bf16.msra.mxu0 0
        %4583 = vmatpush.bf16.msra.mxu0 0
        %4584 = vmatpush.bf16.msra.mxu0 0
        %4585 = vmatpush.bf16.msra.mxu0 %v4552
        %4586 = vmatpush.bf16.msra.mxu0 %v4551
        %4587 = vmatpush.bf16.msra.mxu0 %v4550
        %4588 = vmatpush.bf16.msra.mxu0 %v4549
        %4589 = vmatmul.bf16.gmra.mxu0 %v4558
        %v4590 = vpop.f32.mrf.mxu0
        %v4591 = vadd.f32 %v4454, %v4590
        %v4592 = vpop.f32.mrf.mxu0
        %v4593 = vadd.f32 %v4456, %v4592
        %4594 = vmatmul.bf16.gmra.mxu0 %v4561
        %v4595 = vpop.f32.mrf.mxu0
        %v4596 = vadd.f32 %v4459, %v4595
        %v4597 = vpop.f32.mrf.mxu0
        %v4598 = vadd.f32 %v4461, %v4597
        %4599 = vmatmul.bf16.gmra.mxu0 %v4564
        %v4600 = vpop.f32.mrf.mxu0
        %v4601 = vadd.f32 %v4464, %v4600
        %v4602 = vpop.f32.mrf.mxu0
        %v4603 = vadd.f32 %v4466, %v4602
        %4604 = vmatmul.bf16.gmra.mxu0 %v4567
        %v4605 = vpop.f32.mrf.mxu0
        %v4606 = vadd.f32 %v4469, %v4605
        %v4607 = vpop.f32.mrf.mxu0
        %v4608 = vadd.f32 %v4471, %v4607
        %4609 = vmatmul.bf16.gmra.mxu0 %v4570
        %v4610 = vpop.f32.mrf.mxu0
        %v4611 = vadd.f32 %v4474, %v4610
        %v4612 = vpop.f32.mrf.mxu0
        %v4613 = vadd.f32 %v4476, %v4612
        %4614 = vmatmul.bf16.gmra.mxu0 %v4573
        %v4615 = vpop.f32.mrf.mxu0
        %v4616 = vadd.f32 %v4479, %v4615
        %v4617 = vpop.f32.mrf.mxu0
        %v4618 = vadd.f32 %v4481, %v4617
        %4619 = vmatmul.bf16.gmra.mxu0 %v4576
        %v4620 = vpop.f32.mrf.mxu0
        %v4621 = vadd.f32 %v4484, %v4620
        %v4622 = vpop.f32.mrf.mxu0
        %v4623 = vadd.f32 %v4486, %v4622
        %4624 = vmatmul.bf16.gmra.mxu0 %v4579
        %v4625 = vpop.f32.mrf.mxu0
        %v4626 = vadd.f32 %v4489, %v4625
        %v4627 = vpop.f32.mrf.mxu0
        %v4628 = vadd.f32 %v4491, %v4627
        %4629 = vdwg.mxu0
        %v4630 = vld [vmem:[#allocation3] sm:$0xe]
        %v4631 = vld [vmem:[#allocation3 + $0xc] sm:$0xe]
        %v4632 = vld [vmem:[#allocation3 + $0x18] sm:$0xe]
        %v4633 = vld [vmem:[#allocation3 + $0x24] sm:$0xe]
        %v4634 = vld [vmem:[#allocation3 + $0x30] sm:$0xe]
        %v4635 = vld [vmem:[#allocation3 + $0x3c] sm:$0xe]
        %v4636 = vld [vmem:[#allocation3 + $0x48] sm:$0xe]
        %v4637 = vld [vmem:[#allocation3 + $0x54] sm:$0xe]
        %v4654 = vrot.slane %v4630, 5
        %v4655 = vrot.slane %v4654, 4
        %v4656 = vrot.slane %v4140, 5
        %v4657 = vsel %vm1547, %v4655, %v4656
        %v4658 = vrot.slane %v4656, 4
        %v4659 = vrot.slane %v4163, 5
        %v4660 = vsel %vm1547, %v4658, %v4659
        %v4661 = vrot.slane %v4631, 5
        %v4662 = vrot.slane %v4661, 4
        %v4663 = vrot.slane %v4142, 5
        %v4664 = vsel %vm1547, %v4662, %v4663
        %v4665 = vrot.slane %v4663, 4
        %v4666 = vrot.slane %v4164, 5
        %v4667 = vsel %vm1547, %v4665, %v4666
        %v4668 = vrot.slane %v4632, 5
        %v4669 = vrot.slane %v4668, 4
        %v4670 = vrot.slane %v4144, 5
        %v4671 = vsel %vm1547, %v4669, %v4670
        %v4672 = vrot.slane %v4670, 4
        %v4673 = vrot.slane %v4165, 5
        %v4674 = vsel %vm1547, %v4672, %v4673
        %v4675 = vrot.slane %v4633, 5
        %v4676 = vrot.slane %v4675, 4
        %v4677 = vrot.slane %v4146, 5
        %v4678 = vsel %vm1547, %v4676, %v4677
        %v4679 = vrot.slane %v4677, 4
        %v4680 = vrot.slane %v4166, 5
        %v4681 = vsel %vm1547, %v4679, %v4680
        %v4682 = vrot.slane %v4634, 5
        %v4683 = vrot.slane %v4682, 4
        %v4684 = vrot.slane %v4148, 5
        %v4685 = vsel %vm1547, %v4683, %v4684
        %v4686 = vrot.slane %v4684, 4
        %v4687 = vrot.slane %v4167, 5
        %v4688 = vsel %vm1547, %v4686, %v4687
        %v4689 = vrot.slane %v4635, 5
        %v4690 = vrot.slane %v4689, 4
        %v4691 = vrot.slane %v4150, 5
        %v4692 = vsel %vm1547, %v4690, %v4691
        %v4693 = vrot.slane %v4691, 4
        %v4694 = vrot.slane %v4168, 5
        %v4695 = vsel %vm1547, %v4693, %v4694
        %v4696 = vrot.slane %v4636, 5
        %v4697 = vrot.slane %v4696, 4
        %v4698 = vrot.slane %v4152, 5
        %v4699 = vsel %vm1547, %v4697, %v4698
        %v4700 = vrot.slane %v4698, 4
        %v4701 = vrot.slane %v4169, 5
        %v4702 = vsel %vm1547, %v4700, %v4701
        %v4703 = vrot.slane %v4637, 5
        %v4704 = vrot.slane %v4703, 4
        %v4705 = vrot.slane %v4154, 5
        %v4706 = vsel %vm1547, %v4704, %v4705
        %v4707 = vrot.slane %v4705, 4
        %v4708 = vrot.slane %v4170, 5
        %v4709 = vsel %vm1547, %v4707, %v4708
        %s4710 = scalar_lea.vmem %s5, 64
        %v4711 = vld [vmem:[%s4710] sm:$0xf]
        %v4712 = vld [vmem:[%s4710 + $0x4] sm:$0xf]
        %v4713 = vld [vmem:[%s4710 + $0x8] sm:$0xf]
        %v4714 = vld [vmem:[%s4710 + $0xc] sm:$0xf]
        %v4715 = vld [vmem:[%s4710 + $0x10] sm:$0xf]
        %v4716 = vld [vmem:[%s4710 + $0x14] sm:$0xf]
        %v4717 = vld [vmem:[%s4710 + $0x18] sm:$0xf]
        %v4718 = vld [vmem:[%s4710 + $0x1c] sm:$0xf]
        %v4719 = vunpack.c.l.b16 %v4657
        %v4720 = vunpack.c.l.b16 %v4660
        %v4721 = vunpack.c.l.b16 %v4664
        %v4722 = vunpack.c.l.b16 %v4667
        %v4723 = vunpack.c.l.b16 %v4671
        %v4724 = vunpack.c.l.b16 %v4674
        %v4725 = vunpack.c.l.b16 %v4678
        %v4726 = vunpack.c.l.b16 %v4681
        %v4727 = vunpack.c.l.b16 %v4685
        %v4728 = vunpack.c.l.b16 %v4688
        %v4729 = vunpack.c.l.b16 %v4692
        %v4730 = vunpack.c.l.b16 %v4695
        %v4731 = vunpack.c.l.b16 %v4699
        %v4732 = vunpack.c.l.b16 %v4702
        %v4733 = vunpack.c.l.b16 %v4706
        %v4734 = vunpack.c.l.b16 %v4709
        %v4735 = vpack.c.b16 %v4720, %v4719
        %v4736 = vpack.c.b16 %v4722, %v4721
        %v4737 = vpack.c.b16 %v4724, %v4723
        %v4738 = vpack.c.b16 %v4726, %v4725
        %v4739 = vpack.c.b16 %v4728, %v4727
        %v4740 = vpack.c.b16 %v4730, %v4729
        %v4741 = vpack.c.b16 %v4732, %v4731
        %v4742 = vpack.c.b16 %v4734, %v4733
        %v4751 = vunpack.c.l.b16 %v4711
        %v4752 = vunpack.c.l.b16 %v4712
        %v4753 = vunpack.c.l.b16 %v4713
        %v4754 = vunpack.c.l.b16 %v4714
        %v4755 = vunpack.c.l.b16 %v4715
        %v4756 = vunpack.c.l.b16 %v4716
        %v4757 = vunpack.c.l.b16 %v4717
        %v4758 = vunpack.c.l.b16 %v4718
        %v4759 = vpack.c.b16 %v4752, %v4751
        %v4760 = vpack.c.b16 %v4754, %v4753
        %v4761 = vpack.c.b16 %v4756, %v4755
        %v4762 = vpack.c.b16 %v4758, %v4757
        %v4768 = vsel %vm1262, %v4735, 0
        %v4771 = vsel %vm1262, %v4736, 0
        %v4774 = vsel %vm1262, %v4737, 0
        %v4777 = vsel %vm1262, %v4738, 0
        %v4780 = vsel %vm1262, %v4739, 0
        %v4783 = vsel %vm1262, %v4740, 0
        %v4786 = vsel %vm1262, %v4741, 0
        %v4789 = vsel %vm1262, %v4742, 0
        %4791 = vmatpush.bf16.msra.mxu0 0
        %4792 = vmatpush.bf16.msra.mxu0 0
        %4793 = vmatpush.bf16.msra.mxu0 0
        %4794 = vmatpush.bf16.msra.mxu0 0
        %4795 = vmatpush.bf16.msra.mxu0 %v4762
        %4796 = vmatpush.bf16.msra.mxu0 %v4761
        %4797 = vmatpush.bf16.msra.mxu0 %v4760
        %4798 = vmatpush.bf16.msra.mxu0 %v4759
        %4799 = vmatmul.bf16.gmra.mxu0 %v4768
        %v4800 = vpop.f32.mrf.mxu0
        %v4801 = vadd.f32 0.0, %v4800
        %v4802 = vpop.f32.mrf.mxu0
        %v4803 = vadd.f32 0.0, %v4802
        %4804 = vmatmul.bf16.gmra.mxu0 %v4771
        %v4805 = vpop.f32.mrf.mxu0
        %v4806 = vadd.f32 0.0, %v4805
        %v4807 = vpop.f32.mrf.mxu0
        %v4808 = vadd.f32 0.0, %v4807
        %4809 = vmatmul.bf16.gmra.mxu0 %v4774
        %v4810 = vpop.f32.mrf.mxu0
        %v4811 = vadd.f32 0.0, %v4810
        %v4812 = vpop.f32.mrf.mxu0
        %v4813 = vadd.f32 0.0, %v4812
        %4814 = vmatmul.bf16.gmra.mxu0 %v4777
        %v4815 = vpop.f32.mrf.mxu0
        %v4816 = vadd.f32 0.0, %v4815
        %v4817 = vpop.f32.mrf.mxu0
        %v4818 = vadd.f32 0.0, %v4817
        %4819 = vmatmul.bf16.gmra.mxu0 %v4780
        %v4820 = vpop.f32.mrf.mxu0
        %v4821 = vadd.f32 0.0, %v4820
        %v4822 = vpop.f32.mrf.mxu0
        %v4823 = vadd.f32 0.0, %v4822
        %4824 = vmatmul.bf16.gmra.mxu0 %v4783
        %v4825 = vpop.f32.mrf.mxu0
        %v4826 = vadd.f32 0.0, %v4825
        %v4827 = vpop.f32.mrf.mxu0
        %v4828 = vadd.f32 0.0, %v4827
        %4829 = vmatmul.bf16.gmra.mxu0 %v4786
        %v4830 = vpop.f32.mrf.mxu0
        %v4831 = vadd.f32 0.0, %v4830
        %v4832 = vpop.f32.mrf.mxu0
        %v4833 = vadd.f32 0.0, %v4832
        %4834 = vmatmul.bf16.gmra.mxu0 %v4789
        %v4835 = vpop.f32.mrf.mxu0
        %v4836 = vadd.f32 0.0, %v4835
        %v4837 = vpop.f32.mrf.mxu0
        %v4838 = vadd.f32 0.0, %v4837
        %4839 = vdwg.mxu0
        %v4840 = vadd.f32 %v4591, %v4801
        %v4841 = vadd.f32 %v4593, %v4803
        %v4842 = vadd.f32 %v4596, %v4806
        %v4843 = vadd.f32 %v4598, %v4808
        %v4844 = vadd.f32 %v4601, %v4811
        %v4845 = vadd.f32 %v4603, %v4813
        %v4846 = vadd.f32 %v4606, %v4816
        %v4847 = vadd.f32 %v4608, %v4818
        %v4848 = vadd.f32 %v4611, %v4821
        %v4849 = vadd.f32 %v4613, %v4823
        %v4850 = vadd.f32 %v4616, %v4826
        %v4851 = vadd.f32 %v4618, %v4828
        %v4852 = vadd.f32 %v4621, %v4831
        %v4853 = vadd.f32 %v4623, %v4833
        %v4854 = vadd.f32 %v4626, %v4836
        %v4855 = vadd.f32 %v4628, %v4838
        %s4856 = scalar_lea.vmem [#allocation3], 12
        %v4857 = vld [vmem:[%s4856] sm:$0xf]
        %v4858 = vld [vmem:[%s4856 + $0x4] sm:$0xf]
        %v4859 = vld [vmem:[%s4856 + $0xc] sm:$0xf]
        %v4860 = vld [vmem:[%s4856 + $0x10] sm:$0xf]
        %v4861 = vld [vmem:[%s4856 + $0x18] sm:$0xf]
        %v4862 = vld [vmem:[%s4856 + $0x1c] sm:$0xf]
        %v4863 = vld [vmem:[%s4856 + $0x24] sm:$0xf]
        %v4864 = vld [vmem:[%s4856 + $0x28] sm:$0xf]
        %v4865 = vld [vmem:[%s4856 + $0x30] sm:$0xf]
        %v4866 = vld [vmem:[%s4856 + $0x34] sm:$0xf]
        %v4867 = vld [vmem:[%s4856 + $0x3c] sm:$0xf]
        %v4868 = vld [vmem:[%s4856 + $0x40] sm:$0xf]
        %v4869 = vld [vmem:[%s4856 + $0x48] sm:$0xf]
        %v4870 = vld [vmem:[%s4856 + $0x4c] sm:$0xf]
        %v4871 = vld [vmem:[%s4856 + $0x54] sm:$0xf]
        %v4872 = vld [vmem:[%s4856 + $0x58] sm:$0xf]
        %s4873 = scalar_lea.vmem %s5, 96
        %v4874 = vld [vmem:[%s4873] sm:$0xf]
        %v4875 = vld [vmem:[%s4873 + $0x4] sm:$0xf]
        %v4876 = vld [vmem:[%s4873 + $0x8] sm:$0xf]
        %v4877 = vld [vmem:[%s4873 + $0xc] sm:$0xf]
        %v4878 = vld [vmem:[%s4873 + $0x10] sm:$0xf]
        %v4879 = vld [vmem:[%s4873 + $0x14] sm:$0xf]
        %v4880 = vld [vmem:[%s4873 + $0x18] sm:$0xf]
        %v4881 = vld [vmem:[%s4873 + $0x1c] sm:$0xf]
        %v4898 = vunpack.c.l.b16 %v4857
        %v4899 = vunpack.c.l.b16 %v4858
        %v4900 = vunpack.c.l.b16 %v4859
        %v4901 = vunpack.c.l.b16 %v4860
        %v4902 = vunpack.c.l.b16 %v4861
        %v4903 = vunpack.c.l.b16 %v4862
        %v4904 = vunpack.c.l.b16 %v4863
        %v4905 = vunpack.c.l.b16 %v4864
        %v4906 = vunpack.c.l.b16 %v4865
        %v4907 = vunpack.c.l.b16 %v4866
        %v4908 = vunpack.c.l.b16 %v4867
        %v4909 = vunpack.c.l.b16 %v4868
        %v4910 = vunpack.c.l.b16 %v4869
        %v4911 = vunpack.c.l.b16 %v4870
        %v4912 = vunpack.c.l.b16 %v4871
        %v4913 = vunpack.c.l.b16 %v4872
        %v4914 = vpack.c.b16 %v4899, %v4898
        %v4915 = vpack.c.b16 %v4901, %v4900
        %v4916 = vpack.c.b16 %v4903, %v4902
        %v4917 = vpack.c.b16 %v4905, %v4904
        %v4918 = vpack.c.b16 %v4907, %v4906
        %v4919 = vpack.c.b16 %v4909, %v4908
        %v4920 = vpack.c.b16 %v4911, %v4910
        %v4921 = vpack.c.b16 %v4913, %v4912
        %v4930 = vunpack.c.l.b16 %v4874
        %v4931 = vunpack.c.l.b16 %v4875
        %v4932 = vunpack.c.l.b16 %v4876
        %v4933 = vunpack.c.l.b16 %v4877
        %v4934 = vunpack.c.l.b16 %v4878
        %v4935 = vunpack.c.l.b16 %v4879
        %v4936 = vunpack.c.l.b16 %v4880
        %v4937 = vunpack.c.l.b16 %v4881
        %v4938 = vpack.c.b16 %v4931, %v4930
        %v4939 = vpack.c.b16 %v4933, %v4932
        %v4940 = vpack.c.b16 %v4935, %v4934
        %v4941 = vpack.c.b16 %v4937, %v4936
        %v4947 = vsel %vm1262, %v4914, 0
        %v4950 = vsel %vm1262, %v4915, 0
        %v4953 = vsel %vm1262, %v4916, 0
        %v4956 = vsel %vm1262, %v4917, 0
        %v4959 = vsel %vm1262, %v4918, 0
        %v4962 = vsel %vm1262, %v4919, 0
        %v4965 = vsel %vm1262, %v4920, 0
        %v4968 = vsel %vm1262, %v4921, 0
        %4970 = vmatpush.bf16.msra.mxu0 0
        %4971 = vmatpush.bf16.msra.mxu0 0
        %4972 = vmatpush.bf16.msra.mxu0 0
        %4973 = vmatpush.bf16.msra.mxu0 0
        %4974 = vmatpush.bf16.msra.mxu0 %v4941
        %4975 = vmatpush.bf16.msra.mxu0 %v4940
        %4976 = vmatpush.bf16.msra.mxu0 %v4939
        %4977 = vmatpush.bf16.msra.mxu0 %v4938
        %4978 = vmatmul.bf16.gmra.mxu0 %v4947
        %v4979 = vpop.f32.mrf.mxu0
        %v4980 = vadd.f32 0.0, %v4979
        %v4981 = vpop.f32.mrf.mxu0
        %v4982 = vadd.f32 0.0, %v4981
        %4983 = vmatmul.bf16.gmra.mxu0 %v4950
        %v4984 = vpop.f32.mrf.mxu0
        %v4985 = vadd.f32 0.0, %v4984
        %v4986 = vpop.f32.mrf.mxu0
        %v4987 = vadd.f32 0.0, %v4986
        %4988 = vmatmul.bf16.gmra.mxu0 %v4953
        %v4989 = vpop.f32.mrf.mxu0
        %v4990 = vadd.f32 0.0, %v4989
        %v4991 = vpop.f32.mrf.mxu0
        %v4992 = vadd.f32 0.0, %v4991
        %4993 = vmatmul.bf16.gmra.mxu0 %v4956
        %v4994 = vpop.f32.mrf.mxu0
        %v4995 = vadd.f32 0.0, %v4994
        %v4996 = vpop.f32.mrf.mxu0
        %v4997 = vadd.f32 0.0, %v4996
        %4998 = vmatmul.bf16.gmra.mxu0 %v4959
        %v4999 = vpop.f32.mrf.mxu0
        %v5000 = vadd.f32 0.0, %v4999
        %v5001 = vpop.f32.mrf.mxu0
        %v5002 = vadd.f32 0.0, %v5001
        %5003 = vmatmul.bf16.gmra.mxu0 %v4962
        %v5004 = vpop.f32.mrf.mxu0
        %v5005 = vadd.f32 0.0, %v5004
        %v5006 = vpop.f32.mrf.mxu0
        %v5007 = vadd.f32 0.0, %v5006
        %5008 = vmatmul.bf16.gmra.mxu0 %v4965
        %v5009 = vpop.f32.mrf.mxu0
        %v5010 = vadd.f32 0.0, %v5009
        %v5011 = vpop.f32.mrf.mxu0
        %v5012 = vadd.f32 0.0, %v5011
        %5013 = vmatmul.bf16.gmra.mxu0 %v4968
        %v5014 = vpop.f32.mrf.mxu0
        %v5015 = vadd.f32 0.0, %v5014
        %v5016 = vpop.f32.mrf.mxu0
        %v5017 = vadd.f32 0.0, %v5016
        %5018 = vdwg.mxu0
        %v5019 = vadd.f32 %v4840, %v4980
        %v5020 = vadd.f32 %v4841, %v4982
        %v5021 = vadd.f32 %v4842, %v4985
        %v5022 = vadd.f32 %v4843, %v4987
        %v5023 = vadd.f32 %v4844, %v4990
        %v5024 = vadd.f32 %v4845, %v4992
        %v5025 = vadd.f32 %v4846, %v4995
        %v5026 = vadd.f32 %v4847, %v4997
        %v5027 = vadd.f32 %v4848, %v5000
        %v5028 = vadd.f32 %v4849, %v5002
        %v5029 = vadd.f32 %v4850, %v5005
        %v5030 = vadd.f32 %v4851, %v5007
        %v5031 = vadd.f32 %v4852, %v5010
        %v5032 = vadd.f32 %v4853, %v5012
        %v5033 = vadd.f32 %v4854, %v5015
        %v5034 = vadd.f32 %v4855, %v5017
        %v5035 = vld [vmem:[%s4856] sm:$0xf]
        %v5036 = vld [vmem:[%s4856 + $0x4] sm:$0xf]
        %v5037 = vld [vmem:[%s4856 + $0x8] sm:$0x1]
        %v5038 = vld [vmem:[%s4856 + $0xc] sm:$0xf]
        %v5039 = vld [vmem:[%s4856 + $0x10] sm:$0xf]
        %v5040 = vld [vmem:[%s4856 + $0x14] sm:$0x1]
        %v5041 = vld [vmem:[%s4856 + $0x18] sm:$0xf]
        %v5042 = vld [vmem:[%s4856 + $0x1c] sm:$0xf]
        %v5043 = vld [vmem:[%s4856 + $0x20] sm:$0x1]
        %v5044 = vld [vmem:[%s4856 + $0x24] sm:$0xf]
        %v5045 = vld [vmem:[%s4856 + $0x28] sm:$0xf]
        %v5046 = vld [vmem:[%s4856 + $0x2c] sm:$0x1]
        %v5047 = vld [vmem:[%s4856 + $0x30] sm:$0xf]
        %v5048 = vld [vmem:[%s4856 + $0x34] sm:$0xf]
        %v5049 = vld [vmem:[%s4856 + $0x38] sm:$0x1]
        %v5050 = vld [vmem:[%s4856 + $0x3c] sm:$0xf]
        %v5051 = vld [vmem:[%s4856 + $0x40] sm:$0xf]
        %v5052 = vld [vmem:[%s4856 + $0x44] sm:$0x1]
        %v5053 = vld [vmem:[%s4856 + $0x48] sm:$0xf]
        %v5054 = vld [vmem:[%s4856 + $0x4c] sm:$0xf]
        %v5055 = vld [vmem:[%s4856 + $0x50] sm:$0x1]
        %v5056 = vld [vmem:[%s4856 + $0x54] sm:$0xf]
        %v5057 = vld [vmem:[%s4856 + $0x58] sm:$0xf]
        %v5058 = vld [vmem:[%s4856 + $0x5c] sm:$0x1]
        %v5060 = vshrl.u32 %v5035, 16
        %v5062 = vrot.slane %v5060, 4
        %v5063 = vshll.u32 %v5035, 16
        %v5065 = vrot.slane %v5063, 5
        %v5066 = vor.u32 %v5062, %v5065
        %v5067 = vrot.slane %v5066, 4
        %v5069 = vshll.u32 %v5036, 16
        %v5071 = vrot.slane %v5069, 5
        %v5072 = vsel %vm958, %v5067, %v5071
        %v5073 = vshrl.u32 %v5036, 16
        %v5075 = vrot.slane %v5073, 4
        %v5076 = vor.u32 %v5075, %v5071
        %v5077 = vrot.slane %v5076, 4
        %v5079 = vshll.u32 %v5037, 16
        %v5081 = vrot.slane %v5079, 5
        %v5082 = vsel %vm958, %v5077, %v5081
        %v5084 = vshrl.u32 %v5038, 16
        %v5086 = vrot.slane %v5084, 4
        %v5087 = vshll.u32 %v5038, 16
        %v5089 = vrot.slane %v5087, 5
        %v5090 = vor.u32 %v5086, %v5089
        %v5091 = vrot.slane %v5090, 4
        %v5093 = vshll.u32 %v5039, 16
        %v5095 = vrot.slane %v5093, 5
        %v5096 = vsel %vm958, %v5091, %v5095
        %v5097 = vshrl.u32 %v5039, 16
        %v5099 = vrot.slane %v5097, 4
        %v5100 = vor.u32 %v5099, %v5095
        %v5101 = vrot.slane %v5100, 4
        %v5103 = vshll.u32 %v5040, 16
        %v5105 = vrot.slane %v5103, 5
        %v5106 = vsel %vm958, %v5101, %v5105
        %v5108 = vshrl.u32 %v5041, 16
        %v5110 = vrot.slane %v5108, 4
        %v5111 = vshll.u32 %v5041, 16
        %v5113 = vrot.slane %v5111, 5
        %v5114 = vor.u32 %v5110, %v5113
        %v5115 = vrot.slane %v5114, 4
        %v5117 = vshll.u32 %v5042, 16
        %v5119 = vrot.slane %v5117, 5
        %v5120 = vsel %vm958, %v5115, %v5119
        %v5121 = vshrl.u32 %v5042, 16
        %v5123 = vrot.slane %v5121, 4
        %v5124 = vor.u32 %v5123, %v5119
        %v5125 = vrot.slane %v5124, 4
        %v5127 = vshll.u32 %v5043, 16
        %v5129 = vrot.slane %v5127, 5
        %v5130 = vsel %vm958, %v5125, %v5129
        %v5132 = vshrl.u32 %v5044, 16
        %v5134 = vrot.slane %v5132, 4
        %v5135 = vshll.u32 %v5044, 16
        %v5137 = vrot.slane %v5135, 5
        %v5138 = vor.u32 %v5134, %v5137
        %v5139 = vrot.slane %v5138, 4
        %v5141 = vshll.u32 %v5045, 16
        %v5143 = vrot.slane %v5141, 5
        %v5144 = vsel %vm958, %v5139, %v5143
        %v5145 = vshrl.u32 %v5045, 16
        %v5147 = vrot.slane %v5145, 4
        %v5148 = vor.u32 %v5147, %v5143
        %v5149 = vrot.slane %v5148, 4
        %v5151 = vshll.u32 %v5046, 16
        %v5153 = vrot.slane %v5151, 5
        %v5154 = vsel %vm958, %v5149, %v5153
        %v5156 = vshrl.u32 %v5047, 16
        %v5158 = vrot.slane %v5156, 4
        %v5159 = vshll.u32 %v5047, 16
        %v5161 = vrot.slane %v5159, 5
        %v5162 = vor.u32 %v5158, %v5161
        %v5163 = vrot.slane %v5162, 4
        %v5165 = vshll.u32 %v5048, 16
        %v5167 = vrot.slane %v5165, 5
        %v5168 = vsel %vm958, %v5163, %v5167
        %v5169 = vshrl.u32 %v5048, 16
        %v5171 = vrot.slane %v5169, 4
        %v5172 = vor.u32 %v5171, %v5167
        %v5173 = vrot.slane %v5172, 4
        %v5175 = vshll.u32 %v5049, 16
        %v5177 = vrot.slane %v5175, 5
        %v5178 = vsel %vm958, %v5173, %v5177
        %v5180 = vshrl.u32 %v5050, 16
        %v5182 = vrot.slane %v5180, 4
        %v5183 = vshll.u32 %v5050, 16
        %v5185 = vrot.slane %v5183, 5
        %v5186 = vor.u32 %v5182, %v5185
        %v5187 = vrot.slane %v5186, 4
        %v5189 = vshll.u32 %v5051, 16
        %v5191 = vrot.slane %v5189, 5
        %v5192 = vsel %vm958, %v5187, %v5191
        %v5193 = vshrl.u32 %v5051, 16
        %v5195 = vrot.slane %v5193, 4
        %v5196 = vor.u32 %v5195, %v5191
        %v5197 = vrot.slane %v5196, 4
        %v5199 = vshll.u32 %v5052, 16
        %v5201 = vrot.slane %v5199, 5
        %v5202 = vsel %vm958, %v5197, %v5201
        %v5204 = vshrl.u32 %v5053, 16
        %v5206 = vrot.slane %v5204, 4
        %v5207 = vshll.u32 %v5053, 16
        %v5209 = vrot.slane %v5207, 5
        %v5210 = vor.u32 %v5206, %v5209
        %v5211 = vrot.slane %v5210, 4
        %v5213 = vshll.u32 %v5054, 16
        %v5215 = vrot.slane %v5213, 5
        %v5216 = vsel %vm958, %v5211, %v5215
        %v5217 = vshrl.u32 %v5054, 16
        %v5219 = vrot.slane %v5217, 4
        %v5220 = vor.u32 %v5219, %v5215
        %v5221 = vrot.slane %v5220, 4
        %v5223 = vshll.u32 %v5055, 16
        %v5225 = vrot.slane %v5223, 5
        %v5226 = vsel %vm958, %v5221, %v5225
        %v5228 = vshrl.u32 %v5056, 16
        %v5230 = vrot.slane %v5228, 4
        %v5231 = vshll.u32 %v5056, 16
        %v5233 = vrot.slane %v5231, 5
        %v5234 = vor.u32 %v5230, %v5233
        %v5235 = vrot.slane %v5234, 4
        %v5237 = vshll.u32 %v5057, 16
        %v5239 = vrot.slane %v5237, 5
        %v5240 = vsel %vm958, %v5235, %v5239
        %v5241 = vshrl.u32 %v5057, 16
        %v5243 = vrot.slane %v5241, 4
        %v5244 = vor.u32 %v5243, %v5239
        %v5245 = vrot.slane %v5244, 4
        %v5247 = vshll.u32 %v5058, 16
        %v5249 = vrot.slane %v5247, 5
        %v5250 = vsel %vm958, %v5245, %v5249
        %s5251 = scalar_lea.vmem %s5, 128
        %v5252 = vld [vmem:[%s5251] sm:$0xf]
        %v5253 = vld [vmem:[%s5251 + $0x4] sm:$0xf]
        %v5254 = vld [vmem:[%s5251 + $0x8] sm:$0xf]
        %v5255 = vld [vmem:[%s5251 + $0xc] sm:$0xf]
        %v5256 = vld [vmem:[%s5251 + $0x10] sm:$0xf]
        %v5257 = vld [vmem:[%s5251 + $0x14] sm:$0xf]
        %v5258 = vld [vmem:[%s5251 + $0x18] sm:$0xf]
        %v5259 = vld [vmem:[%s5251 + $0x1c] sm:$0xf]
        %v5260 = vunpack.c.l.b16 %v5072
        %v5261 = vunpack.c.l.b16 %v5082
        %v5262 = vunpack.c.l.b16 %v5096
        %v5263 = vunpack.c.l.b16 %v5106
        %v5264 = vunpack.c.l.b16 %v5120
        %v5265 = vunpack.c.l.b16 %v5130
        %v5266 = vunpack.c.l.b16 %v5144
        %v5267 = vunpack.c.l.b16 %v5154
        %v5268 = vunpack.c.l.b16 %v5168
        %v5269 = vunpack.c.l.b16 %v5178
        %v5270 = vunpack.c.l.b16 %v5192
        %v5271 = vunpack.c.l.b16 %v5202
        %v5272 = vunpack.c.l.b16 %v5216
        %v5273 = vunpack.c.l.b16 %v5226
        %v5274 = vunpack.c.l.b16 %v5240
        %v5275 = vunpack.c.l.b16 %v5250
        %v5276 = vpack.c.b16 %v5261, %v5260
        %v5277 = vpack.c.b16 %v5263, %v5262
        %v5278 = vpack.c.b16 %v5265, %v5264
        %v5279 = vpack.c.b16 %v5267, %v5266
        %v5280 = vpack.c.b16 %v5269, %v5268
        %v5281 = vpack.c.b16 %v5271, %v5270
        %v5282 = vpack.c.b16 %v5273, %v5272
        %v5283 = vpack.c.b16 %v5275, %v5274
        %v5292 = vunpack.c.l.b16 %v5252
        %v5293 = vunpack.c.l.b16 %v5253
        %v5294 = vunpack.c.l.b16 %v5254
        %v5295 = vunpack.c.l.b16 %v5255
        %v5296 = vunpack.c.l.b16 %v5256
        %v5297 = vunpack.c.l.b16 %v5257
        %v5298 = vunpack.c.l.b16 %v5258
        %v5299 = vunpack.c.l.b16 %v5259
        %v5300 = vpack.c.b16 %v5293, %v5292
        %v5301 = vpack.c.b16 %v5295, %v5294
        %v5302 = vpack.c.b16 %v5297, %v5296
        %v5303 = vpack.c.b16 %v5299, %v5298
        %v5309 = vsel %vm1262, %v5276, 0
        %v5312 = vsel %vm1262, %v5277, 0
        %v5315 = vsel %vm1262, %v5278, 0
        %v5318 = vsel %vm1262, %v5279, 0
        %v5321 = vsel %vm1262, %v5280, 0
        %v5324 = vsel %vm1262, %v5281, 0
        %v5327 = vsel %vm1262, %v5282, 0
        %v5330 = vsel %vm1262, %v5283, 0
        %5332 = vmatpush.bf16.msra.mxu0 0
        %5333 = vmatpush.bf16.msra.mxu0 0
        %5334 = vmatpush.bf16.msra.mxu0 0
        %5335 = vmatpush.bf16.msra.mxu0 0
        %5336 = vmatpush.bf16.msra.mxu0 %v5303
        %5337 = vmatpush.bf16.msra.mxu0 %v5302
        %5338 = vmatpush.bf16.msra.mxu0 %v5301
        %5339 = vmatpush.bf16.msra.mxu0 %v5300
        %5340 = vmatmul.bf16.gmra.mxu0 %v5309
        %v5341 = vpop.f32.mrf.mxu0
        %v5342 = vadd.f32 0.0, %v5341
        %v5343 = vpop.f32.mrf.mxu0
        %v5344 = vadd.f32 0.0, %v5343
        %5345 = vmatmul.bf16.gmra.mxu0 %v5312
        %v5346 = vpop.f32.mrf.mxu0
        %v5347 = vadd.f32 0.0, %v5346
        %v5348 = vpop.f32.mrf.mxu0
        %v5349 = vadd.f32 0.0, %v5348
        %5350 = vmatmul.bf16.gmra.mxu0 %v5315
        %v5351 = vpop.f32.mrf.mxu0
        %v5352 = vadd.f32 0.0, %v5351
        %v5353 = vpop.f32.mrf.mxu0
        %v5354 = vadd.f32 0.0, %v5353
        %5355 = vmatmul.bf16.gmra.mxu0 %v5318
        %v5356 = vpop.f32.mrf.mxu0
        %v5357 = vadd.f32 0.0, %v5356
        %v5358 = vpop.f32.mrf.mxu0
        %v5359 = vadd.f32 0.0, %v5358
        %5360 = vmatmul.bf16.gmra.mxu0 %v5321
        %v5361 = vpop.f32.mrf.mxu0
        %v5362 = vadd.f32 0.0, %v5361
        %v5363 = vpop.f32.mrf.mxu0
        %v5364 = vadd.f32 0.0, %v5363
        %5365 = vmatmul.bf16.gmra.mxu0 %v5324
        %v5366 = vpop.f32.mrf.mxu0
        %v5367 = vadd.f32 0.0, %v5366
        %v5368 = vpop.f32.mrf.mxu0
        %v5369 = vadd.f32 0.0, %v5368
        %5370 = vmatmul.bf16.gmra.mxu0 %v5327
        %v5371 = vpop.f32.mrf.mxu0
        %v5372 = vadd.f32 0.0, %v5371
        %v5373 = vpop.f32.mrf.mxu0
        %v5374 = vadd.f32 0.0, %v5373
        %5375 = vmatmul.bf16.gmra.mxu0 %v5330
        %v5376 = vpop.f32.mrf.mxu0
        %v5377 = vadd.f32 0.0, %v5376
        %v5378 = vpop.f32.mrf.mxu0
        %v5379 = vadd.f32 0.0, %v5378
        %5380 = vdwg.mxu0
        %v5381 = vadd.f32 %v5019, %v5342
        %v5382 = vadd.f32 %v5020, %v5344
        %v5383 = vadd.f32 %v5021, %v5347
        %v5384 = vadd.f32 %v5022, %v5349
        %v5385 = vadd.f32 %v5023, %v5352
        %v5386 = vadd.f32 %v5024, %v5354
        %v5387 = vadd.f32 %v5025, %v5357
        %v5388 = vadd.f32 %v5026, %v5359
        %v5389 = vadd.f32 %v5027, %v5362
        %v5390 = vadd.f32 %v5028, %v5364
        %v5391 = vadd.f32 %v5029, %v5367
        %v5392 = vadd.f32 %v5030, %v5369
        %v5393 = vadd.f32 %v5031, %v5372
        %v5394 = vadd.f32 %v5032, %v5374
        %v5395 = vadd.f32 %v5033, %v5377
        %v5396 = vadd.f32 %v5034, %v5379
        %v5397 = vld [vmem:[%s4856] sm:$0xe]
        %v5398 = vld [vmem:[%s4856 + $0xc] sm:$0xe]
        %v5399 = vld [vmem:[%s4856 + $0x18] sm:$0xe]
        %v5400 = vld [vmem:[%s4856 + $0x24] sm:$0xe]
        %v5401 = vld [vmem:[%s4856 + $0x30] sm:$0xe]
        %v5402 = vld [vmem:[%s4856 + $0x3c] sm:$0xe]
        %v5403 = vld [vmem:[%s4856 + $0x48] sm:$0xe]
        %v5404 = vld [vmem:[%s4856 + $0x54] sm:$0xe]
        %v5429 = vrot.slane %v5397, 5
        %v5430 = vrot.slane %v5429, 4
        %v5431 = vrot.slane %v5036, 5
        %v5432 = vsel %vm1547, %v5430, %v5431
        %v5433 = vrot.slane %v5431, 4
        %v5434 = vrot.slane %v5037, 5
        %v5435 = vsel %vm1547, %v5433, %v5434
        %v5436 = vrot.slane %v5398, 5
        %v5437 = vrot.slane %v5436, 4
        %v5438 = vrot.slane %v5039, 5
        %v5439 = vsel %vm1547, %v5437, %v5438
        %v5440 = vrot.slane %v5438, 4
        %v5441 = vrot.slane %v5040, 5
        %v5442 = vsel %vm1547, %v5440, %v5441
        %v5443 = vrot.slane %v5399, 5
        %v5444 = vrot.slane %v5443, 4
        %v5445 = vrot.slane %v5042, 5
        %v5446 = vsel %vm1547, %v5444, %v5445
        %v5447 = vrot.slane %v5445, 4
        %v5448 = vrot.slane %v5043, 5
        %v5449 = vsel %vm1547, %v5447, %v5448
        %v5450 = vrot.slane %v5400, 5
        %v5451 = vrot.slane %v5450, 4
        %v5452 = vrot.slane %v5045, 5
        %v5453 = vsel %vm1547, %v5451, %v5452
        %v5454 = vrot.slane %v5452, 4
        %v5455 = vrot.slane %v5046, 5
        %v5456 = vsel %vm1547, %v5454, %v5455
        %v5457 = vrot.slane %v5401, 5
        %v5458 = vrot.slane %v5457, 4
        %v5459 = vrot.slane %v5048, 5
        %v5460 = vsel %vm1547, %v5458, %v5459
        %v5461 = vrot.slane %v5459, 4
        %v5462 = vrot.slane %v5049, 5
        %v5463 = vsel %vm1547, %v5461, %v5462
        %v5464 = vrot.slane %v5402, 5
        %v5465 = vrot.slane %v5464, 4
        %v5466 = vrot.slane %v5051, 5
        %v5467 = vsel %vm1547, %v5465, %v5466
        %v5468 = vrot.slane %v5466, 4
        %v5469 = vrot.slane %v5052, 5
        %v5470 = vsel %vm1547, %v5468, %v5469
        %v5471 = vrot.slane %v5403, 5
        %v5472 = vrot.slane %v5471, 4
        %v5473 = vrot.slane %v5054, 5
        %v5474 = vsel %vm1547, %v5472, %v5473
        %v5475 = vrot.slane %v5473, 4
        %v5476 = vrot.slane %v5055, 5
        %v5477 = vsel %vm1547, %v5475, %v5476
        %v5478 = vrot.slane %v5404, 5
        %v5479 = vrot.slane %v5478, 4
        %v5480 = vrot.slane %v5057, 5
        %v5481 = vsel %vm1547, %v5479, %v5480
        %v5482 = vrot.slane %v5480, 4
        %v5483 = vrot.slane %v5058, 5
        %v5484 = vsel %vm1547, %v5482, %v5483
        %s5485 = scalar_lea.vmem %s5, 160
        %v5486 = vld [vmem:[%s5485] sm:$0xf]
        %v5487 = vld [vmem:[%s5485 + $0x4] sm:$0xf]
        %v5488 = vld [vmem:[%s5485 + $0x8] sm:$0xf]
        %v5489 = vld [vmem:[%s5485 + $0xc] sm:$0xf]
        %v5490 = vld [vmem:[%s5485 + $0x10] sm:$0xf]
        %v5491 = vld [vmem:[%s5485 + $0x14] sm:$0xf]
        %v5492 = vld [vmem:[%s5485 + $0x18] sm:$0xf]
        %v5493 = vld [vmem:[%s5485 + $0x1c] sm:$0xf]
        %v5494 = vunpack.c.l.b16 %v5432
        %v5495 = vunpack.c.l.b16 %v5435
        %v5496 = vunpack.c.l.b16 %v5439
        %v5497 = vunpack.c.l.b16 %v5442
        %v5498 = vunpack.c.l.b16 %v5446
        %v5499 = vunpack.c.l.b16 %v5449
        %v5500 = vunpack.c.l.b16 %v5453
        %v5501 = vunpack.c.l.b16 %v5456
        %v5502 = vunpack.c.l.b16 %v5460
        %v5503 = vunpack.c.l.b16 %v5463
        %v5504 = vunpack.c.l.b16 %v5467
        %v5505 = vunpack.c.l.b16 %v5470
        %v5506 = vunpack.c.l.b16 %v5474
        %v5507 = vunpack.c.l.b16 %v5477
        %v5508 = vunpack.c.l.b16 %v5481
        %v5509 = vunpack.c.l.b16 %v5484
        %v5510 = vpack.c.b16 %v5495, %v5494
        %v5511 = vpack.c.b16 %v5497, %v5496
        %v5512 = vpack.c.b16 %v5499, %v5498
        %v5513 = vpack.c.b16 %v5501, %v5500
        %v5514 = vpack.c.b16 %v5503, %v5502
        %v5515 = vpack.c.b16 %v5505, %v5504
        %v5516 = vpack.c.b16 %v5507, %v5506
        %v5517 = vpack.c.b16 %v5509, %v5508
        %v5526 = vunpack.c.l.b16 %v5486
        %v5527 = vunpack.c.l.b16 %v5487
        %v5528 = vunpack.c.l.b16 %v5488
        %v5529 = vunpack.c.l.b16 %v5489
        %v5530 = vunpack.c.l.b16 %v5490
        %v5531 = vunpack.c.l.b16 %v5491
        %v5532 = vunpack.c.l.b16 %v5492
        %v5533 = vunpack.c.l.b16 %v5493
        %v5534 = vpack.c.b16 %v5527, %v5526
        %v5535 = vpack.c.b16 %v5529, %v5528
        %v5536 = vpack.c.b16 %v5531, %v5530
        %v5537 = vpack.c.b16 %v5533, %v5532
        %v5543 = vsel %vm1262, %v5510, 0
        %v5546 = vsel %vm1262, %v5511, 0
        %v5549 = vsel %vm1262, %v5512, 0
        %v5552 = vsel %vm1262, %v5513, 0
        %v5555 = vsel %vm1262, %v5514, 0
        %v5558 = vsel %vm1262, %v5515, 0
        %v5561 = vsel %vm1262, %v5516, 0
        %v5564 = vsel %vm1262, %v5517, 0
        %5566 = vmatpush.bf16.msra.mxu0 0
        %5567 = vmatpush.bf16.msra.mxu0 0
        %5568 = vmatpush.bf16.msra.mxu0 0
        %5569 = vmatpush.bf16.msra.mxu0 0
        %5570 = vmatpush.bf16.msra.mxu0 %v5537
        %5571 = vmatpush.bf16.msra.mxu0 %v5536
        %5572 = vmatpush.bf16.msra.mxu0 %v5535
        %5573 = vmatpush.bf16.msra.mxu0 %v5534
        %5574 = vmatmul.bf16.gmra.mxu0 %v5543
        %v5575 = vpop.f32.mrf.mxu0
        %v5576 = vadd.f32 0.0, %v5575
        %v5577 = vpop.f32.mrf.mxu0
        %v5578 = vadd.f32 0.0, %v5577
        %5579 = vmatmul.bf16.gmra.mxu0 %v5546
        %v5580 = vpop.f32.mrf.mxu0
        %v5581 = vadd.f32 0.0, %v5580
        %v5582 = vpop.f32.mrf.mxu0
        %v5583 = vadd.f32 0.0, %v5582
        %5584 = vmatmul.bf16.gmra.mxu0 %v5549
        %v5585 = vpop.f32.mrf.mxu0
        %v5586 = vadd.f32 0.0, %v5585
        %v5587 = vpop.f32.mrf.mxu0
        %v5588 = vadd.f32 0.0, %v5587
        %5589 = vmatmul.bf16.gmra.mxu0 %v5552
        %v5590 = vpop.f32.mrf.mxu0
        %v5591 = vadd.f32 0.0, %v5590
        %v5592 = vpop.f32.mrf.mxu0
        %v5593 = vadd.f32 0.0, %v5592
        %5594 = vmatmul.bf16.gmra.mxu0 %v5555
        %v5595 = vpop.f32.mrf.mxu0
        %v5596 = vadd.f32 0.0, %v5595
        %v5597 = vpop.f32.mrf.mxu0
        %v5598 = vadd.f32 0.0, %v5597
        %5599 = vmatmul.bf16.gmra.mxu0 %v5558
        %v5600 = vpop.f32.mrf.mxu0
        %v5601 = vadd.f32 0.0, %v5600
        %v5602 = vpop.f32.mrf.mxu0
        %v5603 = vadd.f32 0.0, %v5602
        %5604 = vmatmul.bf16.gmra.mxu0 %v5561
        %v5605 = vpop.f32.mrf.mxu0
        %v5606 = vadd.f32 0.0, %v5605
        %v5607 = vpop.f32.mrf.mxu0
        %v5608 = vadd.f32 0.0, %v5607
        %5609 = vmatmul.bf16.gmra.mxu0 %v5564
        %v5610 = vpop.f32.mrf.mxu0
        %v5611 = vadd.f32 0.0, %v5610
        %v5612 = vpop.f32.mrf.mxu0
        %v5613 = vadd.f32 0.0, %v5612
        %5614 = vdwg.mxu0
        %v5615 = vadd.f32 %v5381, %v5576
        %v5616 = vadd.f32 %v5382, %v5578
        %v5617 = vadd.f32 %v5383, %v5581
        %v5618 = vadd.f32 %v5384, %v5583
        %v5619 = vadd.f32 %v5385, %v5586
        %v5620 = vadd.f32 %v5386, %v5588
        %v5621 = vadd.f32 %v5387, %v5591
        %v5622 = vadd.f32 %v5388, %v5593
        %v5623 = vadd.f32 %v5389, %v5596
        %v5624 = vadd.f32 %v5390, %v5598
        %v5625 = vadd.f32 %v5391, %v5601
        %v5626 = vadd.f32 %v5392, %v5603
        %v5627 = vadd.f32 %v5393, %v5606
        %v5628 = vadd.f32 %v5394, %v5608
        %v5629 = vadd.f32 %v5395, %v5611
        %v5630 = vadd.f32 %v5396, %v5613
        %s5631 = scalar_lea.vmem [#allocation3], 24
        %v5632 = vld [vmem:[%s5631] sm:$0xf]
        %v5633 = vld [vmem:[%s5631 + $0x4] sm:$0xf]
        %v5634 = vld [vmem:[%s5631 + $0xc] sm:$0xf]
        %v5635 = vld [vmem:[%s5631 + $0x10] sm:$0xf]
        %v5636 = vld [vmem:[%s5631 + $0x18] sm:$0xf]
        %v5637 = vld [vmem:[%s5631 + $0x1c] sm:$0xf]
        %v5638 = vld [vmem:[%s5631 + $0x24] sm:$0xf]
        %v5639 = vld [vmem:[%s5631 + $0x28] sm:$0xf]
        %v5640 = vld [vmem:[%s5631 + $0x30] sm:$0xf]
        %v5641 = vld [vmem:[%s5631 + $0x34] sm:$0xf]
        %v5642 = vld [vmem:[%s5631 + $0x3c] sm:$0xf]
        %v5643 = vld [vmem:[%s5631 + $0x40] sm:$0xf]
        %v5644 = vld [vmem:[%s5631 + $0x48] sm:$0xf]
        %v5645 = vld [vmem:[%s5631 + $0x4c] sm:$0xf]
        %v5646 = vld [vmem:[%s5631 + $0x54] sm:$0xf]
        %v5647 = vld [vmem:[%s5631 + $0x58] sm:$0xf]
        %s5648 = scalar_lea.vmem %s5, 192
        %v5649 = vld [vmem:[%s5648] sm:$0xf]
        %v5650 = vld [vmem:[%s5648 + $0x4] sm:$0xf]
        %v5651 = vld [vmem:[%s5648 + $0x8] sm:$0xf]
        %v5652 = vld [vmem:[%s5648 + $0xc] sm:$0xf]
        %v5653 = vld [vmem:[%s5648 + $0x10] sm:$0xf]
        %v5654 = vld [vmem:[%s5648 + $0x14] sm:$0xf]
        %v5655 = vld [vmem:[%s5648 + $0x18] sm:$0xf]
        %v5656 = vld [vmem:[%s5648 + $0x1c] sm:$0xf]
        %v5673 = vunpack.c.l.b16 %v5632
        %v5674 = vunpack.c.l.b16 %v5633
        %v5675 = vunpack.c.l.b16 %v5634
        %v5676 = vunpack.c.l.b16 %v5635
        %v5677 = vunpack.c.l.b16 %v5636
        %v5678 = vunpack.c.l.b16 %v5637
        %v5679 = vunpack.c.l.b16 %v5638
        %v5680 = vunpack.c.l.b16 %v5639
        %v5681 = vunpack.c.l.b16 %v5640
        %v5682 = vunpack.c.l.b16 %v5641
        %v5683 = vunpack.c.l.b16 %v5642
        %v5684 = vunpack.c.l.b16 %v5643
        %v5685 = vunpack.c.l.b16 %v5644
        %v5686 = vunpack.c.l.b16 %v5645
        %v5687 = vunpack.c.l.b16 %v5646
        %v5688 = vunpack.c.l.b16 %v5647
        %v5689 = vpack.c.b16 %v5674, %v5673
        %v5690 = vpack.c.b16 %v5676, %v5675
        %v5691 = vpack.c.b16 %v5678, %v5677
        %v5692 = vpack.c.b16 %v5680, %v5679
        %v5693 = vpack.c.b16 %v5682, %v5681
        %v5694 = vpack.c.b16 %v5684, %v5683
        %v5695 = vpack.c.b16 %v5686, %v5685
        %v5696 = vpack.c.b16 %v5688, %v5687
        %v5705 = vunpack.c.l.b16 %v5649
        %v5706 = vunpack.c.l.b16 %v5650
        %v5707 = vunpack.c.l.b16 %v5651
        %v5708 = vunpack.c.l.b16 %v5652
        %v5709 = vunpack.c.l.b16 %v5653
        %v5710 = vunpack.c.l.b16 %v5654
        %v5711 = vunpack.c.l.b16 %v5655
        %v5712 = vunpack.c.l.b16 %v5656
        %v5713 = vpack.c.b16 %v5706, %v5705
        %v5714 = vpack.c.b16 %v5708, %v5707
        %v5715 = vpack.c.b16 %v5710, %v5709
        %v5716 = vpack.c.b16 %v5712, %v5711
        %v5722 = vsel %vm1262, %v5689, 0
        %v5725 = vsel %vm1262, %v5690, 0
        %v5728 = vsel %vm1262, %v5691, 0
        %v5731 = vsel %vm1262, %v5692, 0
        %v5734 = vsel %vm1262, %v5693, 0
        %v5737 = vsel %vm1262, %v5694, 0
        %v5740 = vsel %vm1262, %v5695, 0
        %v5743 = vsel %vm1262, %v5696, 0
        %5745 = vmatpush.bf16.msra.mxu0 0
        %5746 = vmatpush.bf16.msra.mxu0 0
        %5747 = vmatpush.bf16.msra.mxu0 0
        %5748 = vmatpush.bf16.msra.mxu0 0
        %5749 = vmatpush.bf16.msra.mxu0 %v5716
        %5750 = vmatpush.bf16.msra.mxu0 %v5715
        %5751 = vmatpush.bf16.msra.mxu0 %v5714
        %5752 = vmatpush.bf16.msra.mxu0 %v5713
        %5753 = vmatmul.bf16.gmra.mxu0 %v5722
        %v5754 = vpop.f32.mrf.mxu0
        %v5755 = vadd.f32 0.0, %v5754
        %v5756 = vpop.f32.mrf.mxu0
        %v5757 = vadd.f32 0.0, %v5756
        %5758 = vmatmul.bf16.gmra.mxu0 %v5725
        %v5759 = vpop.f32.mrf.mxu0
        %v5760 = vadd.f32 0.0, %v5759
        %v5761 = vpop.f32.mrf.mxu0
        %v5762 = vadd.f32 0.0, %v5761
        %5763 = vmatmul.bf16.gmra.mxu0 %v5728
        %v5764 = vpop.f32.mrf.mxu0
        %v5765 = vadd.f32 0.0, %v5764
        %v5766 = vpop.f32.mrf.mxu0
        %v5767 = vadd.f32 0.0, %v5766
        %5768 = vmatmul.bf16.gmra.mxu0 %v5731
        %v5769 = vpop.f32.mrf.mxu0
        %v5770 = vadd.f32 0.0, %v5769
        %v5771 = vpop.f32.mrf.mxu0
        %v5772 = vadd.f32 0.0, %v5771
        %5773 = vmatmul.bf16.gmra.mxu0 %v5734
        %v5774 = vpop.f32.mrf.mxu0
        %v5775 = vadd.f32 0.0, %v5774
        %v5776 = vpop.f32.mrf.mxu0
        %v5777 = vadd.f32 0.0, %v5776
        %5778 = vmatmul.bf16.gmra.mxu0 %v5737
        %v5779 = vpop.f32.mrf.mxu0
        %v5780 = vadd.f32 0.0, %v5779
        %v5781 = vpop.f32.mrf.mxu0
        %v5782 = vadd.f32 0.0, %v5781
        %5783 = vmatmul.bf16.gmra.mxu0 %v5740
        %v5784 = vpop.f32.mrf.mxu0
        %v5785 = vadd.f32 0.0, %v5784
        %v5786 = vpop.f32.mrf.mxu0
        %v5787 = vadd.f32 0.0, %v5786
        %5788 = vmatmul.bf16.gmra.mxu0 %v5743
        %v5789 = vpop.f32.mrf.mxu0
        %v5790 = vadd.f32 0.0, %v5789
        %v5791 = vpop.f32.mrf.mxu0
        %v5792 = vadd.f32 0.0, %v5791
        %5793 = vdwg.mxu0
        %v5794 = vadd.f32 %v5615, %v5755
        %v5795 = vadd.f32 %v5616, %v5757
        %v5796 = vadd.f32 %v5617, %v5760
        %v5797 = vadd.f32 %v5618, %v5762
        %v5798 = vadd.f32 %v5619, %v5765
        %v5799 = vadd.f32 %v5620, %v5767
        %v5800 = vadd.f32 %v5621, %v5770
        %v5801 = vadd.f32 %v5622, %v5772
        %v5802 = vadd.f32 %v5623, %v5775
        %v5803 = vadd.f32 %v5624, %v5777
        %v5804 = vadd.f32 %v5625, %v5780
        %v5805 = vadd.f32 %v5626, %v5782
        %v5806 = vadd.f32 %v5627, %v5785
        %v5807 = vadd.f32 %v5628, %v5787
        %v5808 = vadd.f32 %v5629, %v5790
        %v5809 = vadd.f32 %v5630, %v5792
        %v5810 = vld [vmem:[%s5631] sm:$0xf]
        %v5811 = vld [vmem:[%s5631 + $0x4] sm:$0xf]
        %v5812 = vld [vmem:[%s5631 + $0x8] sm:$0x1]
        %v5813 = vld [vmem:[%s5631 + $0xc] sm:$0xf]
        %v5814 = vld [vmem:[%s5631 + $0x10] sm:$0xf]
        %v5815 = vld [vmem:[%s5631 + $0x14] sm:$0x1]
        %v5816 = vld [vmem:[%s5631 + $0x18] sm:$0xf]
        %v5817 = vld [vmem:[%s5631 + $0x1c] sm:$0xf]
        %v5818 = vld [vmem:[%s5631 + $0x20] sm:$0x1]
        %v5819 = vld [vmem:[%s5631 + $0x24] sm:$0xf]
        %v5820 = vld [vmem:[%s5631 + $0x28] sm:$0xf]
        %v5821 = vld [vmem:[%s5631 + $0x2c] sm:$0x1]
        %v5822 = vld [vmem:[%s5631 + $0x30] sm:$0xf]
        %v5823 = vld [vmem:[%s5631 + $0x34] sm:$0xf]
        %v5824 = vld [vmem:[%s5631 + $0x38] sm:$0x1]
        %v5825 = vld [vmem:[%s5631 + $0x3c] sm:$0xf]
        %v5826 = vld [vmem:[%s5631 + $0x40] sm:$0xf]
        %v5827 = vld [vmem:[%s5631 + $0x44] sm:$0x1]
        %v5828 = vld [vmem:[%s5631 + $0x48] sm:$0xf]
        %v5829 = vld [vmem:[%s5631 + $0x4c] sm:$0xf]
        %v5830 = vld [vmem:[%s5631 + $0x50] sm:$0x1]
        %v5831 = vld [vmem:[%s5631 + $0x54] sm:$0xf]
        %v5832 = vld [vmem:[%s5631 + $0x58] sm:$0xf]
        %v5833 = vld [vmem:[%s5631 + $0x5c] sm:$0x1]
        %v5835 = vshrl.u32 %v5810, 16
        %v5837 = vrot.slane %v5835, 4
        %v5838 = vshll.u32 %v5810, 16
        %v5840 = vrot.slane %v5838, 5
        %v5841 = vor.u32 %v5837, %v5840
        %v5842 = vrot.slane %v5841, 4
        %v5844 = vshll.u32 %v5811, 16
        %v5846 = vrot.slane %v5844, 5
        %v5847 = vsel %vm958, %v5842, %v5846
        %v5848 = vshrl.u32 %v5811, 16
        %v5850 = vrot.slane %v5848, 4
        %v5851 = vor.u32 %v5850, %v5846
        %v5852 = vrot.slane %v5851, 4
        %v5854 = vshll.u32 %v5812, 16
        %v5856 = vrot.slane %v5854, 5
        %v5857 = vsel %vm958, %v5852, %v5856
        %v5859 = vshrl.u32 %v5813, 16
        %v5861 = vrot.slane %v5859, 4
        %v5862 = vshll.u32 %v5813, 16
        %v5864 = vrot.slane %v5862, 5
        %v5865 = vor.u32 %v5861, %v5864
        %v5866 = vrot.slane %v5865, 4
        %v5868 = vshll.u32 %v5814, 16
        %v5870 = vrot.slane %v5868, 5
        %v5871 = vsel %vm958, %v5866, %v5870
        %v5872 = vshrl.u32 %v5814, 16
        %v5874 = vrot.slane %v5872, 4
        %v5875 = vor.u32 %v5874, %v5870
        %v5876 = vrot.slane %v5875, 4
        %v5878 = vshll.u32 %v5815, 16
        %v5880 = vrot.slane %v5878, 5
        %v5881 = vsel %vm958, %v5876, %v5880
        %v5883 = vshrl.u32 %v5816, 16
        %v5885 = vrot.slane %v5883, 4
        %v5886 = vshll.u32 %v5816, 16
        %v5888 = vrot.slane %v5886, 5
        %v5889 = vor.u32 %v5885, %v5888
        %v5890 = vrot.slane %v5889, 4
        %v5892 = vshll.u32 %v5817, 16
        %v5894 = vrot.slane %v5892, 5
        %v5895 = vsel %vm958, %v5890, %v5894
        %v5896 = vshrl.u32 %v5817, 16
        %v5898 = vrot.slane %v5896, 4
        %v5899 = vor.u32 %v5898, %v5894
        %v5900 = vrot.slane %v5899, 4
        %v5902 = vshll.u32 %v5818, 16
        %v5904 = vrot.slane %v5902, 5
        %v5905 = vsel %vm958, %v5900, %v5904
        %v5907 = vshrl.u32 %v5819, 16
        %v5909 = vrot.slane %v5907, 4
        %v5910 = vshll.u32 %v5819, 16
        %v5912 = vrot.slane %v5910, 5
        %v5913 = vor.u32 %v5909, %v5912
        %v5914 = vrot.slane %v5913, 4
        %v5916 = vshll.u32 %v5820, 16
        %v5918 = vrot.slane %v5916, 5
        %v5919 = vsel %vm958, %v5914, %v5918
        %v5920 = vshrl.u32 %v5820, 16
        %v5922 = vrot.slane %v5920, 4
        %v5923 = vor.u32 %v5922, %v5918
        %v5924 = vrot.slane %v5923, 4
        %v5926 = vshll.u32 %v5821, 16
        %v5928 = vrot.slane %v5926, 5
        %v5929 = vsel %vm958, %v5924, %v5928
        %v5931 = vshrl.u32 %v5822, 16
        %v5933 = vrot.slane %v5931, 4
        %v5934 = vshll.u32 %v5822, 16
        %v5936 = vrot.slane %v5934, 5
        %v5937 = vor.u32 %v5933, %v5936
        %v5938 = vrot.slane %v5937, 4
        %v5940 = vshll.u32 %v5823, 16
        %v5942 = vrot.slane %v5940, 5
        %v5943 = vsel %vm958, %v5938, %v5942
        %v5944 = vshrl.u32 %v5823, 16
        %v5946 = vrot.slane %v5944, 4
        %v5947 = vor.u32 %v5946, %v5942
        %v5948 = vrot.slane %v5947, 4
        %v5950 = vshll.u32 %v5824, 16
        %v5952 = vrot.slane %v5950, 5
        %v5953 = vsel %vm958, %v5948, %v5952
        %v5955 = vshrl.u32 %v5825, 16
        %v5957 = vrot.slane %v5955, 4
        %v5958 = vshll.u32 %v5825, 16
        %v5960 = vrot.slane %v5958, 5
        %v5961 = vor.u32 %v5957, %v5960
        %v5962 = vrot.slane %v5961, 4
        %v5964 = vshll.u32 %v5826, 16
        %v5966 = vrot.slane %v5964, 5
        %v5967 = vsel %vm958, %v5962, %v5966
        %v5968 = vshrl.u32 %v5826, 16
        %v5970 = vrot.slane %v5968, 4
        %v5971 = vor.u32 %v5970, %v5966
        %v5972 = vrot.slane %v5971, 4
        %v5974 = vshll.u32 %v5827, 16
        %v5976 = vrot.slane %v5974, 5
        %v5977 = vsel %vm958, %v5972, %v5976
        %v5979 = vshrl.u32 %v5828, 16
        %v5981 = vrot.slane %v5979, 4
        %v5982 = vshll.u32 %v5828, 16
        %v5984 = vrot.slane %v5982, 5
        %v5985 = vor.u32 %v5981, %v5984
        %v5986 = vrot.slane %v5985, 4
        %v5988 = vshll.u32 %v5829, 16
        %v5990 = vrot.slane %v5988, 5
        %v5991 = vsel %vm958, %v5986, %v5990
        %v5992 = vshrl.u32 %v5829, 16
        %v5994 = vrot.slane %v5992, 4
        %v5995 = vor.u32 %v5994, %v5990
        %v5996 = vrot.slane %v5995, 4
        %v5998 = vshll.u32 %v5830, 16
        %v6000 = vrot.slane %v5998, 5
        %v6001 = vsel %vm958, %v5996, %v6000
        %v6003 = vshrl.u32 %v5831, 16
        %v6005 = vrot.slane %v6003, 4
        %v6006 = vshll.u32 %v5831, 16
        %v6008 = vrot.slane %v6006, 5
        %v6009 = vor.u32 %v6005, %v6008
        %v6010 = vrot.slane %v6009, 4
        %v6012 = vshll.u32 %v5832, 16
        %v6014 = vrot.slane %v6012, 5
        %v6015 = vsel %vm958, %v6010, %v6014
        %v6016 = vshrl.u32 %v5832, 16
        %v6018 = vrot.slane %v6016, 4
        %v6019 = vor.u32 %v6018, %v6014
        %v6020 = vrot.slane %v6019, 4
        %v6022 = vshll.u32 %v5833, 16
        %v6024 = vrot.slane %v6022, 5
        %v6025 = vsel %vm958, %v6020, %v6024
        %s6026 = scalar_lea.vmem %s5, 224
        %v6027 = vld [vmem:[%s6026] sm:$0xf]
        %v6028 = vld [vmem:[%s6026 + $0x4] sm:$0xf]
        %v6029 = vld [vmem:[%s6026 + $0x8] sm:$0xf]
        %v6030 = vld [vmem:[%s6026 + $0xc] sm:$0xf]
        %v6031 = vld [vmem:[%s6026 + $0x10] sm:$0xf]
        %v6032 = vld [vmem:[%s6026 + $0x14] sm:$0xf]
        %v6033 = vld [vmem:[%s6026 + $0x18] sm:$0xf]
        %v6034 = vld [vmem:[%s6026 + $0x1c] sm:$0xf]
        %v6035 = vunpack.c.l.b16 %v5847
        %v6036 = vunpack.c.l.b16 %v5857
        %v6037 = vunpack.c.l.b16 %v5871
        %v6038 = vunpack.c.l.b16 %v5881
        %v6039 = vunpack.c.l.b16 %v5895
        %v6040 = vunpack.c.l.b16 %v5905
        %v6041 = vunpack.c.l.b16 %v5919
        %v6042 = vunpack.c.l.b16 %v5929
        %v6043 = vunpack.c.l.b16 %v5943
        %v6044 = vunpack.c.l.b16 %v5953
        %v6045 = vunpack.c.l.b16 %v5967
        %v6046 = vunpack.c.l.b16 %v5977
        %v6047 = vunpack.c.l.b16 %v5991
        %v6048 = vunpack.c.l.b16 %v6001
        %v6049 = vunpack.c.l.b16 %v6015
        %v6050 = vunpack.c.l.b16 %v6025
        %v6051 = vpack.c.b16 %v6036, %v6035
        %v6052 = vpack.c.b16 %v6038, %v6037
        %v6053 = vpack.c.b16 %v6040, %v6039
        %v6054 = vpack.c.b16 %v6042, %v6041
        %v6055 = vpack.c.b16 %v6044, %v6043
        %v6056 = vpack.c.b16 %v6046, %v6045
        %v6057 = vpack.c.b16 %v6048, %v6047
        %v6058 = vpack.c.b16 %v6050, %v6049
        %v6067 = vunpack.c.l.b16 %v6027
        %v6068 = vunpack.c.l.b16 %v6028
        %v6069 = vunpack.c.l.b16 %v6029
        %v6070 = vunpack.c.l.b16 %v6030
        %v6071 = vunpack.c.l.b16 %v6031
        %v6072 = vunpack.c.l.b16 %v6032
        %v6073 = vunpack.c.l.b16 %v6033
        %v6074 = vunpack.c.l.b16 %v6034
        %v6075 = vpack.c.b16 %v6068, %v6067
        %v6076 = vpack.c.b16 %v6070, %v6069
        %v6077 = vpack.c.b16 %v6072, %v6071
        %v6078 = vpack.c.b16 %v6074, %v6073
        %v6084 = vsel %vm1262, %v6051, 0
        %v6087 = vsel %vm1262, %v6052, 0
        %v6090 = vsel %vm1262, %v6053, 0
        %v6093 = vsel %vm1262, %v6054, 0
        %v6096 = vsel %vm1262, %v6055, 0
        %v6099 = vsel %vm1262, %v6056, 0
        %v6102 = vsel %vm1262, %v6057, 0
        %v6105 = vsel %vm1262, %v6058, 0
        %6107 = vmatpush.bf16.msra.mxu0 0
        %6108 = vmatpush.bf16.msra.mxu0 0
        %6109 = vmatpush.bf16.msra.mxu0 0
        %6110 = vmatpush.bf16.msra.mxu0 0
        %6111 = vmatpush.bf16.msra.mxu0 %v6078
        %6112 = vmatpush.bf16.msra.mxu0 %v6077
        %6113 = vmatpush.bf16.msra.mxu0 %v6076
        %6114 = vmatpush.bf16.msra.mxu0 %v6075
        %6115 = vmatmul.bf16.gmra.mxu0 %v6084
        %v6116 = vpop.f32.mrf.mxu0
        %v6117 = vadd.f32 0.0, %v6116
        %v6118 = vpop.f32.mrf.mxu0
        %v6119 = vadd.f32 0.0, %v6118
        %6120 = vmatmul.bf16.gmra.mxu0 %v6087
        %v6121 = vpop.f32.mrf.mxu0
        %v6122 = vadd.f32 0.0, %v6121
        %v6123 = vpop.f32.mrf.mxu0
        %v6124 = vadd.f32 0.0, %v6123
        %6125 = vmatmul.bf16.gmra.mxu0 %v6090
        %v6126 = vpop.f32.mrf.mxu0
        %v6127 = vadd.f32 0.0, %v6126
        %v6128 = vpop.f32.mrf.mxu0
        %v6129 = vadd.f32 0.0, %v6128
        %6130 = vmatmul.bf16.gmra.mxu0 %v6093
        %v6131 = vpop.f32.mrf.mxu0
        %v6132 = vadd.f32 0.0, %v6131
        %v6133 = vpop.f32.mrf.mxu0
        %v6134 = vadd.f32 0.0, %v6133
        %6135 = vmatmul.bf16.gmra.mxu0 %v6096
        %v6136 = vpop.f32.mrf.mxu0
        %v6137 = vadd.f32 0.0, %v6136
        %v6138 = vpop.f32.mrf.mxu0
        %v6139 = vadd.f32 0.0, %v6138
        %6140 = vmatmul.bf16.gmra.mxu0 %v6099
        %v6141 = vpop.f32.mrf.mxu0
        %v6142 = vadd.f32 0.0, %v6141
        %v6143 = vpop.f32.mrf.mxu0
        %v6144 = vadd.f32 0.0, %v6143
        %6145 = vmatmul.bf16.gmra.mxu0 %v6102
        %v6146 = vpop.f32.mrf.mxu0
        %v6147 = vadd.f32 0.0, %v6146
        %v6148 = vpop.f32.mrf.mxu0
        %v6149 = vadd.f32 0.0, %v6148
        %6150 = vmatmul.bf16.gmra.mxu0 %v6105
        %v6151 = vpop.f32.mrf.mxu0
        %v6152 = vadd.f32 0.0, %v6151
        %v6153 = vpop.f32.mrf.mxu0
        %v6154 = vadd.f32 0.0, %v6153
        %6155 = vdwg.mxu0
        %v6156 = vadd.f32 %v5794, %v6117
        %v6157 = vadd.f32 %v5795, %v6119
        %v6158 = vadd.f32 %v5796, %v6122
        %v6159 = vadd.f32 %v5797, %v6124
        %v6160 = vadd.f32 %v5798, %v6127
        %v6161 = vadd.f32 %v5799, %v6129
        %v6162 = vadd.f32 %v5800, %v6132
        %v6163 = vadd.f32 %v5801, %v6134
        %v6164 = vadd.f32 %v5802, %v6137
        %v6165 = vadd.f32 %v5803, %v6139
        %v6166 = vadd.f32 %v5804, %v6142
        %v6167 = vadd.f32 %v5805, %v6144
        %v6168 = vadd.f32 %v5806, %v6147
        %v6169 = vadd.f32 %v5807, %v6149
        %v6170 = vadd.f32 %v5808, %v6152
        %v6171 = vadd.f32 %v5809, %v6154
        %v6172 = vld [vmem:[%s5631] sm:$0xe]
        %v6173 = vld [vmem:[%s5631 + $0xc] sm:$0xe]
        %v6174 = vld [vmem:[%s5631 + $0x18] sm:$0xe]
        %v6175 = vld [vmem:[%s5631 + $0x24] sm:$0xe]
        %v6176 = vld [vmem:[%s5631 + $0x30] sm:$0xe]
        %v6177 = vld [vmem:[%s5631 + $0x3c] sm:$0xe]
        %v6178 = vld [vmem:[%s5631 + $0x48] sm:$0xe]
        %v6179 = vld [vmem:[%s5631 + $0x54] sm:$0xe]
        %v6204 = vrot.slane %v6172, 5
        %v6205 = vrot.slane %v6204, 4
        %v6206 = vrot.slane %v5811, 5
        %v6207 = vsel %vm1547, %v6205, %v6206
        %v6208 = vrot.slane %v6206, 4
        %v6209 = vrot.slane %v5812, 5
        %v6210 = vsel %vm1547, %v6208, %v6209
        %v6211 = vrot.slane %v6173, 5
        %v6212 = vrot.slane %v6211, 4
        %v6213 = vrot.slane %v5814, 5
        %v6214 = vsel %vm1547, %v6212, %v6213
        %v6215 = vrot.slane %v6213, 4
        %v6216 = vrot.slane %v5815, 5
        %v6217 = vsel %vm1547, %v6215, %v6216
        %v6218 = vrot.slane %v6174, 5
        %v6219 = vrot.slane %v6218, 4
        %v6220 = vrot.slane %v5817, 5
        %v6221 = vsel %vm1547, %v6219, %v6220
        %v6222 = vrot.slane %v6220, 4
        %v6223 = vrot.slane %v5818, 5
        %v6224 = vsel %vm1547, %v6222, %v6223
        %v6225 = vrot.slane %v6175, 5
        %v6226 = vrot.slane %v6225, 4
        %v6227 = vrot.slane %v5820, 5
        %v6228 = vsel %vm1547, %v6226, %v6227
        %v6229 = vrot.slane %v6227, 4
        %v6230 = vrot.slane %v5821, 5
        %v6231 = vsel %vm1547, %v6229, %v6230
        %v6232 = vrot.slane %v6176, 5
        %v6233 = vrot.slane %v6232, 4
        %v6234 = vrot.slane %v5823, 5
        %v6235 = vsel %vm1547, %v6233, %v6234
        %v6236 = vrot.slane %v6234, 4
        %v6237 = vrot.slane %v5824, 5
        %v6238 = vsel %vm1547, %v6236, %v6237
        %v6239 = vrot.slane %v6177, 5
        %v6240 = vrot.slane %v6239, 4
        %v6241 = vrot.slane %v5826, 5
        %v6242 = vsel %vm1547, %v6240, %v6241
        %v6243 = vrot.slane %v6241, 4
        %v6244 = vrot.slane %v5827, 5
        %v6245 = vsel %vm1547, %v6243, %v6244
        %v6246 = vrot.slane %v6178, 5
        %v6247 = vrot.slane %v6246, 4
        %v6248 = vrot.slane %v5829, 5
        %v6249 = vsel %vm1547, %v6247, %v6248
        %v6250 = vrot.slane %v6248, 4
        %v6251 = vrot.slane %v5830, 5
        %v6252 = vsel %vm1547, %v6250, %v6251
        %v6253 = vrot.slane %v6179, 5
        %v6254 = vrot.slane %v6253, 4
        %v6255 = vrot.slane %v5832, 5
        %v6256 = vsel %vm1547, %v6254, %v6255
        %v6257 = vrot.slane %v6255, 4
        %v6258 = vrot.slane %v5833, 5
        %v6259 = vsel %vm1547, %v6257, %v6258
        %s6260 = scalar_lea.vmem %s5, 256
        %v6261 = vld [vmem:[%s6260] sm:$0xf]
        %v6262 = vld [vmem:[%s6260 + $0x4] sm:$0xf]
        %v6263 = vld [vmem:[%s6260 + $0x8] sm:$0xf]
        %v6264 = vld [vmem:[%s6260 + $0xc] sm:$0xf]
        %v6265 = vld [vmem:[%s6260 + $0x10] sm:$0xf]
        %v6266 = vld [vmem:[%s6260 + $0x14] sm:$0xf]
        %v6267 = vld [vmem:[%s6260 + $0x18] sm:$0xf]
        %v6268 = vld [vmem:[%s6260 + $0x1c] sm:$0xf]
        %v6269 = vunpack.c.l.b16 %v6207
        %v6270 = vunpack.c.l.b16 %v6210
        %v6271 = vunpack.c.l.b16 %v6214
        %v6272 = vunpack.c.l.b16 %v6217
        %v6273 = vunpack.c.l.b16 %v6221
        %v6274 = vunpack.c.l.b16 %v6224
        %v6275 = vunpack.c.l.b16 %v6228
        %v6276 = vunpack.c.l.b16 %v6231
        %v6277 = vunpack.c.l.b16 %v6235
        %v6278 = vunpack.c.l.b16 %v6238
        %v6279 = vunpack.c.l.b16 %v6242
        %v6280 = vunpack.c.l.b16 %v6245
        %v6281 = vunpack.c.l.b16 %v6249
        %v6282 = vunpack.c.l.b16 %v6252
        %v6283 = vunpack.c.l.b16 %v6256
        %v6284 = vunpack.c.l.b16 %v6259
        %v6285 = vpack.c.b16 %v6270, %v6269
        %v6286 = vpack.c.b16 %v6272, %v6271
        %v6287 = vpack.c.b16 %v6274, %v6273
        %v6288 = vpack.c.b16 %v6276, %v6275
        %v6289 = vpack.c.b16 %v6278, %v6277
        %v6290 = vpack.c.b16 %v6280, %v6279
        %v6291 = vpack.c.b16 %v6282, %v6281
        %v6292 = vpack.c.b16 %v6284, %v6283
        %v6301 = vunpack.c.l.b16 %v6261
        %v6302 = vunpack.c.l.b16 %v6262
        %v6303 = vunpack.c.l.b16 %v6263
        %v6304 = vunpack.c.l.b16 %v6264
        %v6305 = vunpack.c.l.b16 %v6265
        %v6306 = vunpack.c.l.b16 %v6266
        %v6307 = vunpack.c.l.b16 %v6267
        %v6308 = vunpack.c.l.b16 %v6268
        %v6309 = vpack.c.b16 %v6302, %v6301
        %v6310 = vpack.c.b16 %v6304, %v6303
        %v6311 = vpack.c.b16 %v6306, %v6305
        %v6312 = vpack.c.b16 %v6308, %v6307
        %v6318 = vsel %vm1262, %v6285, 0
        %v6321 = vsel %vm1262, %v6286, 0
        %v6324 = vsel %vm1262, %v6287, 0
        %v6327 = vsel %vm1262, %v6288, 0
        %v6330 = vsel %vm1262, %v6289, 0
        %v6333 = vsel %vm1262, %v6290, 0
        %v6336 = vsel %vm1262, %v6291, 0
        %v6339 = vsel %vm1262, %v6292, 0
        %6341 = vmatpush.bf16.msra.mxu0 0
        %6342 = vmatpush.bf16.msra.mxu0 0
        %6343 = vmatpush.bf16.msra.mxu0 0
        %6344 = vmatpush.bf16.msra.mxu0 0
        %6345 = vmatpush.bf16.msra.mxu0 %v6312
        %6346 = vmatpush.bf16.msra.mxu0 %v6311
        %6347 = vmatpush.bf16.msra.mxu0 %v6310
        %6348 = vmatpush.bf16.msra.mxu0 %v6309
        %6349 = vmatmul.bf16.gmra.mxu0 %v6318
        %v6350 = vpop.f32.mrf.mxu0
        %v6351 = vadd.f32 0.0, %v6350
        %v6352 = vpop.f32.mrf.mxu0
        %v6353 = vadd.f32 0.0, %v6352
        %6354 = vmatmul.bf16.gmra.mxu0 %v6321
        %v6355 = vpop.f32.mrf.mxu0
        %v6356 = vadd.f32 0.0, %v6355
        %v6357 = vpop.f32.mrf.mxu0
        %v6358 = vadd.f32 0.0, %v6357
        %6359 = vmatmul.bf16.gmra.mxu0 %v6324
        %v6360 = vpop.f32.mrf.mxu0
        %v6361 = vadd.f32 0.0, %v6360
        %v6362 = vpop.f32.mrf.mxu0
        %v6363 = vadd.f32 0.0, %v6362
        %6364 = vmatmul.bf16.gmra.mxu0 %v6327
        %v6365 = vpop.f32.mrf.mxu0
        %v6366 = vadd.f32 0.0, %v6365
        %v6367 = vpop.f32.mrf.mxu0
        %v6368 = vadd.f32 0.0, %v6367
        %6369 = vmatmul.bf16.gmra.mxu0 %v6330
        %v6370 = vpop.f32.mrf.mxu0
        %v6371 = vadd.f32 0.0, %v6370
        %v6372 = vpop.f32.mrf.mxu0
        %v6373 = vadd.f32 0.0, %v6372
        %6374 = vmatmul.bf16.gmra.mxu0 %v6333
        %v6375 = vpop.f32.mrf.mxu0
        %v6376 = vadd.f32 0.0, %v6375
        %v6377 = vpop.f32.mrf.mxu0
        %v6378 = vadd.f32 0.0, %v6377
        %6379 = vmatmul.bf16.gmra.mxu0 %v6336
        %v6380 = vpop.f32.mrf.mxu0
        %v6381 = vadd.f32 0.0, %v6380
        %v6382 = vpop.f32.mrf.mxu0
        %v6383 = vadd.f32 0.0, %v6382
        %6384 = vmatmul.bf16.gmra.mxu0 %v6339
        %v6385 = vpop.f32.mrf.mxu0
        %v6386 = vadd.f32 0.0, %v6385
        %v6387 = vpop.f32.mrf.mxu0
        %v6388 = vadd.f32 0.0, %v6387
        %6389 = vdwg.mxu0
        %v6390 = vadd.f32 %v6156, %v6351
        %v6391 = vadd.f32 %v6157, %v6353
        %v6392 = vadd.f32 %v6158, %v6356
        %v6393 = vadd.f32 %v6159, %v6358
        %v6394 = vadd.f32 %v6160, %v6361
        %v6395 = vadd.f32 %v6161, %v6363
        %v6396 = vadd.f32 %v6162, %v6366
        %v6397 = vadd.f32 %v6163, %v6368
        %v6398 = vadd.f32 %v6164, %v6371
        %v6399 = vadd.f32 %v6165, %v6373
        %v6400 = vadd.f32 %v6166, %v6376
        %v6401 = vadd.f32 %v6167, %v6378
        %v6402 = vadd.f32 %v6168, %v6381
        %v6403 = vadd.f32 %v6169, %v6383
        %v6404 = vadd.f32 %v6170, %v6386
        %v6405 = vadd.f32 %v6171, %v6388
        %v6406 = vld [vmem:[%s6] sm:$0x1]
        %v6408 = vperm.slane %v6406, 0
        %v6410 = vadd.f32 %v6390, %v6408
        %v6411 = vadd.f32 %v6391, %v6408
        %v6412 = vadd.f32 %v6392, %v6408
        %v6413 = vadd.f32 %v6393, %v6408
        %v6414 = vadd.f32 %v6394, %v6408
        %v6415 = vadd.f32 %v6395, %v6408
        %v6416 = vadd.f32 %v6396, %v6408
        %v6417 = vadd.f32 %v6397, %v6408
        %v6418 = vadd.f32 %v6398, %v6408
        %v6419 = vadd.f32 %v6399, %v6408
        %v6420 = vadd.f32 %v6400, %v6408
        %v6421 = vadd.f32 %v6401, %v6408
        %v6422 = vadd.f32 %v6402, %v6408
        %v6423 = vadd.f32 %v6403, %v6408
        %v6424 = vadd.f32 %v6404, %v6408
        %v6425 = vadd.f32 %v6405, %v6408
        %6442 = vrot.lane.b32.xlu0 %v6410, 64
        %v6443 = vpop.permute.xlu0 %6442
        %6444 = vrot.lane.b32.xlu0 %v6411, 64
        %v6445 = vpop.permute.xlu0 %6444
        %6446 = vrot.lane.b32.xlu0 %v6412, 64
        %v6447 = vpop.permute.xlu0 %6446
        %6448 = vrot.lane.b32.xlu0 %v6413, 64
        %v6449 = vpop.permute.xlu0 %6448
        %6450 = vrot.lane.b32.xlu0 %v6414, 64
        %v6451 = vpop.permute.xlu0 %6450
        %6452 = vrot.lane.b32.xlu0 %v6415, 64
        %v6453 = vpop.permute.xlu0 %6452
        %6454 = vrot.lane.b32.xlu0 %v6416, 64
        %v6455 = vpop.permute.xlu0 %6454
        %6456 = vrot.lane.b32.xlu0 %v6417, 64
        %v6457 = vpop.permute.xlu0 %6456
        %6458 = vrot.lane.b32.xlu0 %v6418, 64
        %v6459 = vpop.permute.xlu0 %6458
        %6460 = vrot.lane.b32.xlu0 %v6419, 64
        %v6461 = vpop.permute.xlu0 %6460
        %6462 = vrot.lane.b32.xlu0 %v6420, 64
        %v6463 = vpop.permute.xlu0 %6462
        %6464 = vrot.lane.b32.xlu0 %v6421, 64
        %v6465 = vpop.permute.xlu0 %6464
        %6466 = vrot.lane.b32.xlu0 %v6422, 64
        %v6467 = vpop.permute.xlu0 %6466
        %6468 = vrot.lane.b32.xlu0 %v6423, 64
        %v6469 = vpop.permute.xlu0 %6468
        %6470 = vrot.lane.b32.xlu0 %v6424, 64
        %v6471 = vpop.permute.xlu0 %6470
        %6472 = vrot.lane.b32.xlu0 %v6425, 64
        %v6473 = vpop.permute.xlu0 %6472
        %v6490 = vsel %vm1262, %v446, %v6443
        %v6491 = vsel %vm1262, %v447, %v6445
        %v6492 = vsel %vm1262, %v448, %v6447
        %v6493 = vsel %vm1262, %v449, %v6449
        %v6494 = vsel %vm1262, %v450, %v6451
        %v6495 = vsel %vm1262, %v451, %v6453
        %v6496 = vsel %vm1262, %v452, %v6455
        %v6497 = vsel %vm1262, %v453, %v6457
        %v6498 = vsel %vm1262, %v454, %v6459
        %v6499 = vsel %vm1262, %v455, %v6461
        %v6500 = vsel %vm1262, %v456, %v6463
        %v6501 = vsel %vm1262, %v457, %v6465
        %v6502 = vsel %vm1262, %v458, %v6467
        %v6503 = vsel %vm1262, %v459, %v6469
        %v6504 = vsel %vm1262, %v460, %v6471
        %v6505 = vsel %vm1262, %v461, %v6473
        %6506 = vst [vmem:[%s394] sm:$0xff] %v6490
        %6507 = vst [vmem:[%s394 + $0x8] sm:$0xff] %v6491
        %6508 = vst [vmem:[%s394 + $0x10] sm:$0xff] %v6492
        %6509 = vst [vmem:[%s394 + $0x18] sm:$0xff] %v6493
        %6510 = vst [vmem:[%s394 + $0x20] sm:$0xff] %v6494
        %6511 = vst [vmem:[%s394 + $0x28] sm:$0xff] %v6495
        %6512 = vst [vmem:[%s394 + $0x30] sm:$0xff] %v6496
        %6513 = vst [vmem:[%s394 + $0x38] sm:$0xff] %v6497
        %6514 = vst [vmem:[%s394 + $0x40] sm:$0xff] %v6498
        %6515 = vst [vmem:[%s394 + $0x48] sm:$0xff] %v6499
        %6516 = vst [vmem:[%s394 + $0x50] sm:$0xff] %v6500
        %6517 = vst [vmem:[%s394 + $0x58] sm:$0xff] %v6501
        %6518 = vst [vmem:[%s394 + $0x60] sm:$0xff] %v6502
        %6519 = vst [vmem:[%s394 + $0x68] sm:$0xff] %v6503
        %6520 = vst [vmem:[%s394 + $0x70] sm:$0xff] %v6504
        %6521 = vst [vmem:[%s394 + $0x78] sm:$0xff] %v6505
        %s6522 = sand.u32 %s227, 1
        %s6523 = scalar_lea.sflag [#allocation5], %s6522
        %s6524 = sand.u32 %s227, 1
        %s6525 = smul.addr %s6524, 128
        %s6526 = scalar_lea.vmem [#allocation4], %s6525
        // Predicated region
        $region49: #{concat_block_forward.1} parent=47 // pred_check
          %p6527 = pneg %p237
        $region50: #{concat_block_forward.1} parent=47 // pred_check_branch
          %6529 = sbr.rel (%p6527) target = $region52
        $region51: #{concat_block_forward.1} parent=47 // pred_region
          %s6530 = smul.u32 8, %s26
          %6532 = vsyncadd %s6523, 0
          %s6533 = smul.addr %s6530, 2
          %s6534 = smul.addr %s25, 32
          %s6535 = sadd.s32 %s6533, %s6534
          %s6536 = smul.addr %s6535, 8
          %s6537 = scalar_lea.hbm %s7, %s6536
          %s6538 = sshll.u32 %s6526, 4
          %s6539 = int_to_ptr.vmem [resolvable:$true] %s6538
          %s6540 = sshll.u32 %s6537, 4
          %s6541 = int_to_ptr.hbm [resolvable:$true] %s6540
          %6546 = dma.vmem_to_hbm [thread:$0]  %s6539, 2048, %s6541, %s6523, 128, 128, 8
        $region52: #{concat_block_forward.1} parent=47 // pred_fallthru
          _
      $region48: #{concat_block_forward.1} parent=5 // pred_fallthru
        _
      %p6547 = scmp.le.s32.totalorder 2, %s16
      // Predicated region
      $region53: #{concat_block_forward.1} parent=5 // pred_check
        %p6548 = pneg %p6547
      $region54: #{concat_block_forward.1} parent=5 // pred_check_branch
        %6550 = sbr.rel (%p6548) target = $region56
      $region55: #{concat_block_forward.1} parent=5 // pred_region
        %s6551 = ssub.s32 %s16, 2
        // Predicated region
        $region57: #{concat_block_forward.1} parent=55 // pred_check
          %p6552 = pneg %p243
        $region58: #{concat_block_forward.1} parent=55 // pred_check_branch
          %6554 = sbr.rel (%p6552) target = $region60
        $region59: #{concat_block_forward.1} parent=55 // pred_region
          %s6555 = sand.u32 %s228, 1
          %s6556 = scalar_lea.sflag [#allocation5], %s6555
          %s6557 = sand.u32 %s228, 1
          %s6558 = smul.addr %s6557, 128
          %s6559 = scalar_lea.vmem [#allocation4], %s6558
          %6561 = dma.done %s6556, 2048
        $region60: #{concat_block_forward.1} parent=55 // pred_fallthru
          _
      $region56: #{concat_block_forward.1} parent=5 // pred_fallthru
        _
    $region6: #{concat_block_forward.1} parent=1 // loop_footer
      %s20 = sadd.s32 1, %s16
    $region7: #{concat_block_forward.1} parent=1 // loop_footer_branch
      %15 = sbr.rel target = $region3
    $region8: #{concat_block_forward.1} parent=1 // loop_exit
      _
    %6562 = vsyncpa [#allocation5], 1
    %s6563 = scalar_lea.sflag [#allocation5], 1
    %6564 = vsyncpa %s6563, 1

</llo_original>
